<compile_context>
chip_gen: v7x
topology: tpu7x:2x2x1
jax: 0.10.0
libtpu: 0.0.40
codegen_flags: <defaults>
</compile_context>

<pallas_src>
import jax
import jax.numpy as jnp
from jax.experimental import pallas as pl
from jax.experimental.pallas import tpu as pltpu


def _round_up(a, b):
    return (a + b - 1) // b * b


def _cdiv(a, b):
    return (a + b - 1) // b


# ------------------------- fused pool + conv kernel --------------------------

def _make_fused_kernel(n_taps, cpi, ctp):
    """kernel over one M-tile.

    p_ref : (TM, Kp=n_taps*cpi) f32  im2col patches (tap-major, channel-minor)
    w_ref : (Kp, ctp)           bf16 BN-folded conv weights, conv output
                                     placed at columns [Cin, Cin+Cout), zeros
                                     in the pool region
    b_ref : (1, ctp)            f32  folded BN bias, zeros in the pool region
    o_ref : (TM, ctp)           f32  [pool(Cin) | conv(Cout) | pad] channels
    """

    def kernel(p_ref, w_ref, b_ref, o_ref):
        p = p_ref[...]                                            # f32
        # Conv branch: one MXU matmul (bf16 operands, f32 accumulate) + bias
        # + ReLU.  Columns in the pool region have zero weights & zero bias,
        # so `conv` is exactly 0 there.
        acc = jnp.dot(p.astype(w_ref.dtype), w_ref[...],
                      preferred_element_type=jnp.float32)         # (TM, ctp)
        conv = jnp.maximum(acc + b_ref[...], 0.0)

        # Pool branch: per-tap max over the same patches, exact f32.
        # Tap slices are lane-aligned (cpi is a multiple of 128).
        pool = p[:, 0:cpi]
        for t in range(1, n_taps):
            pool = jnp.maximum(pool, p[:, t * cpi:(t + 1) * cpi])

        # Fused write: pool channels (padded ones are 0) + conv channels.
        if cpi < ctp:
            o_ref[:, 0:cpi] = (conv[:, 0:cpi] + pool).astype(o_ref.dtype)
            o_ref[:, cpi:ctp] = conv[:, cpi:ctp].astype(o_ref.dtype)
        else:
            o_ref[...] = (conv + pool).astype(o_ref.dtype)

    return kernel


# --------------------------- parameter preparation ---------------------------

def prepare_poly_block5a_params(conv_weight_oihw, bn_gamma, bn_beta, bn_mean,
                                bn_var, eps=1e-5, mxu_dtype=jnp.bfloat16):
    """One-time (load-time) prep: fold BN, flatten, pad, pack, cast.

    Returns (w_packed, b_packed, cout):
      w_packed : (Kp, CTP) mxu_dtype, Kp = 9 * round_up(Cin, 128),
                 CTP = round_up(Cin + Cout, 128); conv weights occupy output
                 columns [Cin, Cin + Cout), zeros elsewhere.
      b_packed : (1, CTP) f32, folded BN bias in the same columns.
    """
    Cout, Cin, KH, KW = conv_weight_oihw.shape
    scale = (bn_gamma / jnp.sqrt(bn_var + eps)).astype(jnp.float32)
    bias = (bn_beta - bn_mean * scale).astype(jnp.float32)

    w_hwio = jnp.transpose(conv_weight_oihw, (2, 3, 1, 0)).astype(jnp.float32)
    w_hwio = w_hwio * scale[None, None, None, :]                  # fold BN

    CPI = _round_up(Cin, 128)
    Ctot = Cin + Cout
    CTP = _round_up(Ctot, 128)

    # Pad input channels per tap so flattened K matches the padded patches.
    w_hwio = jnp.pad(w_hwio, ((0, 0), (0, 0), (0, CPI - Cin), (0, 0)))
    Kp = KH * KW * CPI
    w_flat = w_hwio.reshape(Kp, Cout)

    # Place conv output at columns [Cin, Cin+Cout); zero the pool region.
    w_packed = jnp.pad(w_flat, ((0, 0), (Cin, CTP - Ctot))).astype(mxu_dtype)
    b_packed = jnp.pad(bias.reshape(1, Cout),
                       ((0, 0), (Cin, CTP - Ctot))).astype(jnp.float32)
    return w_packed, b_packed, Cout


# --------------------------------- forward -----------------------------------

def _choose_m_tiling(M, target=256, min_tiles=2):
    # >=2 grid steps (when M permits) so both v7x TensorCores get work;
    # TM a multiple of 16 to match bf16 (16,128) sublane packing.
    n_tiles = max(min_tiles, _cdiv(M, target)) if M >= 32 else 1
    TM = _round_up(_cdiv(M, n_tiles), 16)
    Mp = _round_up(M, TM)
    return TM, Mp, Mp // TM


def poly_block5a(x_nchw, w_packed, b_packed, cout, *, kh=3, kw=3, stride=2):
    """PolyBlock5a forward.  Input/output in PyTorch NCHW layout."""
    N, Cin, H, W = x_nchw.shape
    Kp, CTP = w_packed.shape
    CPI = Kp // (kh * kw)
    Ho = (H - kh) // stride + 1
    Wo = (W - kw) // stride + 1
    Ctot = Cin + cout
    M = N * Ho * Wo

    # Layout conversion kept only at the block boundary (PyTorch contract).
    x = jnp.transpose(x_nchw, (0, 2, 3, 1)).astype(jnp.float32)   # NHWC
    if CPI > Cin:
        x = jnp.pad(x, ((0, 0), (0, 0), (0, 0), (0, CPI - Cin)))

    # im2col in the wrapper: 9 static strided slices, tap-major / channel-minor
    # so the flattened patch index matches the packed HWIO weight rows.
    taps = []
    for dh in range(kh):
        for dw in range(kw):
            taps.append(x[:, dh:dh + stride * (Ho - 1) + 1:stride,
                            dw:dw + stride * (Wo - 1) + 1:stride, :])
    patches = jnp.stack(taps, axis=3).reshape(M, Kp)              # f32 (M, Kp)

    TM, Mp, n_tiles = _choose_m_tiling(M)
    if Mp > M:
        patches = jnp.pad(patches, ((0, Mp - M), (0, 0)))

    out = pl.pallas_call(
        _make_fused_kernel(kh * kw, CPI, CTP),
        out_shape=jax.ShapeDtypeStruct((Mp, CTP), jnp.float32),
        grid_spec=pltpu.PrefetchScalarGridSpec(
            num_scalar_prefetch=0,
            grid=(n_tiles,),
            in_specs=[
                pl.BlockSpec((TM, Kp), lambda m: (m, 0)),
                pl.BlockSpec((Kp, CTP), lambda m: (0, 0)),
                pl.BlockSpec((1, CTP), lambda m: (0, 0)),
            ],
            out_specs=pl.BlockSpec((TM, CTP), lambda m: (m, 0)),
        ),
        compiler_params=pltpu.CompilerParams(
            dimension_semantics=("parallel",)),
    )(patches, w_packed, b_packed)

    out = out[:M, :Ctot].reshape(N, Ho, Wo, Ctot)                 # [pool|conv]
    return jnp.transpose(out, (0, 3, 1, 2))                       # NCHW


# -------------------------------- reference ----------------------------------

def _reference(x, w_oihw, gamma, beta, mean, var, eps=1e-5,
               mxu_dtype=jnp.bfloat16):
    x = x.astype(jnp.float32)
    # branch1: maxpool 3x3 / stride 2 / VALID (exact f32)
    mp = jax.lax.reduce_window(
        x, -jnp.inf, jax.lax.max,
        window_dimensions=(1, 1, 3, 3), window_strides=(1, 1, 2, 2),
        padding="VALID")
    # branch2: conv + folded BN + ReLU, operands rounded to the kernel's MXU
    # dtype so comparison tolerance stays tight.
    scale = gamma / jnp.sqrt(var + eps)
    bias = beta - mean * scale
    w_folded = w_oihw.astype(jnp.float32) * scale[:, None, None, None]
    x_r = x.astype(mxu_dtype).astype(jnp.float32)
    w_r = w_folded.astype(mxu_dtype).astype(jnp.float32)
    y = jax.lax.conv_general_dilated(
        x_r, w_r, window_strides=(2, 2), padding="VALID",
        dimension_numbers=("NCHW", "OIHW", "NCHW"))
    y = jnp.maximum(y + bias[None, :, None, None], 0.0)
    return jnp.concatenate([mp, y], axis=1)


if __name__ == "__main__":
    key = jax.random.PRNGKey(0)
    # PolyBlock5a hard-codes 192 -> 192 channels; keep the spatial size small.
    N, Cin, H, W = 2, 192, 17, 17
    Cout = 192

    k_x, k_w, k_g, k_b, k_m, k_v = jax.random.split(key, 6)
    x = jax.random.normal(k_x, (N, Cin, H, W), dtype=jnp.float32)
    weight = 0.05 * jax.random.normal(k_w, (Cout, Cin, 3, 3), dtype=jnp.float32)
    gamma = 1.0 + 0.05 * jax.random.normal(k_g, (Cout,), dtype=jnp.float32)
    beta = 0.05 * jax.random.normal(k_b, (Cout,), dtype=jnp.float32)
    running_mean = 0.1 * jax.random.normal(k_m, (Cout,), dtype=jnp.float32)
    running_var = jnp.abs(1.0 + 0.1 * jax.random.normal(
        k_v, (Cout,), dtype=jnp.float32))

    # One-time parameter prep (hoisted out of the per-forward path).
    w_packed, b_packed, cout = prepare_poly_block5a_params(
        weight, gamma, beta, running_mean, running_var)
    w_packed, b_packed = jax.block_until_ready((w_packed, b_packed))

    fwd = jax.jit(lambda xx: poly_block5a(xx, w_packed, b_packed, cout))
    out = jax.block_until_ready(fwd(x))

    ref = _reference(x, weight, gamma, beta, running_mean, running_var)
    Hout = (H - 3) // 2 + 1
    assert out.shape == ref.shape == (N, Cin + Cout, Hout, Hout), out.shape
    assert jnp.allclose(out, ref, atol=1e-2, rtol=1e-2), \
        float(jnp.max(jnp.abs(out - ref)))

    print("KERNEL_OK")
</pallas_src>

<mosaic_0001>
module attributes {stable_mosaic.version = 11 : i64} {
  func.func @kernel(%arg0: i32, %arg1: memref<64x2304xf32, #tpu.memory_space<vmem>>, %arg2: memref<2304x384xbf16, #tpu.memory_space<vmem>>, %arg3: memref<1x384xf32, #tpu.memory_space<vmem>>, %arg4: memref<64x384xf32, #tpu.memory_space<vmem>>) attributes {dimension_semantics = [#tpu.dimension_semantics<parallel>], iteration_bounds = array<i64: 2>, scalar_prefetch = 0 : i64, scratch_operands = 0 : i64, tpu.core_type = #tpu.core_type<tc>, window_params = [{transform_indices = @transform_0, window_bounds = array<i64: 64, 2304>}, {pipeline_mode = #tpu.pipeline_mode<synchronous>, transform_indices = @transform_1, window_bounds = array<i64: 2304, 384>}, {pipeline_mode = #tpu.pipeline_mode<synchronous>, transform_indices = @transform_2, window_bounds = array<i64: 1, 384>}, {transform_indices = @transform_3, window_bounds = array<i64: 64, 384>}]} {
    %c0 = arith.constant 0 : index
    %c0_0 = arith.constant 0 : index
    %0 = vector.load %arg1[%c0, %c0_0] : memref<64x2304xf32, #tpu.memory_space<vmem>>, vector<64x2304xf32>
    %1 = arith.truncf %0 : vector<64x2304xf32> to vector<64x2304xbf16>
    %c0_1 = arith.constant 0 : index
    %c0_2 = arith.constant 0 : index
    %2 = vector.load %arg2[%c0_1, %c0_2] : memref<2304x384xbf16, #tpu.memory_space<vmem>>, vector<2304x384xbf16>
    %cst = arith.constant dense<0.000000e+00> : vector<64x384xf32>
    %3 = tpu.matmul %1, %2, %cst {dimension_numbers = #tpu.dot_dimension_numbers<[1], [0], [0], [1], [0, 0, 1, 1], [], []>} : vector<64x2304xbf16>, vector<2304x384xbf16>, vector<64x384xf32> -> vector<64x384xf32>
    %c0_3 = arith.constant 0 : index
    %c0_4 = arith.constant 0 : index
    %4 = vector.load %arg3[%c0_3, %c0_4] : memref<1x384xf32, #tpu.memory_space<vmem>>, vector<1x384xf32>
    %5 = vector.broadcast %4 : vector<1x384xf32> to vector<64x384xf32>
    %6 = arith.addf %3, %5 : vector<64x384xf32>
    %cst_5 = arith.constant 0.000000e+00 : f32
    %7 = vector.broadcast %cst_5 : f32 to vector<64x384xf32>
    %8 = arith.maximumf %6, %7 : vector<64x384xf32>
    %9 = vector.extract_strided_slice %0 {offsets = [0, 0], sizes = [64, 256], strides = [1, 1]} : vector<64x2304xf32> to vector<64x256xf32>
    %10 = vector.extract_strided_slice %0 {offsets = [0, 256], sizes = [64, 256], strides = [1, 1]} : vector<64x2304xf32> to vector<64x256xf32>
    %11 = arith.maximumf %9, %10 : vector<64x256xf32>
    %12 = vector.extract_strided_slice %0 {offsets = [0, 512], sizes = [64, 256], strides = [1, 1]} : vector<64x2304xf32> to vector<64x256xf32>
    %13 = arith.maximumf %11, %12 : vector<64x256xf32>
    %14 = vector.extract_strided_slice %0 {offsets = [0, 768], sizes = [64, 256], strides = [1, 1]} : vector<64x2304xf32> to vector<64x256xf32>
    %15 = arith.maximumf %13, %14 : vector<64x256xf32>
    %16 = vector.extract_strided_slice %0 {offsets = [0, 1024], sizes = [64, 256], strides = [1, 1]} : vector<64x2304xf32> to vector<64x256xf32>
    %17 = arith.maximumf %15, %16 : vector<64x256xf32>
    %18 = vector.extract_strided_slice %0 {offsets = [0, 1280], sizes = [64, 256], strides = [1, 1]} : vector<64x2304xf32> to vector<64x256xf32>
    %19 = arith.maximumf %17, %18 : vector<64x256xf32>
    %20 = vector.extract_strided_slice %0 {offsets = [0, 1536], sizes = [64, 256], strides = [1, 1]} : vector<64x2304xf32> to vector<64x256xf32>
    %21 = arith.maximumf %19, %20 : vector<64x256xf32>
    %22 = vector.extract_strided_slice %0 {offsets = [0, 1792], sizes = [64, 256], strides = [1, 1]} : vector<64x2304xf32> to vector<64x256xf32>
    %23 = arith.maximumf %21, %22 : vector<64x256xf32>
    %24 = vector.extract_strided_slice %0 {offsets = [0, 2048], sizes = [64, 256], strides = [1, 1]} : vector<64x2304xf32> to vector<64x256xf32>
    %25 = arith.maximumf %23, %24 : vector<64x256xf32>
    %26 = vector.extract_strided_slice %8 {offsets = [0, 0], sizes = [64, 256], strides = [1, 1]} : vector<64x384xf32> to vector<64x256xf32>
    %27 = arith.addf %26, %25 : vector<64x256xf32>
    %c0_6 = arith.constant 0 : index
    %c0_7 = arith.constant 0 : index
    %28 = vector.load %arg4[%c0_6, %c0_7] : memref<64x384xf32, #tpu.memory_space<vmem>>, vector<64x256xf32>
    tpu.vector_store %arg4[%c0_6, %c0_7], %27 {strides = array<i32>} : memref<64x384xf32, #tpu.memory_space<vmem>>, vector<64x256xf32>,
    %29 = vector.extract_strided_slice %8 {offsets = [0, 256], sizes = [64, 128], strides = [1, 1]} : vector<64x384xf32> to vector<64x128xf32>
    %c0_8 = arith.constant 0 : index
    %c256 = arith.constant 256 : index
    %30 = vector.load %arg4[%c0_8, %c256] : memref<64x384xf32, #tpu.memory_space<vmem>>, vector<64x128xf32>
    tpu.vector_store %arg4[%c0_8, %c256], %29 {strides = array<i32>} : memref<64x384xf32, #tpu.memory_space<vmem>>, vector<64x128xf32>,
    return
  }
  func.func @transform_0(%arg0: i32) -> (i32, i32) {
    %c0_i32 = arith.constant 0 : i32
    %c0_i32_0 = arith.constant 0 : i32
    return %arg0, %c0_i32 : i32, i32
  }
  func.func @transform_1(%arg0: i32) -> (i32, i32) {
    %c0_i32 = arith.constant 0 : i32
    %c0_i32_0 = arith.constant 0 : i32
    %c0_i32_1 = arith.constant 0 : i32
    return %c0_i32, %c0_i32_0 : i32, i32
  }
  func.func @transform_2(%arg0: i32) -> (i32, i32) {
    %c0_i32 = arith.constant 0 : i32
    %c0_i32_0 = arith.constant 0 : i32
    %c0_i32_1 = arith.constant 0 : i32
    return %c0_i32, %c0_i32_0 : i32, i32
  }
  func.func @transform_3(%arg0: i32) -> (i32, i32) {
    %c0_i32 = arith.constant 0 : i32
    %c0_i32_0 = arith.constant 0 : i32
    return %arg0, %c0_i32 : i32, i32
  }
}

</mosaic_0001>

<llo_original>
// kernel: _lambda_.1
$region0: #{_lambda_.1}
  #allocation0 [shape = 'u32[]', space=smem, size = 0x4, offset = 0x4, fixed_abs, tag = 'smem constant byte address 0x4 - core index']
  #allocation1 [shape = 'u32[144,128]{1,0:T(1,128)}', space=vmem, size = 0x12000, scoped, tag = 'internal scratch']
  %s0 = inlined_call_operand.vmem [shape: f32[128,2304], index: 0, kind: input, shape index: {}]
  %s1 = inlined_call_operand.vmem [shape: bf16[2304,384], index: 1, kind: input, shape index: {}]
  %s2 = inlined_call_operand.vmem [shape: f32[1,384], index: 2, kind: input, shape index: {}]
  %s3 = inlined_call_operand.hbm [shape: f32[128,384], index: 3, kind: output, shape index: {}]
  %s4 = sld [smem:[#allocation0]]
  $region45: #{_lambda_.1} parent=0
    _
  %s6 = ssub.s32 1, %s4
  %s7 = scalar_select 0, %s6, %s4
  $region1: #{_lambda_.1} parent=0
    #allocation2 [shape = 'u8[196608]{0}', space=vmem, size = 0x30000, scoped, tag = 'output window, operand 0']
    #allocation3 [shape = 's32[2]{0}', space=sflag, size = 0x8, scoped, tag = 'scoped memory for _lambda_.1']
    %8 = vsyncpa [#allocation3], 0
    %s9 = scalar_lea.sflag [#allocation3], 1
    %10 = vsyncpa %s9, 0
    loop: start=0, step=1, limit=4
    $region2: #{_lambda_.1} parent=1 // loop_pre_header
      _
    $region3: #{_lambda_.1} parent=1 // loop_header
      %s12 = sphi 0, %s16
      %p13 = scmp.ge.s32.totalorder %s12, 4
      %s22 = sphi 0, %s24
      %s25 = sphi 0, %s22
      %s26 = sphi 0, %s25
      %s42 = sphi 0, %s26
      %s46 = sphi 0, %s46
      %s48 = sphi 0, %s46
      %s49 = sphi 0, %s48
      %s63 = sphi 0, %s49
      %s67 = sphi 0, %s67
      %s69 = sphi 0, %s67
      %s70 = sphi 0, %s69
      %s84 = sphi 0, %s70
      %s90 = sphi 0, %s92
      %s93 = sphi 0, %s90
      %s94 = sphi 0, %s93
      %s110 = sphi 0, %s94
    $region4: #{_lambda_.1} parent=1 // loop_header_branch
      %15 = sbr.rel (%p13) target = $region8
    $region5: #{_lambda_.1} parent=1 // loop_body
      %s17 = ssub.s32 %s12, 1
      %s18 = ssub.s32 %s12, 2
      %s19 = sadd.s32 %s12, 1
      %s20 = ssub.s32 %s12, %s19
      %p21 = scmp.eq.s32.totalorder %s20, 0
      %s23 = sadd.s32 %s22, 1
      %s24 = scalar_select %p21, %s22, %s23
      %p27 = pneg %p21
      %p28 = scmp.eq.s32.totalorder %s12, 1
      %p29 = por %p27, %p28
      %p30 = scmp.ne.s32.totalorder %s22, %s25
      %p31 = scmp.eq.s32.totalorder %s12, 0
      %p32 = por %p30, %p31
      %p33 = scmp.ne.s32.totalorder %s22, %s25
      %p34 = scmp.eq.s32.totalorder %s17, 1
      %p35 = por %p33, %p34
      %p36 = scmp.ne.s32.totalorder %s25, %s26
      %p37 = scmp.eq.s32.totalorder %s17, 0
      %p38 = por %p36, %p37
      %p39 = scmp.ne.s32.totalorder %s25, %s26
      %p40 = scmp.eq.s32.totalorder %s18, 1
      %p41 = por %p39, %p40
      %p43 = scmp.ne.s32.totalorder %s26, %s42
      %p44 = scmp.eq.s32.totalorder %s18, 0
      %p45 = por %p43, %p44
      %s47 = sadd.s32 %s46, 1
      %p50 = scmp.eq.s32.totalorder %s12, 1
      %p51 = scmp.ne.s32.totalorder %s46, %s48
      %p52 = scmp.eq.s32.totalorder %s12, 0
      %p53 = por %p51, %p52
      %p54 = scmp.ne.s32.totalorder %s46, %s48
      %p55 = scmp.eq.s32.totalorder %s17, 1
      %p56 = por %p54, %p55
      %p57 = scmp.ne.s32.totalorder %s48, %s49
      %p58 = scmp.eq.s32.totalorder %s17, 0
      %p59 = por %p57, %p58
      %p60 = scmp.ne.s32.totalorder %s48, %s49
      %p61 = scmp.eq.s32.totalorder %s18, 1
      %p62 = por %p60, %p61
      %p64 = scmp.ne.s32.totalorder %s49, %s63
      %p65 = scmp.eq.s32.totalorder %s18, 0
      %p66 = por %p64, %p65
      %s68 = sadd.s32 %s67, 1
      %p71 = scmp.eq.s32.totalorder %s12, 1
      %p72 = scmp.ne.s32.totalorder %s67, %s69
      %p73 = scmp.eq.s32.totalorder %s12, 0
      %p74 = por %p72, %p73
      %p75 = scmp.ne.s32.totalorder %s67, %s69
      %p76 = scmp.eq.s32.totalorder %s17, 1
      %p77 = por %p75, %p76
      %p78 = scmp.ne.s32.totalorder %s69, %s70
      %p79 = scmp.eq.s32.totalorder %s17, 0
      %p80 = por %p78, %p79
      %p81 = scmp.ne.s32.totalorder %s69, %s70
      %p82 = scmp.eq.s32.totalorder %s18, 1
      %p83 = por %p81, %p82
      %p85 = scmp.ne.s32.totalorder %s70, %s84
      %p86 = scmp.eq.s32.totalorder %s18, 0
      %p87 = por %p85, %p86
      %s88 = ssub.s32 %s12, %s19
      %p89 = scmp.eq.s32.totalorder %s88, 0
      %s91 = sadd.s32 %s90, 1
      %s92 = scalar_select %p89, %s90, %s91
      %p95 = pneg %p89
      %p96 = scmp.eq.s32.totalorder %s12, 1
      %p97 = por %p95, %p96
      %p98 = scmp.ne.s32.totalorder %s90, %s93
      %p99 = scmp.eq.s32.totalorder %s12, 0
      %p100 = por %p98, %p99
      %p101 = scmp.ne.s32.totalorder %s90, %s93
      %p102 = scmp.eq.s32.totalorder %s17, 1
      %p103 = por %p101, %p102
      %p104 = scmp.ne.s32.totalorder %s93, %s94
      %p105 = scmp.eq.s32.totalorder %s17, 0
      %p106 = por %p104, %p105
      %p107 = scmp.ne.s32.totalorder %s93, %s94
      %p108 = scmp.eq.s32.totalorder %s18, 1
      %p109 = por %p107, %p108
      %p111 = scmp.ne.s32.totalorder %s94, %s110
      %p112 = scmp.eq.s32.totalorder %s18, 0
      %p113 = por %p111, %p112
      %p114 = scmp.le.s32.totalorder 1, %s12
      %p115 = scmp.lt.s32.totalorder %s12, 3
      %p116 = pnand %p114, %p115
      %p117 = pneg %p116
      // Predicated region
      $region9: #{_lambda_.1} parent=5 // pred_check
        _
      $region10: #{_lambda_.1} parent=5 // pred_check_branch
        %119 = sbr.rel (%p116) target = $region12
      $region11: #{_lambda_.1} parent=5 // pred_region
        %s120 = ssub.s32 %s12, 1
        // Predicated region
        $region13: #{_lambda_.1} parent=11 // pred_check
          %p121 = pneg %p59
        $region14: #{_lambda_.1} parent=11 // pred_check_branch
          %123 = sbr.rel (%p121) target = $region16
        $region15: #{_lambda_.1} parent=11 // pred_region
          _
        $region16: #{_lambda_.1} parent=11 // pred_fallthru
          _
        // Predicated region
        $region17: #{_lambda_.1} parent=11 // pred_check
          %p124 = pneg %p80
        $region18: #{_lambda_.1} parent=11 // pred_check_branch
          %126 = sbr.rel (%p124) target = $region20
        $region19: #{_lambda_.1} parent=11 // pred_region
          _
        $region20: #{_lambda_.1} parent=11 // pred_fallthru
          _
      $region12: #{_lambda_.1} parent=5 // pred_fallthru
        _
      %p127 = scmp.lt.s32.totalorder %s12, 2
      // Predicated region
      $region21: #{_lambda_.1} parent=5 // pred_check
        %p128 = pneg %p127
      $region22: #{_lambda_.1} parent=5 // pred_check_branch
        %130 = sbr.rel (%p128) target = $region24
      $region23: #{_lambda_.1} parent=5 // pred_region
        // Predicated region
        $region25: #{_lambda_.1} parent=23 // pred_check
          %p131 = pneg %p32
        $region26: #{_lambda_.1} parent=23 // pred_check_branch
          %133 = sbr.rel (%p131) target = $region28
        $region27: #{_lambda_.1} parent=23 // pred_region
          %s134 = smul.u32 8, %s12
          %p135 = scmp.lt.s32.totalorder %s134, 15
          %s136 = scalar_select %p135, %s134, 15
          %s137 = smul.addr %s136, 18
          %s138 = smul.addr %s137, 8
          %s139 = scalar_lea.vmem %s0, %s138
          %s140 = smul.u32 8, %s12
        $region28: #{_lambda_.1} parent=23 // pred_fallthru
          _
      $region24: #{_lambda_.1} parent=5 // pred_fallthru
        _
      %p141 = scmp.le.s32.totalorder 1, %s12
      %p142 = scmp.lt.s32.totalorder %s12, 3
      %p143 = pnand %p141, %p142
      %p144 = pneg %p143
      // Predicated region
      $region29: #{_lambda_.1} parent=5 // pred_check
        _
      $region30: #{_lambda_.1} parent=5 // pred_check_branch
        %146 = sbr.rel (%p143) target = $region32
      $region31: #{_lambda_.1} parent=5 // pred_region
        %s147 = ssub.s32 %s12, 1
        %s148 = smul.u32 8, %s17
        %p149 = scmp.lt.s32.totalorder %s148, 15
        %s150 = scalar_select %p149, %s148, 15
        %s151 = smul.addr %s150, 18
        %s152 = smul.addr %s151, 8
        %s153 = scalar_lea.vmem %s0, %s152
        %p154 = pneg %p38
        %p155 = pneg %p35
        %p156 = pneg %p59
        %p157 = pneg %p56
        %p158 = pneg %p80
        %p159 = pneg %p77
        %p160 = pneg %p106
        %p161 = pneg %p103
        %s162 = sand.u32 %s93, 1
        %s163 = scalar_lea.sflag [#allocation3], %s162
        %s164 = sand.u32 %s93, 1
        %s165 = smul.addr %s164, 192
        %s166 = scalar_lea.vmem [#allocation2], %s165
        %s167 = smul.u32 8, %s17
        %p168 = scmp.lt.s32.totalorder %s167, 15
        %s169 = scalar_select %p168, %s167, 15
        %s170 = smul.addr %s169, 18
        %s171 = smul.addr %s170, 8
        %s172 = scalar_lea.vmem %s0, %s171
        %s173 = smul.u32 8, %s17
        %s174 = smul.u32 8, %s17
        %v176 = vld [vmem:[%s172] sm:$0xff]
        %v177 = vld [vmem:[%s172 + $0x8] sm:$0xff]
        %v178 = vld [vmem:[%s172 + $0x10] sm:$0xff]
        %v179 = vld [vmem:[%s172 + $0x18] sm:$0xff]
        %v180 = vld [vmem:[%s172 + $0x20] sm:$0xff]
        %v181 = vld [vmem:[%s172 + $0x28] sm:$0xff]
        %v182 = vld [vmem:[%s172 + $0x30] sm:$0xff]
        %v183 = vld [vmem:[%s172 + $0x38] sm:$0xff]
        %v184 = vld [vmem:[%s172 + $0x40] sm:$0xff]
        %v185 = vld [vmem:[%s172 + $0x48] sm:$0xff]
        %v186 = vld [vmem:[%s172 + $0x50] sm:$0xff]
        %v187 = vld [vmem:[%s172 + $0x58] sm:$0xff]
        %v188 = vld [vmem:[%s172 + $0x60] sm:$0xff]
        %v189 = vld [vmem:[%s172 + $0x68] sm:$0xff]
        %v190 = vld [vmem:[%s172 + $0x70] sm:$0xff]
        %v191 = vld [vmem:[%s172 + $0x78] sm:$0xff]
        %v192 = vld [vmem:[%s172 + $0x80] sm:$0xff]
        %v193 = vld [vmem:[%s172 + $0x88] sm:$0xff]
        %v194 = vld [vmem:[%s172 + $0x90] sm:$0xff]
        %v195 = vld [vmem:[%s172 + $0x98] sm:$0xff]
        %v196 = vld [vmem:[%s172 + $0xa0] sm:$0xff]
        %v197 = vld [vmem:[%s172 + $0xa8] sm:$0xff]
        %v198 = vld [vmem:[%s172 + $0xb0] sm:$0xff]
        %v199 = vld [vmem:[%s172 + $0xb8] sm:$0xff]
        %v200 = vld [vmem:[%s172 + $0xc0] sm:$0xff]
        %v201 = vld [vmem:[%s172 + $0xc8] sm:$0xff]
        %v202 = vld [vmem:[%s172 + $0xd0] sm:$0xff]
        %v203 = vld [vmem:[%s172 + $0xd8] sm:$0xff]
        %v204 = vld [vmem:[%s172 + $0xe0] sm:$0xff]
        %v205 = vld [vmem:[%s172 + $0xe8] sm:$0xff]
        %v206 = vld [vmem:[%s172 + $0xf0] sm:$0xff]
        %v207 = vld [vmem:[%s172 + $0xf8] sm:$0xff]
        %v208 = vld [vmem:[%s172 + $0x100] sm:$0xff]
        %v209 = vld [vmem:[%s172 + $0x108] sm:$0xff]
        %v210 = vld [vmem:[%s172 + $0x110] sm:$0xff]
        %v211 = vld [vmem:[%s172 + $0x118] sm:$0xff]
        %v212 = vld [vmem:[%s172 + $0x120] sm:$0xff]
        %v213 = vld [vmem:[%s172 + $0x128] sm:$0xff]
        %v214 = vld [vmem:[%s172 + $0x130] sm:$0xff]
        %v215 = vld [vmem:[%s172 + $0x138] sm:$0xff]
        %v216 = vld [vmem:[%s172 + $0x140] sm:$0xff]
        %v217 = vld [vmem:[%s172 + $0x148] sm:$0xff]
        %v218 = vld [vmem:[%s172 + $0x150] sm:$0xff]
        %v219 = vld [vmem:[%s172 + $0x158] sm:$0xff]
        %v220 = vld [vmem:[%s172 + $0x160] sm:$0xff]
        %v221 = vld [vmem:[%s172 + $0x168] sm:$0xff]
        %v222 = vld [vmem:[%s172 + $0x170] sm:$0xff]
        %v223 = vld [vmem:[%s172 + $0x178] sm:$0xff]
        %v224 = vld [vmem:[%s172 + $0x180] sm:$0xff]
        %v225 = vld [vmem:[%s172 + $0x188] sm:$0xff]
        %v226 = vld [vmem:[%s172 + $0x190] sm:$0xff]
        %v227 = vld [vmem:[%s172 + $0x198] sm:$0xff]
        %v228 = vld [vmem:[%s172 + $0x1a0] sm:$0xff]
        %v229 = vld [vmem:[%s172 + $0x1a8] sm:$0xff]
        %v230 = vld [vmem:[%s172 + $0x1b0] sm:$0xff]
        %v231 = vld [vmem:[%s172 + $0x1b8] sm:$0xff]
        %v232 = vld [vmem:[%s172 + $0x1c0] sm:$0xff]
        %v233 = vld [vmem:[%s172 + $0x1c8] sm:$0xff]
        %v234 = vld [vmem:[%s172 + $0x1d0] sm:$0xff]
        %v235 = vld [vmem:[%s172 + $0x1d8] sm:$0xff]
        %v236 = vld [vmem:[%s172 + $0x1e0] sm:$0xff]
        %v237 = vld [vmem:[%s172 + $0x1e8] sm:$0xff]
        %v238 = vld [vmem:[%s172 + $0x1f0] sm:$0xff]
        %v239 = vld [vmem:[%s172 + $0x1f8] sm:$0xff]
        %v240 = vld [vmem:[%s172 + $0x200] sm:$0xff]
        %v241 = vld [vmem:[%s172 + $0x208] sm:$0xff]
        %v242 = vld [vmem:[%s172 + $0x210] sm:$0xff]
        %v243 = vld [vmem:[%s172 + $0x218] sm:$0xff]
        %v244 = vld [vmem:[%s172 + $0x220] sm:$0xff]
        %v245 = vld [vmem:[%s172 + $0x228] sm:$0xff]
        %v246 = vld [vmem:[%s172 + $0x230] sm:$0xff]
        %v247 = vld [vmem:[%s172 + $0x238] sm:$0xff]
        %v248 = vld [vmem:[%s172 + $0x240] sm:$0xff]
        %v249 = vld [vmem:[%s172 + $0x248] sm:$0xff]
        %v250 = vld [vmem:[%s172 + $0x250] sm:$0xff]
        %v251 = vld [vmem:[%s172 + $0x258] sm:$0xff]
        %v252 = vld [vmem:[%s172 + $0x260] sm:$0xff]
        %v253 = vld [vmem:[%s172 + $0x268] sm:$0xff]
        %v254 = vld [vmem:[%s172 + $0x270] sm:$0xff]
        %v255 = vld [vmem:[%s172 + $0x278] sm:$0xff]
        %v256 = vld [vmem:[%s172 + $0x280] sm:$0xff]
        %v257 = vld [vmem:[%s172 + $0x288] sm:$0xff]
        %v258 = vld [vmem:[%s172 + $0x290] sm:$0xff]
        %v259 = vld [vmem:[%s172 + $0x298] sm:$0xff]
        %v260 = vld [vmem:[%s172 + $0x2a0] sm:$0xff]
        %v261 = vld [vmem:[%s172 + $0x2a8] sm:$0xff]
        %v262 = vld [vmem:[%s172 + $0x2b0] sm:$0xff]
        %v263 = vld [vmem:[%s172 + $0x2b8] sm:$0xff]
        %v264 = vld [vmem:[%s172 + $0x2c0] sm:$0xff]
        %v265 = vld [vmem:[%s172 + $0x2c8] sm:$0xff]
        %v266 = vld [vmem:[%s172 + $0x2d0] sm:$0xff]
        %v267 = vld [vmem:[%s172 + $0x2d8] sm:$0xff]
        %v268 = vld [vmem:[%s172 + $0x2e0] sm:$0xff]
        %v269 = vld [vmem:[%s172 + $0x2e8] sm:$0xff]
        %v270 = vld [vmem:[%s172 + $0x2f0] sm:$0xff]
        %v271 = vld [vmem:[%s172 + $0x2f8] sm:$0xff]
        %v272 = vld [vmem:[%s172 + $0x300] sm:$0xff]
        %v273 = vld [vmem:[%s172 + $0x308] sm:$0xff]
        %v274 = vld [vmem:[%s172 + $0x310] sm:$0xff]
        %v275 = vld [vmem:[%s172 + $0x318] sm:$0xff]
        %v276 = vld [vmem:[%s172 + $0x320] sm:$0xff]
        %v277 = vld [vmem:[%s172 + $0x328] sm:$0xff]
        %v278 = vld [vmem:[%s172 + $0x330] sm:$0xff]
        %v279 = vld [vmem:[%s172 + $0x338] sm:$0xff]
        %v280 = vld [vmem:[%s172 + $0x340] sm:$0xff]
        %v281 = vld [vmem:[%s172 + $0x348] sm:$0xff]
        %v282 = vld [vmem:[%s172 + $0x350] sm:$0xff]
        %v283 = vld [vmem:[%s172 + $0x358] sm:$0xff]
        %v284 = vld [vmem:[%s172 + $0x360] sm:$0xff]
        %v285 = vld [vmem:[%s172 + $0x368] sm:$0xff]
        %v286 = vld [vmem:[%s172 + $0x370] sm:$0xff]
        %v287 = vld [vmem:[%s172 + $0x378] sm:$0xff]
        %v288 = vld [vmem:[%s172 + $0x380] sm:$0xff]
        %v289 = vld [vmem:[%s172 + $0x388] sm:$0xff]
        %v290 = vld [vmem:[%s172 + $0x390] sm:$0xff]
        %v291 = vld [vmem:[%s172 + $0x398] sm:$0xff]
        %v292 = vld [vmem:[%s172 + $0x3a0] sm:$0xff]
        %v293 = vld [vmem:[%s172 + $0x3a8] sm:$0xff]
        %v294 = vld [vmem:[%s172 + $0x3b0] sm:$0xff]
        %v295 = vld [vmem:[%s172 + $0x3b8] sm:$0xff]
        %v296 = vld [vmem:[%s172 + $0x3c0] sm:$0xff]
        %v297 = vld [vmem:[%s172 + $0x3c8] sm:$0xff]
        %v298 = vld [vmem:[%s172 + $0x3d0] sm:$0xff]
        %v299 = vld [vmem:[%s172 + $0x3d8] sm:$0xff]
        %v300 = vld [vmem:[%s172 + $0x3e0] sm:$0xff]
        %v301 = vld [vmem:[%s172 + $0x3e8] sm:$0xff]
        %v302 = vld [vmem:[%s172 + $0x3f0] sm:$0xff]
        %v303 = vld [vmem:[%s172 + $0x3f8] sm:$0xff]
        %v304 = vld [vmem:[%s172 + $0x400] sm:$0xff]
        %v305 = vld [vmem:[%s172 + $0x408] sm:$0xff]
        %v306 = vld [vmem:[%s172 + $0x410] sm:$0xff]
        %v307 = vld [vmem:[%s172 + $0x418] sm:$0xff]
        %v308 = vld [vmem:[%s172 + $0x420] sm:$0xff]
        %v309 = vld [vmem:[%s172 + $0x428] sm:$0xff]
        %v310 = vld [vmem:[%s172 + $0x430] sm:$0xff]
        %v311 = vld [vmem:[%s172 + $0x438] sm:$0xff]
        %v312 = vld [vmem:[%s172 + $0x440] sm:$0xff]
        %v313 = vld [vmem:[%s172 + $0x448] sm:$0xff]
        %v314 = vld [vmem:[%s172 + $0x450] sm:$0xff]
        %v315 = vld [vmem:[%s172 + $0x458] sm:$0xff]
        %v316 = vld [vmem:[%s172 + $0x460] sm:$0xff]
        %v317 = vld [vmem:[%s172 + $0x468] sm:$0xff]
        %v318 = vld [vmem:[%s172 + $0x470] sm:$0xff]
        %v319 = vld [vmem:[%s172 + $0x478] sm:$0xff]
        %v320 = vpack.c.bf16 %v194, %v176
        %v321 = vpack.c.bf16 %v195, %v177
        %v322 = vpack.c.bf16 %v196, %v178
        %v323 = vpack.c.bf16 %v197, %v179
        %v324 = vpack.c.bf16 %v198, %v180
        %v325 = vpack.c.bf16 %v199, %v181
        %v326 = vpack.c.bf16 %v200, %v182
        %v327 = vpack.c.bf16 %v201, %v183
        %v328 = vpack.c.bf16 %v202, %v184
        %v329 = vpack.c.bf16 %v203, %v185
        %v330 = vpack.c.bf16 %v204, %v186
        %v331 = vpack.c.bf16 %v205, %v187
        %v332 = vpack.c.bf16 %v206, %v188
        %v333 = vpack.c.bf16 %v207, %v189
        %v334 = vpack.c.bf16 %v208, %v190
        %v335 = vpack.c.bf16 %v209, %v191
        %v336 = vpack.c.bf16 %v210, %v192
        %v337 = vpack.c.bf16 %v211, %v193
        %v338 = vpack.c.bf16 %v230, %v212
        %v339 = vpack.c.bf16 %v231, %v213
        %v340 = vpack.c.bf16 %v232, %v214
        %v341 = vpack.c.bf16 %v233, %v215
        %v342 = vpack.c.bf16 %v234, %v216
        %v343 = vpack.c.bf16 %v235, %v217
        %v344 = vpack.c.bf16 %v236, %v218
        %v345 = vpack.c.bf16 %v237, %v219
        %v346 = vpack.c.bf16 %v238, %v220
        %v347 = vpack.c.bf16 %v239, %v221
        %v348 = vpack.c.bf16 %v240, %v222
        %v349 = vpack.c.bf16 %v241, %v223
        %v350 = vpack.c.bf16 %v242, %v224
        %v351 = vpack.c.bf16 %v243, %v225
        %v352 = vpack.c.bf16 %v244, %v226
        %v353 = vpack.c.bf16 %v245, %v227
        %v354 = vpack.c.bf16 %v246, %v228
        %v355 = vpack.c.bf16 %v247, %v229
        %v356 = vpack.c.bf16 %v266, %v248
        %v357 = vpack.c.bf16 %v267, %v249
        %v358 = vpack.c.bf16 %v268, %v250
        %v359 = vpack.c.bf16 %v269, %v251
        %v360 = vpack.c.bf16 %v270, %v252
        %v361 = vpack.c.bf16 %v271, %v253
        %v362 = vpack.c.bf16 %v272, %v254
        %v363 = vpack.c.bf16 %v273, %v255
        %v364 = vpack.c.bf16 %v274, %v256
        %v365 = vpack.c.bf16 %v275, %v257
        %v366 = vpack.c.bf16 %v276, %v258
        %v367 = vpack.c.bf16 %v277, %v259
        %v368 = vpack.c.bf16 %v278, %v260
        %v369 = vpack.c.bf16 %v279, %v261
        %v370 = vpack.c.bf16 %v280, %v262
        %v371 = vpack.c.bf16 %v281, %v263
        %v372 = vpack.c.bf16 %v282, %v264
        %v373 = vpack.c.bf16 %v283, %v265
        %v374 = vpack.c.bf16 %v302, %v284
        %v375 = vpack.c.bf16 %v303, %v285
        %v376 = vpack.c.bf16 %v304, %v286
        %v377 = vpack.c.bf16 %v305, %v287
        %v378 = vpack.c.bf16 %v306, %v288
        %v379 = vpack.c.bf16 %v307, %v289
        %v380 = vpack.c.bf16 %v308, %v290
        %v381 = vpack.c.bf16 %v309, %v291
        %v382 = vpack.c.bf16 %v310, %v292
        %v383 = vpack.c.bf16 %v311, %v293
        %v384 = vpack.c.bf16 %v312, %v294
        %v385 = vpack.c.bf16 %v313, %v295
        %v386 = vpack.c.bf16 %v314, %v296
        %v387 = vpack.c.bf16 %v315, %v297
        %v388 = vpack.c.bf16 %v316, %v298
        %v389 = vpack.c.bf16 %v317, %v299
        %v390 = vpack.c.bf16 %v318, %v300
        %v391 = vpack.c.bf16 %v319, %v301
        %v392 = vld [vmem:[%s1] sm:$0xff]
        %v393 = vld [vmem:[%s1 + $0x8] sm:$0xf]
        %v394 = vld [vmem:[%s1 + $0xc] sm:$0xff]
        %v395 = vld [vmem:[%s1 + $0x14] sm:$0xf]
        %v396 = vld [vmem:[%s1 + $0x18] sm:$0xff]
        %v397 = vld [vmem:[%s1 + $0x20] sm:$0xf]
        %v398 = vld [vmem:[%s1 + $0x24] sm:$0xff]
        %v399 = vld [vmem:[%s1 + $0x2c] sm:$0xf]
        %v400 = vld [vmem:[%s1 + $0x30] sm:$0xff]
        %v401 = vld [vmem:[%s1 + $0x38] sm:$0xf]
        %v402 = vld [vmem:[%s1 + $0x3c] sm:$0xff]
        %v403 = vld [vmem:[%s1 + $0x44] sm:$0xf]
        %v404 = vld [vmem:[%s1 + $0x48] sm:$0xff]
        %v405 = vld [vmem:[%s1 + $0x50] sm:$0xf]
        %v406 = vld [vmem:[%s1 + $0x54] sm:$0xff]
        %v407 = vld [vmem:[%s1 + $0x5c] sm:$0xf]
        %v408 = vld [vmem:[%s1 + $0x60] sm:$0xff]
        %v409 = vld [vmem:[%s1 + $0x68] sm:$0xf]
        %v410 = vld [vmem:[%s1 + $0x6c] sm:$0xff]
        %v411 = vld [vmem:[%s1 + $0x74] sm:$0xf]
        %v412 = vld [vmem:[%s1 + $0x78] sm:$0xff]
        %v413 = vld [vmem:[%s1 + $0x80] sm:$0xf]
        %v414 = vld [vmem:[%s1 + $0x84] sm:$0xff]
        %v415 = vld [vmem:[%s1 + $0x8c] sm:$0xf]
        %v416 = vld [vmem:[%s1 + $0x90] sm:$0xff]
        %v417 = vld [vmem:[%s1 + $0x98] sm:$0xf]
        %v418 = vld [vmem:[%s1 + $0x9c] sm:$0xff]
        %v419 = vld [vmem:[%s1 + $0xa4] sm:$0xf]
        %v420 = vld [vmem:[%s1 + $0xa8] sm:$0xff]
        %v421 = vld [vmem:[%s1 + $0xb0] sm:$0xf]
        %v422 = vld [vmem:[%s1 + $0xb4] sm:$0xff]
        %v423 = vld [vmem:[%s1 + $0xbc] sm:$0xf]
        %v424 = vld [vmem:[%s1 + $0xc0] sm:$0xff]
        %v425 = vld [vmem:[%s1 + $0xc8] sm:$0xf]
        %v426 = vld [vmem:[%s1 + $0xcc] sm:$0xff]
        %v427 = vld [vmem:[%s1 + $0xd4] sm:$0xf]
        %v428 = vld [vmem:[%s1 + $0xd8] sm:$0xff]
        %v429 = vld [vmem:[%s1 + $0xe0] sm:$0xf]
        %v430 = vld [vmem:[%s1 + $0xe4] sm:$0xff]
        %v431 = vld [vmem:[%s1 + $0xec] sm:$0xf]
        %v432 = vld [vmem:[%s1 + $0xf0] sm:$0xff]
        %v433 = vld [vmem:[%s1 + $0xf8] sm:$0xf]
        %v434 = vld [vmem:[%s1 + $0xfc] sm:$0xff]
        %v435 = vld [vmem:[%s1 + $0x104] sm:$0xf]
        %v436 = vld [vmem:[%s1 + $0x108] sm:$0xff]
        %v437 = vld [vmem:[%s1 + $0x110] sm:$0xf]
        %v438 = vld [vmem:[%s1 + $0x114] sm:$0xff]
        %v439 = vld [vmem:[%s1 + $0x11c] sm:$0xf]
        %v440 = vld [vmem:[%s1 + $0x120] sm:$0xff]
        %v441 = vld [vmem:[%s1 + $0x128] sm:$0xf]
        %v442 = vld [vmem:[%s1 + $0x12c] sm:$0xff]
        %v443 = vld [vmem:[%s1 + $0x134] sm:$0xf]
        %v444 = vld [vmem:[%s1 + $0x138] sm:$0xff]
        %v445 = vld [vmem:[%s1 + $0x140] sm:$0xf]
        %v446 = vld [vmem:[%s1 + $0x144] sm:$0xff]
        %v447 = vld [vmem:[%s1 + $0x14c] sm:$0xf]
        %v448 = vld [vmem:[%s1 + $0x150] sm:$0xff]
        %v449 = vld [vmem:[%s1 + $0x158] sm:$0xf]
        %v450 = vld [vmem:[%s1 + $0x15c] sm:$0xff]
        %v451 = vld [vmem:[%s1 + $0x164] sm:$0xf]
        %v452 = vld [vmem:[%s1 + $0x168] sm:$0xff]
        %v453 = vld [vmem:[%s1 + $0x170] sm:$0xf]
        %v454 = vld [vmem:[%s1 + $0x174] sm:$0xff]
        %v455 = vld [vmem:[%s1 + $0x17c] sm:$0xf]
        %v456 = vld [vmem:[%s1 + $0x180] sm:$0xff]
        %v457 = vld [vmem:[%s1 + $0x188] sm:$0xf]
        %v458 = vld [vmem:[%s1 + $0x18c] sm:$0xff]
        %v459 = vld [vmem:[%s1 + $0x194] sm:$0xf]
        %v460 = vld [vmem:[%s1 + $0x198] sm:$0xff]
        %v461 = vld [vmem:[%s1 + $0x1a0] sm:$0xf]
        %v462 = vld [vmem:[%s1 + $0x1a4] sm:$0xff]
        %v463 = vld [vmem:[%s1 + $0x1ac] sm:$0xf]
        %v464 = vld [vmem:[%s1 + $0x1b0] sm:$0xff]
        %v465 = vld [vmem:[%s1 + $0x1b8] sm:$0xf]
        %v466 = vld [vmem:[%s1 + $0x1bc] sm:$0xff]
        %v467 = vld [vmem:[%s1 + $0x1c4] sm:$0xf]
        %v468 = vld [vmem:[%s1 + $0x1c8] sm:$0xff]
        %v469 = vld [vmem:[%s1 + $0x1d0] sm:$0xf]
        %v470 = vld [vmem:[%s1 + $0x1d4] sm:$0xff]
        %v471 = vld [vmem:[%s1 + $0x1dc] sm:$0xf]
        %v472 = vld [vmem:[%s1 + $0x1e0] sm:$0xff]
        %v473 = vld [vmem:[%s1 + $0x1e8] sm:$0xf]
        %v474 = vld [vmem:[%s1 + $0x1ec] sm:$0xff]
        %v475 = vld [vmem:[%s1 + $0x1f4] sm:$0xf]
        %v476 = vld [vmem:[%s1 + $0x1f8] sm:$0xff]
        %v477 = vld [vmem:[%s1 + $0x200] sm:$0xf]
        %v478 = vld [vmem:[%s1 + $0x204] sm:$0xff]
        %v479 = vld [vmem:[%s1 + $0x20c] sm:$0xf]
        %v480 = vld [vmem:[%s1 + $0x210] sm:$0xff]
        %v481 = vld [vmem:[%s1 + $0x218] sm:$0xf]
        %v482 = vld [vmem:[%s1 + $0x21c] sm:$0xff]
        %v483 = vld [vmem:[%s1 + $0x224] sm:$0xf]
        %v484 = vld [vmem:[%s1 + $0x228] sm:$0xff]
        %v485 = vld [vmem:[%s1 + $0x230] sm:$0xf]
        %v486 = vld [vmem:[%s1 + $0x234] sm:$0xff]
        %v487 = vld [vmem:[%s1 + $0x23c] sm:$0xf]
        %v488 = vld [vmem:[%s1 + $0x240] sm:$0xff]
        %v489 = vld [vmem:[%s1 + $0x248] sm:$0xf]
        %v490 = vld [vmem:[%s1 + $0x24c] sm:$0xff]
        %v491 = vld [vmem:[%s1 + $0x254] sm:$0xf]
        %v492 = vld [vmem:[%s1 + $0x258] sm:$0xff]
        %v493 = vld [vmem:[%s1 + $0x260] sm:$0xf]
        %v494 = vld [vmem:[%s1 + $0x264] sm:$0xff]
        %v495 = vld [vmem:[%s1 + $0x26c] sm:$0xf]
        %v496 = vld [vmem:[%s1 + $0x270] sm:$0xff]
        %v497 = vld [vmem:[%s1 + $0x278] sm:$0xf]
        %v498 = vld [vmem:[%s1 + $0x27c] sm:$0xff]
        %v499 = vld [vmem:[%s1 + $0x284] sm:$0xf]
        %v500 = vld [vmem:[%s1 + $0x288] sm:$0xff]
        %v501 = vld [vmem:[%s1 + $0x290] sm:$0xf]
        %v502 = vld [vmem:[%s1 + $0x294] sm:$0xff]
        %v503 = vld [vmem:[%s1 + $0x29c] sm:$0xf]
        %v504 = vld [vmem:[%s1 + $0x2a0] sm:$0xff]
        %v505 = vld [vmem:[%s1 + $0x2a8] sm:$0xf]
        %v506 = vld [vmem:[%s1 + $0x2ac] sm:$0xff]
        %v507 = vld [vmem:[%s1 + $0x2b4] sm:$0xf]
        %v508 = vld [vmem:[%s1 + $0x2b8] sm:$0xff]
        %v509 = vld [vmem:[%s1 + $0x2c0] sm:$0xf]
        %v510 = vld [vmem:[%s1 + $0x2c4] sm:$0xff]
        %v511 = vld [vmem:[%s1 + $0x2cc] sm:$0xf]
        %v512 = vld [vmem:[%s1 + $0x2d0] sm:$0xff]
        %v513 = vld [vmem:[%s1 + $0x2d8] sm:$0xf]
        %v514 = vld [vmem:[%s1 + $0x2dc] sm:$0xff]
        %v515 = vld [vmem:[%s1 + $0x2e4] sm:$0xf]
        %v516 = vld [vmem:[%s1 + $0x2e8] sm:$0xff]
        %v517 = vld [vmem:[%s1 + $0x2f0] sm:$0xf]
        %v518 = vld [vmem:[%s1 + $0x2f4] sm:$0xff]
        %v519 = vld [vmem:[%s1 + $0x2fc] sm:$0xf]
        %v520 = vld [vmem:[%s1 + $0x300] sm:$0xff]
        %v521 = vld [vmem:[%s1 + $0x308] sm:$0xf]
        %v522 = vld [vmem:[%s1 + $0x30c] sm:$0xff]
        %v523 = vld [vmem:[%s1 + $0x314] sm:$0xf]
        %v524 = vld [vmem:[%s1 + $0x318] sm:$0xff]
        %v525 = vld [vmem:[%s1 + $0x320] sm:$0xf]
        %v526 = vld [vmem:[%s1 + $0x324] sm:$0xff]
        %v527 = vld [vmem:[%s1 + $0x32c] sm:$0xf]
        %v528 = vld [vmem:[%s1 + $0x330] sm:$0xff]
        %v529 = vld [vmem:[%s1 + $0x338] sm:$0xf]
        %v530 = vld [vmem:[%s1 + $0x33c] sm:$0xff]
        %v531 = vld [vmem:[%s1 + $0x344] sm:$0xf]
        %v532 = vld [vmem:[%s1 + $0x348] sm:$0xff]
        %v533 = vld [vmem:[%s1 + $0x350] sm:$0xf]
        %v534 = vld [vmem:[%s1 + $0x354] sm:$0xff]
        %v535 = vld [vmem:[%s1 + $0x35c] sm:$0xf]
        %v536 = vld [vmem:[%s1 + $0x360] sm:$0xff]
        %v537 = vld [vmem:[%s1 + $0x368] sm:$0xf]
        %v538 = vld [vmem:[%s1 + $0x36c] sm:$0xff]
        %v539 = vld [vmem:[%s1 + $0x374] sm:$0xf]
        %v540 = vld [vmem:[%s1 + $0x378] sm:$0xff]
        %v541 = vld [vmem:[%s1 + $0x380] sm:$0xf]
        %v542 = vld [vmem:[%s1 + $0x384] sm:$0xff]
        %v543 = vld [vmem:[%s1 + $0x38c] sm:$0xf]
        %v544 = vld [vmem:[%s1 + $0x390] sm:$0xff]
        %v545 = vld [vmem:[%s1 + $0x398] sm:$0xf]
        %v546 = vld [vmem:[%s1 + $0x39c] sm:$0xff]
        %v547 = vld [vmem:[%s1 + $0x3a4] sm:$0xf]
        %v548 = vld [vmem:[%s1 + $0x3a8] sm:$0xff]
        %v549 = vld [vmem:[%s1 + $0x3b0] sm:$0xf]
        %v550 = vld [vmem:[%s1 + $0x3b4] sm:$0xff]
        %v551 = vld [vmem:[%s1 + $0x3bc] sm:$0xf]
        %v552 = vld [vmem:[%s1 + $0x3c0] sm:$0xff]
        %v553 = vld [vmem:[%s1 + $0x3c8] sm:$0xf]
        %v554 = vld [vmem:[%s1 + $0x3cc] sm:$0xff]
        %v555 = vld [vmem:[%s1 + $0x3d4] sm:$0xf]
        %v556 = vld [vmem:[%s1 + $0x3d8] sm:$0xff]
        %v557 = vld [vmem:[%s1 + $0x3e0] sm:$0xf]
        %v558 = vld [vmem:[%s1 + $0x3e4] sm:$0xff]
        %v559 = vld [vmem:[%s1 + $0x3ec] sm:$0xf]
        %v560 = vld [vmem:[%s1 + $0x3f0] sm:$0xff]
        %v561 = vld [vmem:[%s1 + $0x3f8] sm:$0xf]
        %v562 = vld [vmem:[%s1 + $0x3fc] sm:$0xff]
        %v563 = vld [vmem:[%s1 + $0x404] sm:$0xf]
        %v564 = vld [vmem:[%s1 + $0x408] sm:$0xff]
        %v565 = vld [vmem:[%s1 + $0x410] sm:$0xf]
        %v566 = vld [vmem:[%s1 + $0x414] sm:$0xff]
        %v567 = vld [vmem:[%s1 + $0x41c] sm:$0xf]
        %v568 = vld [vmem:[%s1 + $0x420] sm:$0xff]
        %v569 = vld [vmem:[%s1 + $0x428] sm:$0xf]
        %v570 = vld [vmem:[%s1 + $0x42c] sm:$0xff]
        %v571 = vld [vmem:[%s1 + $0x434] sm:$0xf]
        %v572 = vld [vmem:[%s1 + $0x438] sm:$0xff]
        %v573 = vld [vmem:[%s1 + $0x440] sm:$0xf]
        %v574 = vld [vmem:[%s1 + $0x444] sm:$0xff]
        %v575 = vld [vmem:[%s1 + $0x44c] sm:$0xf]
        %v576 = vld [vmem:[%s1 + $0x450] sm:$0xff]
        %v577 = vld [vmem:[%s1 + $0x458] sm:$0xf]
        %v578 = vld [vmem:[%s1 + $0x45c] sm:$0xff]
        %v579 = vld [vmem:[%s1 + $0x464] sm:$0xf]
        %v580 = vld [vmem:[%s1 + $0x468] sm:$0xff]
        %v581 = vld [vmem:[%s1 + $0x470] sm:$0xf]
        %v582 = vld [vmem:[%s1 + $0x474] sm:$0xff]
        %v583 = vld [vmem:[%s1 + $0x47c] sm:$0xf]
        %v584 = vld [vmem:[%s1 + $0x480] sm:$0xff]
        %v585 = vld [vmem:[%s1 + $0x488] sm:$0xf]
        %v586 = vld [vmem:[%s1 + $0x48c] sm:$0xff]
        %v587 = vld [vmem:[%s1 + $0x494] sm:$0xf]
        %v588 = vld [vmem:[%s1 + $0x498] sm:$0xff]
        %v589 = vld [vmem:[%s1 + $0x4a0] sm:$0xf]
        %v590 = vld [vmem:[%s1 + $0x4a4] sm:$0xff]
        %v591 = vld [vmem:[%s1 + $0x4ac] sm:$0xf]
        %v592 = vld [vmem:[%s1 + $0x4b0] sm:$0xff]
        %v593 = vld [vmem:[%s1 + $0x4b8] sm:$0xf]
        %v594 = vld [vmem:[%s1 + $0x4bc] sm:$0xff]
        %v595 = vld [vmem:[%s1 + $0x4c4] sm:$0xf]
        %v596 = vld [vmem:[%s1 + $0x4c8] sm:$0xff]
        %v597 = vld [vmem:[%s1 + $0x4d0] sm:$0xf]
        %v598 = vld [vmem:[%s1 + $0x4d4] sm:$0xff]
        %v599 = vld [vmem:[%s1 + $0x4dc] sm:$0xf]
        %v600 = vld [vmem:[%s1 + $0x4e0] sm:$0xff]
        %v601 = vld [vmem:[%s1 + $0x4e8] sm:$0xf]
        %v602 = vld [vmem:[%s1 + $0x4ec] sm:$0xff]
        %v603 = vld [vmem:[%s1 + $0x4f4] sm:$0xf]
        %v604 = vld [vmem:[%s1 + $0x4f8] sm:$0xff]
        %v605 = vld [vmem:[%s1 + $0x500] sm:$0xf]
        %v606 = vld [vmem:[%s1 + $0x504] sm:$0xff]
        %v607 = vld [vmem:[%s1 + $0x50c] sm:$0xf]
        %v608 = vld [vmem:[%s1 + $0x510] sm:$0xff]
        %v609 = vld [vmem:[%s1 + $0x518] sm:$0xf]
        %v610 = vld [vmem:[%s1 + $0x51c] sm:$0xff]
        %v611 = vld [vmem:[%s1 + $0x524] sm:$0xf]
        %v612 = vld [vmem:[%s1 + $0x528] sm:$0xff]
        %v613 = vld [vmem:[%s1 + $0x530] sm:$0xf]
        %v614 = vld [vmem:[%s1 + $0x534] sm:$0xff]
        %v615 = vld [vmem:[%s1 + $0x53c] sm:$0xf]
        %v616 = vld [vmem:[%s1 + $0x540] sm:$0xff]
        %v617 = vld [vmem:[%s1 + $0x548] sm:$0xf]
        %v618 = vld [vmem:[%s1 + $0x54c] sm:$0xff]
        %v619 = vld [vmem:[%s1 + $0x554] sm:$0xf]
        %v620 = vld [vmem:[%s1 + $0x558] sm:$0xff]
        %v621 = vld [vmem:[%s1 + $0x560] sm:$0xf]
        %v622 = vld [vmem:[%s1 + $0x564] sm:$0xff]
        %v623 = vld [vmem:[%s1 + $0x56c] sm:$0xf]
        %v624 = vld [vmem:[%s1 + $0x570] sm:$0xff]
        %v625 = vld [vmem:[%s1 + $0x578] sm:$0xf]
        %v626 = vld [vmem:[%s1 + $0x57c] sm:$0xff]
        %v627 = vld [vmem:[%s1 + $0x584] sm:$0xf]
        %v628 = vld [vmem:[%s1 + $0x588] sm:$0xff]
        %v629 = vld [vmem:[%s1 + $0x590] sm:$0xf]
        %v630 = vld [vmem:[%s1 + $0x594] sm:$0xff]
        %v631 = vld [vmem:[%s1 + $0x59c] sm:$0xf]
        %v632 = vld [vmem:[%s1 + $0x5a0] sm:$0xff]
        %v633 = vld [vmem:[%s1 + $0x5a8] sm:$0xf]
        %v634 = vld [vmem:[%s1 + $0x5ac] sm:$0xff]
        %v635 = vld [vmem:[%s1 + $0x5b4] sm:$0xf]
        %v636 = vld [vmem:[%s1 + $0x5b8] sm:$0xff]
        %v637 = vld [vmem:[%s1 + $0x5c0] sm:$0xf]
        %v638 = vld [vmem:[%s1 + $0x5c4] sm:$0xff]
        %v639 = vld [vmem:[%s1 + $0x5cc] sm:$0xf]
        %v640 = vld [vmem:[%s1 + $0x5d0] sm:$0xff]
        %v641 = vld [vmem:[%s1 + $0x5d8] sm:$0xf]
        %v642 = vld [vmem:[%s1 + $0x5dc] sm:$0xff]
        %v643 = vld [vmem:[%s1 + $0x5e4] sm:$0xf]
        %v644 = vld [vmem:[%s1 + $0x5e8] sm:$0xff]
        %v645 = vld [vmem:[%s1 + $0x5f0] sm:$0xf]
        %v646 = vld [vmem:[%s1 + $0x5f4] sm:$0xff]
        %v647 = vld [vmem:[%s1 + $0x5fc] sm:$0xf]
        %v648 = vld [vmem:[%s1 + $0x600] sm:$0xff]
        %v649 = vld [vmem:[%s1 + $0x608] sm:$0xf]
        %v650 = vld [vmem:[%s1 + $0x60c] sm:$0xff]
        %v651 = vld [vmem:[%s1 + $0x614] sm:$0xf]
        %v652 = vld [vmem:[%s1 + $0x618] sm:$0xff]
        %v653 = vld [vmem:[%s1 + $0x620] sm:$0xf]
        %v654 = vld [vmem:[%s1 + $0x624] sm:$0xff]
        %v655 = vld [vmem:[%s1 + $0x62c] sm:$0xf]
        %v656 = vld [vmem:[%s1 + $0x630] sm:$0xff]
        %v657 = vld [vmem:[%s1 + $0x638] sm:$0xf]
        %v658 = vld [vmem:[%s1 + $0x63c] sm:$0xff]
        %v659 = vld [vmem:[%s1 + $0x644] sm:$0xf]
        %v660 = vld [vmem:[%s1 + $0x648] sm:$0xff]
        %v661 = vld [vmem:[%s1 + $0x650] sm:$0xf]
        %v662 = vld [vmem:[%s1 + $0x654] sm:$0xff]
        %v663 = vld [vmem:[%s1 + $0x65c] sm:$0xf]
        %v664 = vld [vmem:[%s1 + $0x660] sm:$0xff]
        %v665 = vld [vmem:[%s1 + $0x668] sm:$0xf]
        %v666 = vld [vmem:[%s1 + $0x66c] sm:$0xff]
        %v667 = vld [vmem:[%s1 + $0x674] sm:$0xf]
        %v668 = vld [vmem:[%s1 + $0x678] sm:$0xff]
        %v669 = vld [vmem:[%s1 + $0x680] sm:$0xf]
        %v670 = vld [vmem:[%s1 + $0x684] sm:$0xff]
        %v671 = vld [vmem:[%s1 + $0x68c] sm:$0xf]
        %v672 = vld [vmem:[%s1 + $0x690] sm:$0xff]
        %v673 = vld [vmem:[%s1 + $0x698] sm:$0xf]
        %v674 = vld [vmem:[%s1 + $0x69c] sm:$0xff]
        %v675 = vld [vmem:[%s1 + $0x6a4] sm:$0xf]
        %v676 = vld [vmem:[%s1 + $0x6a8] sm:$0xff]
        %v677 = vld [vmem:[%s1 + $0x6b0] sm:$0xf]
        %v678 = vld [vmem:[%s1 + $0x6b4] sm:$0xff]
        %v679 = vld [vmem:[%s1 + $0x6bc] sm:$0xf]
        %v680 = vld [vmem:[%s1 + $0x6c0] sm:$0xff]
        %v681 = vld [vmem:[%s1 + $0x6c8] sm:$0xf]
        %v682 = vld [vmem:[%s1 + $0x6cc] sm:$0xff]
        %v683 = vld [vmem:[%s1 + $0x6d4] sm:$0xf]
        %v684 = vld [vmem:[%s1 + $0x6d8] sm:$0xff]
        %v685 = vld [vmem:[%s1 + $0x6e0] sm:$0xf]
        %v686 = vld [vmem:[%s1 + $0x6e4] sm:$0xff]
        %v687 = vld [vmem:[%s1 + $0x6ec] sm:$0xf]
        %v688 = vld [vmem:[%s1 + $0x6f0] sm:$0xff]
        %v689 = vld [vmem:[%s1 + $0x6f8] sm:$0xf]
        %v690 = vld [vmem:[%s1 + $0x6fc] sm:$0xff]
        %v691 = vld [vmem:[%s1 + $0x704] sm:$0xf]
        %v692 = vld [vmem:[%s1 + $0x708] sm:$0xff]
        %v693 = vld [vmem:[%s1 + $0x710] sm:$0xf]
        %v694 = vld [vmem:[%s1 + $0x714] sm:$0xff]
        %v695 = vld [vmem:[%s1 + $0x71c] sm:$0xf]
        %v696 = vld [vmem:[%s1 + $0x720] sm:$0xff]
        %v697 = vld [vmem:[%s1 + $0x728] sm:$0xf]
        %v698 = vld [vmem:[%s1 + $0x72c] sm:$0xff]
        %v699 = vld [vmem:[%s1 + $0x734] sm:$0xf]
        %v700 = vld [vmem:[%s1 + $0x738] sm:$0xff]
        %v701 = vld [vmem:[%s1 + $0x740] sm:$0xf]
        %v702 = vld [vmem:[%s1 + $0x744] sm:$0xff]
        %v703 = vld [vmem:[%s1 + $0x74c] sm:$0xf]
        %v704 = vld [vmem:[%s1 + $0x750] sm:$0xff]
        %v705 = vld [vmem:[%s1 + $0x758] sm:$0xf]
        %v706 = vld [vmem:[%s1 + $0x75c] sm:$0xff]
        %v707 = vld [vmem:[%s1 + $0x764] sm:$0xf]
        %v708 = vld [vmem:[%s1 + $0x768] sm:$0xff]
        %v709 = vld [vmem:[%s1 + $0x770] sm:$0xf]
        %v710 = vld [vmem:[%s1 + $0x774] sm:$0xff]
        %v711 = vld [vmem:[%s1 + $0x77c] sm:$0xf]
        %v712 = vld [vmem:[%s1 + $0x780] sm:$0xff]
        %v713 = vld [vmem:[%s1 + $0x788] sm:$0xf]
        %v714 = vld [vmem:[%s1 + $0x78c] sm:$0xff]
        %v715 = vld [vmem:[%s1 + $0x794] sm:$0xf]
        %v716 = vld [vmem:[%s1 + $0x798] sm:$0xff]
        %v717 = vld [vmem:[%s1 + $0x7a0] sm:$0xf]
        %v718 = vld [vmem:[%s1 + $0x7a4] sm:$0xff]
        %v719 = vld [vmem:[%s1 + $0x7ac] sm:$0xf]
        %v720 = vld [vmem:[%s1 + $0x7b0] sm:$0xff]
        %v721 = vld [vmem:[%s1 + $0x7b8] sm:$0xf]
        %v722 = vld [vmem:[%s1 + $0x7bc] sm:$0xff]
        %v723 = vld [vmem:[%s1 + $0x7c4] sm:$0xf]
        %v724 = vld [vmem:[%s1 + $0x7c8] sm:$0xff]
        %v725 = vld [vmem:[%s1 + $0x7d0] sm:$0xf]
        %v726 = vld [vmem:[%s1 + $0x7d4] sm:$0xff]
        %v727 = vld [vmem:[%s1 + $0x7dc] sm:$0xf]
        %v728 = vld [vmem:[%s1 + $0x7e0] sm:$0xff]
        %v729 = vld [vmem:[%s1 + $0x7e8] sm:$0xf]
        %v730 = vld [vmem:[%s1 + $0x7ec] sm:$0xff]
        %v731 = vld [vmem:[%s1 + $0x7f4] sm:$0xf]
        %v732 = vld [vmem:[%s1 + $0x7f8] sm:$0xff]
        %v733 = vld [vmem:[%s1 + $0x800] sm:$0xf]
        %v734 = vld [vmem:[%s1 + $0x804] sm:$0xff]
        %v735 = vld [vmem:[%s1 + $0x80c] sm:$0xf]
        %v736 = vld [vmem:[%s1 + $0x810] sm:$0xff]
        %v737 = vld [vmem:[%s1 + $0x818] sm:$0xf]
        %v738 = vld [vmem:[%s1 + $0x81c] sm:$0xff]
        %v739 = vld [vmem:[%s1 + $0x824] sm:$0xf]
        %v740 = vld [vmem:[%s1 + $0x828] sm:$0xff]
        %v741 = vld [vmem:[%s1 + $0x830] sm:$0xf]
        %v742 = vld [vmem:[%s1 + $0x834] sm:$0xff]
        %v743 = vld [vmem:[%s1 + $0x83c] sm:$0xf]
        %v744 = vld [vmem:[%s1 + $0x840] sm:$0xff]
        %v745 = vld [vmem:[%s1 + $0x848] sm:$0xf]
        %v746 = vld [vmem:[%s1 + $0x84c] sm:$0xff]
        %v747 = vld [vmem:[%s1 + $0x854] sm:$0xf]
        %v748 = vld [vmem:[%s1 + $0x858] sm:$0xff]
        %v749 = vld [vmem:[%s1 + $0x860] sm:$0xf]
        %v750 = vld [vmem:[%s1 + $0x864] sm:$0xff]
        %v751 = vld [vmem:[%s1 + $0x86c] sm:$0xf]
        %v752 = vld [vmem:[%s1 + $0x870] sm:$0xff]
        %v753 = vld [vmem:[%s1 + $0x878] sm:$0xf]
        %v754 = vld [vmem:[%s1 + $0x87c] sm:$0xff]
        %v755 = vld [vmem:[%s1 + $0x884] sm:$0xf]
        %v756 = vld [vmem:[%s1 + $0x888] sm:$0xff]
        %v757 = vld [vmem:[%s1 + $0x890] sm:$0xf]
        %v758 = vld [vmem:[%s1 + $0x894] sm:$0xff]
        %v759 = vld [vmem:[%s1 + $0x89c] sm:$0xf]
        %v760 = vld [vmem:[%s1 + $0x8a0] sm:$0xff]
        %v761 = vld [vmem:[%s1 + $0x8a8] sm:$0xf]
        %v762 = vld [vmem:[%s1 + $0x8ac] sm:$0xff]
        %v763 = vld [vmem:[%s1 + $0x8b4] sm:$0xf]
        %v764 = vld [vmem:[%s1 + $0x8b8] sm:$0xff]
        %v765 = vld [vmem:[%s1 + $0x8c0] sm:$0xf]
        %v766 = vld [vmem:[%s1 + $0x8c4] sm:$0xff]
        %v767 = vld [vmem:[%s1 + $0x8cc] sm:$0xf]
        %v768 = vld [vmem:[%s1 + $0x8d0] sm:$0xff]
        %v769 = vld [vmem:[%s1 + $0x8d8] sm:$0xf]
        %v770 = vld [vmem:[%s1 + $0x8dc] sm:$0xff]
        %v771 = vld [vmem:[%s1 + $0x8e4] sm:$0xf]
        %v772 = vld [vmem:[%s1 + $0x8e8] sm:$0xff]
        %v773 = vld [vmem:[%s1 + $0x8f0] sm:$0xf]
        %v774 = vld [vmem:[%s1 + $0x8f4] sm:$0xff]
        %v775 = vld [vmem:[%s1 + $0x8fc] sm:$0xf]
        %v776 = vld [vmem:[%s1 + $0x900] sm:$0xff]
        %v777 = vld [vmem:[%s1 + $0x908] sm:$0xf]
        %v778 = vld [vmem:[%s1 + $0x90c] sm:$0xff]
        %v779 = vld [vmem:[%s1 + $0x914] sm:$0xf]
        %v780 = vld [vmem:[%s1 + $0x918] sm:$0xff]
        %v781 = vld [vmem:[%s1 + $0x920] sm:$0xf]
        %v782 = vld [vmem:[%s1 + $0x924] sm:$0xff]
        %v783 = vld [vmem:[%s1 + $0x92c] sm:$0xf]
        %v784 = vld [vmem:[%s1 + $0x930] sm:$0xff]
        %v785 = vld [vmem:[%s1 + $0x938] sm:$0xf]
        %v786 = vld [vmem:[%s1 + $0x93c] sm:$0xff]
        %v787 = vld [vmem:[%s1 + $0x944] sm:$0xf]
        %v788 = vld [vmem:[%s1 + $0x948] sm:$0xff]
        %v789 = vld [vmem:[%s1 + $0x950] sm:$0xf]
        %v790 = vld [vmem:[%s1 + $0x954] sm:$0xff]
        %v791 = vld [vmem:[%s1 + $0x95c] sm:$0xf]
        %v792 = vld [vmem:[%s1 + $0x960] sm:$0xff]
        %v793 = vld [vmem:[%s1 + $0x968] sm:$0xf]
        %v794 = vld [vmem:[%s1 + $0x96c] sm:$0xff]
        %v795 = vld [vmem:[%s1 + $0x974] sm:$0xf]
        %v796 = vld [vmem:[%s1 + $0x978] sm:$0xff]
        %v797 = vld [vmem:[%s1 + $0x980] sm:$0xf]
        %v798 = vld [vmem:[%s1 + $0x984] sm:$0xff]
        %v799 = vld [vmem:[%s1 + $0x98c] sm:$0xf]
        %v800 = vld [vmem:[%s1 + $0x990] sm:$0xff]
        %v801 = vld [vmem:[%s1 + $0x998] sm:$0xf]
        %v802 = vld [vmem:[%s1 + $0x99c] sm:$0xff]
        %v803 = vld [vmem:[%s1 + $0x9a4] sm:$0xf]
        %v804 = vld [vmem:[%s1 + $0x9a8] sm:$0xff]
        %v805 = vld [vmem:[%s1 + $0x9b0] sm:$0xf]
        %v806 = vld [vmem:[%s1 + $0x9b4] sm:$0xff]
        %v807 = vld [vmem:[%s1 + $0x9bc] sm:$0xf]
        %v808 = vld [vmem:[%s1 + $0x9c0] sm:$0xff]
        %v809 = vld [vmem:[%s1 + $0x9c8] sm:$0xf]
        %v810 = vld [vmem:[%s1 + $0x9cc] sm:$0xff]
        %v811 = vld [vmem:[%s1 + $0x9d4] sm:$0xf]
        %v812 = vld [vmem:[%s1 + $0x9d8] sm:$0xff]
        %v813 = vld [vmem:[%s1 + $0x9e0] sm:$0xf]
        %v814 = vld [vmem:[%s1 + $0x9e4] sm:$0xff]
        %v815 = vld [vmem:[%s1 + $0x9ec] sm:$0xf]
        %v816 = vld [vmem:[%s1 + $0x9f0] sm:$0xff]
        %v817 = vld [vmem:[%s1 + $0x9f8] sm:$0xf]
        %v818 = vld [vmem:[%s1 + $0x9fc] sm:$0xff]
        %v819 = vld [vmem:[%s1 + $0xa04] sm:$0xf]
        %v820 = vld [vmem:[%s1 + $0xa08] sm:$0xff]
        %v821 = vld [vmem:[%s1 + $0xa10] sm:$0xf]
        %v822 = vld [vmem:[%s1 + $0xa14] sm:$0xff]
        %v823 = vld [vmem:[%s1 + $0xa1c] sm:$0xf]
        %v824 = vld [vmem:[%s1 + $0xa20] sm:$0xff]
        %v825 = vld [vmem:[%s1 + $0xa28] sm:$0xf]
        %v826 = vld [vmem:[%s1 + $0xa2c] sm:$0xff]
        %v827 = vld [vmem:[%s1 + $0xa34] sm:$0xf]
        %v828 = vld [vmem:[%s1 + $0xa38] sm:$0xff]
        %v829 = vld [vmem:[%s1 + $0xa40] sm:$0xf]
        %v830 = vld [vmem:[%s1 + $0xa44] sm:$0xff]
        %v831 = vld [vmem:[%s1 + $0xa4c] sm:$0xf]
        %v832 = vld [vmem:[%s1 + $0xa50] sm:$0xff]
        %v833 = vld [vmem:[%s1 + $0xa58] sm:$0xf]
        %v834 = vld [vmem:[%s1 + $0xa5c] sm:$0xff]
        %v835 = vld [vmem:[%s1 + $0xa64] sm:$0xf]
        %v836 = vld [vmem:[%s1 + $0xa68] sm:$0xff]
        %v837 = vld [vmem:[%s1 + $0xa70] sm:$0xf]
        %v838 = vld [vmem:[%s1 + $0xa74] sm:$0xff]
        %v839 = vld [vmem:[%s1 + $0xa7c] sm:$0xf]
        %v840 = vld [vmem:[%s1 + $0xa80] sm:$0xff]
        %v841 = vld [vmem:[%s1 + $0xa88] sm:$0xf]
        %v842 = vld [vmem:[%s1 + $0xa8c] sm:$0xff]
        %v843 = vld [vmem:[%s1 + $0xa94] sm:$0xf]
        %v844 = vld [vmem:[%s1 + $0xa98] sm:$0xff]
        %v845 = vld [vmem:[%s1 + $0xaa0] sm:$0xf]
        %v846 = vld [vmem:[%s1 + $0xaa4] sm:$0xff]
        %v847 = vld [vmem:[%s1 + $0xaac] sm:$0xf]
        %v848 = vld [vmem:[%s1 + $0xab0] sm:$0xff]
        %v849 = vld [vmem:[%s1 + $0xab8] sm:$0xf]
        %v850 = vld [vmem:[%s1 + $0xabc] sm:$0xff]
        %v851 = vld [vmem:[%s1 + $0xac4] sm:$0xf]
        %v852 = vld [vmem:[%s1 + $0xac8] sm:$0xff]
        %v853 = vld [vmem:[%s1 + $0xad0] sm:$0xf]
        %v854 = vld [vmem:[%s1 + $0xad4] sm:$0xff]
        %v855 = vld [vmem:[%s1 + $0xadc] sm:$0xf]
        %v856 = vld [vmem:[%s1 + $0xae0] sm:$0xff]
        %v857 = vld [vmem:[%s1 + $0xae8] sm:$0xf]
        %v858 = vld [vmem:[%s1 + $0xaec] sm:$0xff]
        %v859 = vld [vmem:[%s1 + $0xaf4] sm:$0xf]
        %v860 = vld [vmem:[%s1 + $0xaf8] sm:$0xff]
        %v861 = vld [vmem:[%s1 + $0xb00] sm:$0xf]
        %v862 = vld [vmem:[%s1 + $0xb04] sm:$0xff]
        %v863 = vld [vmem:[%s1 + $0xb0c] sm:$0xf]
        %v864 = vld [vmem:[%s1 + $0xb10] sm:$0xff]
        %v865 = vld [vmem:[%s1 + $0xb18] sm:$0xf]
        %v866 = vld [vmem:[%s1 + $0xb1c] sm:$0xff]
        %v867 = vld [vmem:[%s1 + $0xb24] sm:$0xf]
        %v868 = vld [vmem:[%s1 + $0xb28] sm:$0xff]
        %v869 = vld [vmem:[%s1 + $0xb30] sm:$0xf]
        %v870 = vld [vmem:[%s1 + $0xb34] sm:$0xff]
        %v871 = vld [vmem:[%s1 + $0xb3c] sm:$0xf]
        %v872 = vld [vmem:[%s1 + $0xb40] sm:$0xff]
        %v873 = vld [vmem:[%s1 + $0xb48] sm:$0xf]
        %v874 = vld [vmem:[%s1 + $0xb4c] sm:$0xff]
        %v875 = vld [vmem:[%s1 + $0xb54] sm:$0xf]
        %v876 = vld [vmem:[%s1 + $0xb58] sm:$0xff]
        %v877 = vld [vmem:[%s1 + $0xb60] sm:$0xf]
        %v878 = vld [vmem:[%s1 + $0xb64] sm:$0xff]
        %v879 = vld [vmem:[%s1 + $0xb6c] sm:$0xf]
        %v880 = vld [vmem:[%s1 + $0xb70] sm:$0xff]
        %v881 = vld [vmem:[%s1 + $0xb78] sm:$0xf]
        %v882 = vld [vmem:[%s1 + $0xb7c] sm:$0xff]
        %v883 = vld [vmem:[%s1 + $0xb84] sm:$0xf]
        %v884 = vld [vmem:[%s1 + $0xb88] sm:$0xff]
        %v885 = vld [vmem:[%s1 + $0xb90] sm:$0xf]
        %v886 = vld [vmem:[%s1 + $0xb94] sm:$0xff]
        %v887 = vld [vmem:[%s1 + $0xb9c] sm:$0xf]
        %v888 = vld [vmem:[%s1 + $0xba0] sm:$0xff]
        %v889 = vld [vmem:[%s1 + $0xba8] sm:$0xf]
        %v890 = vld [vmem:[%s1 + $0xbac] sm:$0xff]
        %v891 = vld [vmem:[%s1 + $0xbb4] sm:$0xf]
        %v892 = vld [vmem:[%s1 + $0xbb8] sm:$0xff]
        %v893 = vld [vmem:[%s1 + $0xbc0] sm:$0xf]
        %v894 = vld [vmem:[%s1 + $0xbc4] sm:$0xff]
        %v895 = vld [vmem:[%s1 + $0xbcc] sm:$0xf]
        %v896 = vld [vmem:[%s1 + $0xbd0] sm:$0xff]
        %v897 = vld [vmem:[%s1 + $0xbd8] sm:$0xf]
        %v898 = vld [vmem:[%s1 + $0xbdc] sm:$0xff]
        %v899 = vld [vmem:[%s1 + $0xbe4] sm:$0xf]
        %v900 = vld [vmem:[%s1 + $0xbe8] sm:$0xff]
        %v901 = vld [vmem:[%s1 + $0xbf0] sm:$0xf]
        %v902 = vld [vmem:[%s1 + $0xbf4] sm:$0xff]
        %v903 = vld [vmem:[%s1 + $0xbfc] sm:$0xf]
        %v904 = vld [vmem:[%s1 + $0xc00] sm:$0xff]
        %v905 = vld [vmem:[%s1 + $0xc08] sm:$0xf]
        %v906 = vld [vmem:[%s1 + $0xc0c] sm:$0xff]
        %v907 = vld [vmem:[%s1 + $0xc14] sm:$0xf]
        %v908 = vld [vmem:[%s1 + $0xc18] sm:$0xff]
        %v909 = vld [vmem:[%s1 + $0xc20] sm:$0xf]
        %v910 = vld [vmem:[%s1 + $0xc24] sm:$0xff]
        %v911 = vld [vmem:[%s1 + $0xc2c] sm:$0xf]
        %v912 = vld [vmem:[%s1 + $0xc30] sm:$0xff]
        %v913 = vld [vmem:[%s1 + $0xc38] sm:$0xf]
        %v914 = vld [vmem:[%s1 + $0xc3c] sm:$0xff]
        %v915 = vld [vmem:[%s1 + $0xc44] sm:$0xf]
        %v916 = vld [vmem:[%s1 + $0xc48] sm:$0xff]
        %v917 = vld [vmem:[%s1 + $0xc50] sm:$0xf]
        %v918 = vld [vmem:[%s1 + $0xc54] sm:$0xff]
        %v919 = vld [vmem:[%s1 + $0xc5c] sm:$0xf]
        %v920 = vld [vmem:[%s1 + $0xc60] sm:$0xff]
        %v921 = vld [vmem:[%s1 + $0xc68] sm:$0xf]
        %v922 = vld [vmem:[%s1 + $0xc6c] sm:$0xff]
        %v923 = vld [vmem:[%s1 + $0xc74] sm:$0xf]
        %v924 = vld [vmem:[%s1 + $0xc78] sm:$0xff]
        %v925 = vld [vmem:[%s1 + $0xc80] sm:$0xf]
        %v926 = vld [vmem:[%s1 + $0xc84] sm:$0xff]
        %v927 = vld [vmem:[%s1 + $0xc8c] sm:$0xf]
        %v928 = vld [vmem:[%s1 + $0xc90] sm:$0xff]
        %v929 = vld [vmem:[%s1 + $0xc98] sm:$0xf]
        %v930 = vld [vmem:[%s1 + $0xc9c] sm:$0xff]
        %v931 = vld [vmem:[%s1 + $0xca4] sm:$0xf]
        %v932 = vld [vmem:[%s1 + $0xca8] sm:$0xff]
        %v933 = vld [vmem:[%s1 + $0xcb0] sm:$0xf]
        %v934 = vld [vmem:[%s1 + $0xcb4] sm:$0xff]
        %v935 = vld [vmem:[%s1 + $0xcbc] sm:$0xf]
        %v936 = vld [vmem:[%s1 + $0xcc0] sm:$0xff]
        %v937 = vld [vmem:[%s1 + $0xcc8] sm:$0xf]
        %v938 = vld [vmem:[%s1 + $0xccc] sm:$0xff]
        %v939 = vld [vmem:[%s1 + $0xcd4] sm:$0xf]
        %v940 = vld [vmem:[%s1 + $0xcd8] sm:$0xff]
        %v941 = vld [vmem:[%s1 + $0xce0] sm:$0xf]
        %v942 = vld [vmem:[%s1 + $0xce4] sm:$0xff]
        %v943 = vld [vmem:[%s1 + $0xcec] sm:$0xf]
        %v944 = vld [vmem:[%s1 + $0xcf0] sm:$0xff]
        %v945 = vld [vmem:[%s1 + $0xcf8] sm:$0xf]
        %v946 = vld [vmem:[%s1 + $0xcfc] sm:$0xff]
        %v947 = vld [vmem:[%s1 + $0xd04] sm:$0xf]
        %v948 = vld [vmem:[%s1 + $0xd08] sm:$0xff]
        %v949 = vld [vmem:[%s1 + $0xd10] sm:$0xf]
        %v950 = vld [vmem:[%s1 + $0xd14] sm:$0xff]
        %v951 = vld [vmem:[%s1 + $0xd1c] sm:$0xf]
        %v952 = vld [vmem:[%s1 + $0xd20] sm:$0xff]
        %v953 = vld [vmem:[%s1 + $0xd28] sm:$0xf]
        %v954 = vld [vmem:[%s1 + $0xd2c] sm:$0xff]
        %v955 = vld [vmem:[%s1 + $0xd34] sm:$0xf]
        %v956 = vld [vmem:[%s1 + $0xd38] sm:$0xff]
        %v957 = vld [vmem:[%s1 + $0xd40] sm:$0xf]
        %v958 = vld [vmem:[%s1 + $0xd44] sm:$0xff]
        %v959 = vld [vmem:[%s1 + $0xd4c] sm:$0xf]
        %v960 = vld [vmem:[%s1 + $0xd50] sm:$0xff]
        %v961 = vld [vmem:[%s1 + $0xd58] sm:$0xf]
        %v962 = vld [vmem:[%s1 + $0xd5c] sm:$0xff]
        %v963 = vld [vmem:[%s1 + $0xd64] sm:$0xf]
        %v964 = vld [vmem:[%s1 + $0xd68] sm:$0xff]
        %v965 = vld [vmem:[%s1 + $0xd70] sm:$0xf]
        %v966 = vld [vmem:[%s1 + $0xd74] sm:$0xff]
        %v967 = vld [vmem:[%s1 + $0xd7c] sm:$0xf]
        %v968 = vld [vmem:[%s2] sm:$0x7]
        %v970 = vlaneseq
        %v971 = vshrl.u32 %v970, 7
        %v972 = vsub.s32 0, %v971
        %v973 = vrot.slane %v968, %v972
        %v974 = vlaneseq
        %v975 = vshrl.u32 %v974, 7
        %v976 = vsub.s32 1, %v975
        %v977 = vrot.slane %v968, %v976
        %v978 = vlaneseq
        %v979 = vshrl.u32 %v978, 7
        %v980 = vsub.s32 2, %v979
        %v981 = vrot.slane %v968, %v980
        %v1561 = vunpack.c.l.b16 %v392
        %v1562 = vunpack.c.h.b16 %v392
        %v1563 = vunpack.c.l.b16 %v393
        %v1564 = vunpack.c.l.b16 %v394
        %v1565 = vunpack.c.h.b16 %v394
        %v1566 = vunpack.c.l.b16 %v395
        %v1567 = vunpack.c.l.b16 %v396
        %v1568 = vunpack.c.h.b16 %v396
        %v1569 = vunpack.c.l.b16 %v397
        %v1570 = vunpack.c.l.b16 %v398
        %v1571 = vunpack.c.h.b16 %v398
        %v1572 = vunpack.c.l.b16 %v399
        %v1573 = vunpack.c.l.b16 %v400
        %v1574 = vunpack.c.h.b16 %v400
        %v1575 = vunpack.c.l.b16 %v401
        %v1576 = vunpack.c.l.b16 %v402
        %v1577 = vunpack.c.h.b16 %v402
        %v1578 = vunpack.c.l.b16 %v403
        %v1579 = vunpack.c.l.b16 %v404
        %v1580 = vunpack.c.h.b16 %v404
        %v1581 = vunpack.c.l.b16 %v405
        %v1582 = vunpack.c.l.b16 %v406
        %v1583 = vunpack.c.h.b16 %v406
        %v1584 = vunpack.c.l.b16 %v407
        %v1585 = vunpack.c.l.b16 %v408
        %v1586 = vunpack.c.h.b16 %v408
        %v1587 = vunpack.c.l.b16 %v409
        %v1588 = vunpack.c.l.b16 %v410
        %v1589 = vunpack.c.h.b16 %v410
        %v1590 = vunpack.c.l.b16 %v411
        %v1591 = vunpack.c.l.b16 %v412
        %v1592 = vunpack.c.h.b16 %v412
        %v1593 = vunpack.c.l.b16 %v413
        %v1594 = vunpack.c.l.b16 %v414
        %v1595 = vunpack.c.h.b16 %v414
        %v1596 = vunpack.c.l.b16 %v415
        %v1597 = vunpack.c.l.b16 %v416
        %v1598 = vunpack.c.h.b16 %v416
        %v1599 = vunpack.c.l.b16 %v417
        %v1600 = vunpack.c.l.b16 %v418
        %v1601 = vunpack.c.h.b16 %v418
        %v1602 = vunpack.c.l.b16 %v419
        %v1603 = vunpack.c.l.b16 %v420
        %v1604 = vunpack.c.h.b16 %v420
        %v1605 = vunpack.c.l.b16 %v421
        %v1606 = vunpack.c.l.b16 %v422
        %v1607 = vunpack.c.h.b16 %v422
        %v1608 = vunpack.c.l.b16 %v423
        %v1609 = vunpack.c.l.b16 %v424
        %v1610 = vunpack.c.h.b16 %v424
        %v1611 = vunpack.c.l.b16 %v425
        %v1612 = vunpack.c.l.b16 %v426
        %v1613 = vunpack.c.h.b16 %v426
        %v1614 = vunpack.c.l.b16 %v427
        %v1615 = vunpack.c.l.b16 %v428
        %v1616 = vunpack.c.h.b16 %v428
        %v1617 = vunpack.c.l.b16 %v429
        %v1618 = vunpack.c.l.b16 %v430
        %v1619 = vunpack.c.h.b16 %v430
        %v1620 = vunpack.c.l.b16 %v431
        %v1621 = vunpack.c.l.b16 %v432
        %v1622 = vunpack.c.h.b16 %v432
        %v1623 = vunpack.c.l.b16 %v433
        %v1624 = vunpack.c.l.b16 %v434
        %v1625 = vunpack.c.h.b16 %v434
        %v1626 = vunpack.c.l.b16 %v435
        %v1627 = vunpack.c.l.b16 %v436
        %v1628 = vunpack.c.h.b16 %v436
        %v1629 = vunpack.c.l.b16 %v437
        %v1630 = vunpack.c.l.b16 %v438
        %v1631 = vunpack.c.h.b16 %v438
        %v1632 = vunpack.c.l.b16 %v439
        %v1633 = vunpack.c.l.b16 %v440
        %v1634 = vunpack.c.h.b16 %v440
        %v1635 = vunpack.c.l.b16 %v441
        %v1636 = vunpack.c.l.b16 %v442
        %v1637 = vunpack.c.h.b16 %v442
        %v1638 = vunpack.c.l.b16 %v443
        %v1639 = vunpack.c.l.b16 %v444
        %v1640 = vunpack.c.h.b16 %v444
        %v1641 = vunpack.c.l.b16 %v445
        %v1642 = vunpack.c.l.b16 %v446
        %v1643 = vunpack.c.h.b16 %v446
        %v1644 = vunpack.c.l.b16 %v447
        %v1645 = vunpack.c.l.b16 %v448
        %v1646 = vunpack.c.h.b16 %v448
        %v1647 = vunpack.c.l.b16 %v449
        %v1648 = vunpack.c.l.b16 %v450
        %v1649 = vunpack.c.h.b16 %v450
        %v1650 = vunpack.c.l.b16 %v451
        %v1651 = vunpack.c.l.b16 %v452
        %v1652 = vunpack.c.h.b16 %v452
        %v1653 = vunpack.c.l.b16 %v453
        %v1654 = vunpack.c.l.b16 %v454
        %v1655 = vunpack.c.h.b16 %v454
        %v1656 = vunpack.c.l.b16 %v455
        %v1657 = vunpack.c.l.b16 %v456
        %v1658 = vunpack.c.h.b16 %v456
        %v1659 = vunpack.c.l.b16 %v457
        %v1660 = vunpack.c.l.b16 %v458
        %v1661 = vunpack.c.h.b16 %v458
        %v1662 = vunpack.c.l.b16 %v459
        %v1663 = vunpack.c.l.b16 %v460
        %v1664 = vunpack.c.h.b16 %v460
        %v1665 = vunpack.c.l.b16 %v461
        %v1666 = vunpack.c.l.b16 %v462
        %v1667 = vunpack.c.h.b16 %v462
        %v1668 = vunpack.c.l.b16 %v463
        %v1669 = vunpack.c.l.b16 %v464
        %v1670 = vunpack.c.h.b16 %v464
        %v1671 = vunpack.c.l.b16 %v465
        %v1672 = vunpack.c.l.b16 %v466
        %v1673 = vunpack.c.h.b16 %v466
        %v1674 = vunpack.c.l.b16 %v467
        %v1675 = vunpack.c.l.b16 %v468
        %v1676 = vunpack.c.h.b16 %v468
        %v1677 = vunpack.c.l.b16 %v469
        %v1678 = vunpack.c.l.b16 %v470
        %v1679 = vunpack.c.h.b16 %v470
        %v1680 = vunpack.c.l.b16 %v471
        %v1681 = vunpack.c.l.b16 %v472
        %v1682 = vunpack.c.h.b16 %v472
        %v1683 = vunpack.c.l.b16 %v473
        %v1684 = vunpack.c.l.b16 %v474
        %v1685 = vunpack.c.h.b16 %v474
        %v1686 = vunpack.c.l.b16 %v475
        %v1687 = vunpack.c.l.b16 %v476
        %v1688 = vunpack.c.h.b16 %v476
        %v1689 = vunpack.c.l.b16 %v477
        %v1690 = vunpack.c.l.b16 %v478
        %v1691 = vunpack.c.h.b16 %v478
        %v1692 = vunpack.c.l.b16 %v479
        %v1693 = vunpack.c.l.b16 %v480
        %v1694 = vunpack.c.h.b16 %v480
        %v1695 = vunpack.c.l.b16 %v481
        %v1696 = vunpack.c.l.b16 %v482
        %v1697 = vunpack.c.h.b16 %v482
        %v1698 = vunpack.c.l.b16 %v483
        %v1699 = vunpack.c.l.b16 %v484
        %v1700 = vunpack.c.h.b16 %v484
        %v1701 = vunpack.c.l.b16 %v485
        %v1702 = vunpack.c.l.b16 %v486
        %v1703 = vunpack.c.h.b16 %v486
        %v1704 = vunpack.c.l.b16 %v487
        %v1705 = vunpack.c.l.b16 %v488
        %v1706 = vunpack.c.h.b16 %v488
        %v1707 = vunpack.c.l.b16 %v489
        %v1708 = vunpack.c.l.b16 %v490
        %v1709 = vunpack.c.h.b16 %v490
        %v1710 = vunpack.c.l.b16 %v491
        %v1711 = vunpack.c.l.b16 %v492
        %v1712 = vunpack.c.h.b16 %v492
        %v1713 = vunpack.c.l.b16 %v493
        %v1714 = vunpack.c.l.b16 %v494
        %v1715 = vunpack.c.h.b16 %v494
        %v1716 = vunpack.c.l.b16 %v495
        %v1717 = vunpack.c.l.b16 %v496
        %v1718 = vunpack.c.h.b16 %v496
        %v1719 = vunpack.c.l.b16 %v497
        %v1720 = vunpack.c.l.b16 %v498
        %v1721 = vunpack.c.h.b16 %v498
        %v1722 = vunpack.c.l.b16 %v499
        %v1723 = vunpack.c.l.b16 %v500
        %v1724 = vunpack.c.h.b16 %v500
        %v1725 = vunpack.c.l.b16 %v501
        %v1726 = vunpack.c.l.b16 %v502
        %v1727 = vunpack.c.h.b16 %v502
        %v1728 = vunpack.c.l.b16 %v503
        %v1729 = vunpack.c.l.b16 %v504
        %v1730 = vunpack.c.h.b16 %v504
        %v1731 = vunpack.c.l.b16 %v505
        %v1732 = vunpack.c.l.b16 %v506
        %v1733 = vunpack.c.h.b16 %v506
        %v1734 = vunpack.c.l.b16 %v507
        %v1735 = vunpack.c.l.b16 %v508
        %v1736 = vunpack.c.h.b16 %v508
        %v1737 = vunpack.c.l.b16 %v509
        %v1738 = vunpack.c.l.b16 %v510
        %v1739 = vunpack.c.h.b16 %v510
        %v1740 = vunpack.c.l.b16 %v511
        %v1741 = vunpack.c.l.b16 %v512
        %v1742 = vunpack.c.h.b16 %v512
        %v1743 = vunpack.c.l.b16 %v513
        %v1744 = vunpack.c.l.b16 %v514
        %v1745 = vunpack.c.h.b16 %v514
        %v1746 = vunpack.c.l.b16 %v515
        %v1747 = vunpack.c.l.b16 %v516
        %v1748 = vunpack.c.h.b16 %v516
        %v1749 = vunpack.c.l.b16 %v517
        %v1750 = vunpack.c.l.b16 %v518
        %v1751 = vunpack.c.h.b16 %v518
        %v1752 = vunpack.c.l.b16 %v519
        %v1753 = vunpack.c.l.b16 %v520
        %v1754 = vunpack.c.h.b16 %v520
        %v1755 = vunpack.c.l.b16 %v521
        %v1756 = vunpack.c.l.b16 %v522
        %v1757 = vunpack.c.h.b16 %v522
        %v1758 = vunpack.c.l.b16 %v523
        %v1759 = vunpack.c.l.b16 %v524
        %v1760 = vunpack.c.h.b16 %v524
        %v1761 = vunpack.c.l.b16 %v525
        %v1762 = vunpack.c.l.b16 %v526
        %v1763 = vunpack.c.h.b16 %v526
        %v1764 = vunpack.c.l.b16 %v527
        %v1765 = vunpack.c.l.b16 %v528
        %v1766 = vunpack.c.h.b16 %v528
        %v1767 = vunpack.c.l.b16 %v529
        %v1768 = vunpack.c.l.b16 %v530
        %v1769 = vunpack.c.h.b16 %v530
        %v1770 = vunpack.c.l.b16 %v531
        %v1771 = vunpack.c.l.b16 %v532
        %v1772 = vunpack.c.h.b16 %v532
        %v1773 = vunpack.c.l.b16 %v533
        %v1774 = vunpack.c.l.b16 %v534
        %v1775 = vunpack.c.h.b16 %v534
        %v1776 = vunpack.c.l.b16 %v535
        %v1777 = vunpack.c.l.b16 %v536
        %v1778 = vunpack.c.h.b16 %v536
        %v1779 = vunpack.c.l.b16 %v537
        %v1780 = vunpack.c.l.b16 %v538
        %v1781 = vunpack.c.h.b16 %v538
        %v1782 = vunpack.c.l.b16 %v539
        %v1783 = vunpack.c.l.b16 %v540
        %v1784 = vunpack.c.h.b16 %v540
        %v1785 = vunpack.c.l.b16 %v541
        %v1786 = vunpack.c.l.b16 %v542
        %v1787 = vunpack.c.h.b16 %v542
        %v1788 = vunpack.c.l.b16 %v543
        %v1789 = vunpack.c.l.b16 %v544
        %v1790 = vunpack.c.h.b16 %v544
        %v1791 = vunpack.c.l.b16 %v545
        %v1792 = vunpack.c.l.b16 %v546
        %v1793 = vunpack.c.h.b16 %v546
        %v1794 = vunpack.c.l.b16 %v547
        %v1795 = vunpack.c.l.b16 %v548
        %v1796 = vunpack.c.h.b16 %v548
        %v1797 = vunpack.c.l.b16 %v549
        %v1798 = vunpack.c.l.b16 %v550
        %v1799 = vunpack.c.h.b16 %v550
        %v1800 = vunpack.c.l.b16 %v551
        %v1801 = vunpack.c.l.b16 %v552
        %v1802 = vunpack.c.h.b16 %v552
        %v1803 = vunpack.c.l.b16 %v553
        %v1804 = vunpack.c.l.b16 %v554
        %v1805 = vunpack.c.h.b16 %v554
        %v1806 = vunpack.c.l.b16 %v555
        %v1807 = vunpack.c.l.b16 %v556
        %v1808 = vunpack.c.h.b16 %v556
        %v1809 = vunpack.c.l.b16 %v557
        %v1810 = vunpack.c.l.b16 %v558
        %v1811 = vunpack.c.h.b16 %v558
        %v1812 = vunpack.c.l.b16 %v559
        %v1813 = vunpack.c.l.b16 %v560
        %v1814 = vunpack.c.h.b16 %v560
        %v1815 = vunpack.c.l.b16 %v561
        %v1816 = vunpack.c.l.b16 %v562
        %v1817 = vunpack.c.h.b16 %v562
        %v1818 = vunpack.c.l.b16 %v563
        %v1819 = vunpack.c.l.b16 %v564
        %v1820 = vunpack.c.h.b16 %v564
        %v1821 = vunpack.c.l.b16 %v565
        %v1822 = vunpack.c.l.b16 %v566
        %v1823 = vunpack.c.h.b16 %v566
        %v1824 = vunpack.c.l.b16 %v567
        %v1825 = vunpack.c.l.b16 %v568
        %v1826 = vunpack.c.h.b16 %v568
        %v1827 = vunpack.c.l.b16 %v569
        %v1828 = vunpack.c.l.b16 %v570
        %v1829 = vunpack.c.h.b16 %v570
        %v1830 = vunpack.c.l.b16 %v571
        %v1831 = vunpack.c.l.b16 %v572
        %v1832 = vunpack.c.h.b16 %v572
        %v1833 = vunpack.c.l.b16 %v573
        %v1834 = vunpack.c.l.b16 %v574
        %v1835 = vunpack.c.h.b16 %v574
        %v1836 = vunpack.c.l.b16 %v575
        %v1837 = vunpack.c.l.b16 %v576
        %v1838 = vunpack.c.h.b16 %v576
        %v1839 = vunpack.c.l.b16 %v577
        %v1840 = vunpack.c.l.b16 %v578
        %v1841 = vunpack.c.h.b16 %v578
        %v1842 = vunpack.c.l.b16 %v579
        %v1843 = vunpack.c.l.b16 %v580
        %v1844 = vunpack.c.h.b16 %v580
        %v1845 = vunpack.c.l.b16 %v581
        %v1846 = vunpack.c.l.b16 %v582
        %v1847 = vunpack.c.h.b16 %v582
        %v1848 = vunpack.c.l.b16 %v583
        %v1849 = vunpack.c.l.b16 %v584
        %v1850 = vunpack.c.h.b16 %v584
        %v1851 = vunpack.c.l.b16 %v585
        %v1852 = vunpack.c.l.b16 %v586
        %v1853 = vunpack.c.h.b16 %v586
        %v1854 = vunpack.c.l.b16 %v587
        %v1855 = vunpack.c.l.b16 %v588
        %v1856 = vunpack.c.h.b16 %v588
        %v1857 = vunpack.c.l.b16 %v589
        %v1858 = vunpack.c.l.b16 %v590
        %v1859 = vunpack.c.h.b16 %v590
        %v1860 = vunpack.c.l.b16 %v591
        %v1861 = vunpack.c.l.b16 %v592
        %v1862 = vunpack.c.h.b16 %v592
        %v1863 = vunpack.c.l.b16 %v593
        %v1864 = vunpack.c.l.b16 %v594
        %v1865 = vunpack.c.h.b16 %v594
        %v1866 = vunpack.c.l.b16 %v595
        %v1867 = vunpack.c.l.b16 %v596
        %v1868 = vunpack.c.h.b16 %v596
        %v1869 = vunpack.c.l.b16 %v597
        %v1870 = vunpack.c.l.b16 %v598
        %v1871 = vunpack.c.h.b16 %v598
        %v1872 = vunpack.c.l.b16 %v599
        %v1873 = vunpack.c.l.b16 %v600
        %v1874 = vunpack.c.h.b16 %v600
        %v1875 = vunpack.c.l.b16 %v601
        %v1876 = vunpack.c.l.b16 %v602
        %v1877 = vunpack.c.h.b16 %v602
        %v1878 = vunpack.c.l.b16 %v603
        %v1879 = vunpack.c.l.b16 %v604
        %v1880 = vunpack.c.h.b16 %v604
        %v1881 = vunpack.c.l.b16 %v605
        %v1882 = vunpack.c.l.b16 %v606
        %v1883 = vunpack.c.h.b16 %v606
        %v1884 = vunpack.c.l.b16 %v607
        %v1885 = vunpack.c.l.b16 %v608
        %v1886 = vunpack.c.h.b16 %v608
        %v1887 = vunpack.c.l.b16 %v609
        %v1888 = vunpack.c.l.b16 %v610
        %v1889 = vunpack.c.h.b16 %v610
        %v1890 = vunpack.c.l.b16 %v611
        %v1891 = vunpack.c.l.b16 %v612
        %v1892 = vunpack.c.h.b16 %v612
        %v1893 = vunpack.c.l.b16 %v613
        %v1894 = vunpack.c.l.b16 %v614
        %v1895 = vunpack.c.h.b16 %v614
        %v1896 = vunpack.c.l.b16 %v615
        %v1897 = vunpack.c.l.b16 %v616
        %v1898 = vunpack.c.h.b16 %v616
        %v1899 = vunpack.c.l.b16 %v617
        %v1900 = vunpack.c.l.b16 %v618
        %v1901 = vunpack.c.h.b16 %v618
        %v1902 = vunpack.c.l.b16 %v619
        %v1903 = vunpack.c.l.b16 %v620
        %v1904 = vunpack.c.h.b16 %v620
        %v1905 = vunpack.c.l.b16 %v621
        %v1906 = vunpack.c.l.b16 %v622
        %v1907 = vunpack.c.h.b16 %v622
        %v1908 = vunpack.c.l.b16 %v623
        %v1909 = vunpack.c.l.b16 %v624
        %v1910 = vunpack.c.h.b16 %v624
        %v1911 = vunpack.c.l.b16 %v625
        %v1912 = vunpack.c.l.b16 %v626
        %v1913 = vunpack.c.h.b16 %v626
        %v1914 = vunpack.c.l.b16 %v627
        %v1915 = vunpack.c.l.b16 %v628
        %v1916 = vunpack.c.h.b16 %v628
        %v1917 = vunpack.c.l.b16 %v629
        %v1918 = vunpack.c.l.b16 %v630
        %v1919 = vunpack.c.h.b16 %v630
        %v1920 = vunpack.c.l.b16 %v631
        %v1921 = vunpack.c.l.b16 %v632
        %v1922 = vunpack.c.h.b16 %v632
        %v1923 = vunpack.c.l.b16 %v633
        %v1924 = vunpack.c.l.b16 %v634
        %v1925 = vunpack.c.h.b16 %v634
        %v1926 = vunpack.c.l.b16 %v635
        %v1927 = vunpack.c.l.b16 %v636
        %v1928 = vunpack.c.h.b16 %v636
        %v1929 = vunpack.c.l.b16 %v637
        %v1930 = vunpack.c.l.b16 %v638
        %v1931 = vunpack.c.h.b16 %v638
        %v1932 = vunpack.c.l.b16 %v639
        %v1933 = vunpack.c.l.b16 %v640
        %v1934 = vunpack.c.h.b16 %v640
        %v1935 = vunpack.c.l.b16 %v641
        %v1936 = vunpack.c.l.b16 %v642
        %v1937 = vunpack.c.h.b16 %v642
        %v1938 = vunpack.c.l.b16 %v643
        %v1939 = vunpack.c.l.b16 %v644
        %v1940 = vunpack.c.h.b16 %v644
        %v1941 = vunpack.c.l.b16 %v645
        %v1942 = vunpack.c.l.b16 %v646
        %v1943 = vunpack.c.h.b16 %v646
        %v1944 = vunpack.c.l.b16 %v647
        %v1945 = vunpack.c.l.b16 %v648
        %v1946 = vunpack.c.h.b16 %v648
        %v1947 = vunpack.c.l.b16 %v649
        %v1948 = vunpack.c.l.b16 %v650
        %v1949 = vunpack.c.h.b16 %v650
        %v1950 = vunpack.c.l.b16 %v651
        %v1951 = vunpack.c.l.b16 %v652
        %v1952 = vunpack.c.h.b16 %v652
        %v1953 = vunpack.c.l.b16 %v653
        %v1954 = vunpack.c.l.b16 %v654
        %v1955 = vunpack.c.h.b16 %v654
        %v1956 = vunpack.c.l.b16 %v655
        %v1957 = vunpack.c.l.b16 %v656
        %v1958 = vunpack.c.h.b16 %v656
        %v1959 = vunpack.c.l.b16 %v657
        %v1960 = vunpack.c.l.b16 %v658
        %v1961 = vunpack.c.h.b16 %v658
        %v1962 = vunpack.c.l.b16 %v659
        %v1963 = vunpack.c.l.b16 %v660
        %v1964 = vunpack.c.h.b16 %v660
        %v1965 = vunpack.c.l.b16 %v661
        %v1966 = vunpack.c.l.b16 %v662
        %v1967 = vunpack.c.h.b16 %v662
        %v1968 = vunpack.c.l.b16 %v663
        %v1969 = vunpack.c.l.b16 %v664
        %v1970 = vunpack.c.h.b16 %v664
        %v1971 = vunpack.c.l.b16 %v665
        %v1972 = vunpack.c.l.b16 %v666
        %v1973 = vunpack.c.h.b16 %v666
        %v1974 = vunpack.c.l.b16 %v667
        %v1975 = vunpack.c.l.b16 %v668
        %v1976 = vunpack.c.h.b16 %v668
        %v1977 = vunpack.c.l.b16 %v669
        %v1978 = vunpack.c.l.b16 %v670
        %v1979 = vunpack.c.h.b16 %v670
        %v1980 = vunpack.c.l.b16 %v671
        %v1981 = vunpack.c.l.b16 %v672
        %v1982 = vunpack.c.h.b16 %v672
        %v1983 = vunpack.c.l.b16 %v673
        %v1984 = vunpack.c.l.b16 %v674
        %v1985 = vunpack.c.h.b16 %v674
        %v1986 = vunpack.c.l.b16 %v675
        %v1987 = vunpack.c.l.b16 %v676
        %v1988 = vunpack.c.h.b16 %v676
        %v1989 = vunpack.c.l.b16 %v677
        %v1990 = vunpack.c.l.b16 %v678
        %v1991 = vunpack.c.h.b16 %v678
        %v1992 = vunpack.c.l.b16 %v679
        %v1993 = vunpack.c.l.b16 %v680
        %v1994 = vunpack.c.h.b16 %v680
        %v1995 = vunpack.c.l.b16 %v681
        %v1996 = vunpack.c.l.b16 %v682
        %v1997 = vunpack.c.h.b16 %v682
        %v1998 = vunpack.c.l.b16 %v683
        %v1999 = vunpack.c.l.b16 %v684
        %v2000 = vunpack.c.h.b16 %v684
        %v2001 = vunpack.c.l.b16 %v685
        %v2002 = vunpack.c.l.b16 %v686
        %v2003 = vunpack.c.h.b16 %v686
        %v2004 = vunpack.c.l.b16 %v687
        %v2005 = vunpack.c.l.b16 %v688
        %v2006 = vunpack.c.h.b16 %v688
        %v2007 = vunpack.c.l.b16 %v689
        %v2008 = vunpack.c.l.b16 %v690
        %v2009 = vunpack.c.h.b16 %v690
        %v2010 = vunpack.c.l.b16 %v691
        %v2011 = vunpack.c.l.b16 %v692
        %v2012 = vunpack.c.h.b16 %v692
        %v2013 = vunpack.c.l.b16 %v693
        %v2014 = vunpack.c.l.b16 %v694
        %v2015 = vunpack.c.h.b16 %v694
        %v2016 = vunpack.c.l.b16 %v695
        %v2017 = vunpack.c.l.b16 %v696
        %v2018 = vunpack.c.h.b16 %v696
        %v2019 = vunpack.c.l.b16 %v697
        %v2020 = vunpack.c.l.b16 %v698
        %v2021 = vunpack.c.h.b16 %v698
        %v2022 = vunpack.c.l.b16 %v699
        %v2023 = vunpack.c.l.b16 %v700
        %v2024 = vunpack.c.h.b16 %v700
        %v2025 = vunpack.c.l.b16 %v701
        %v2026 = vunpack.c.l.b16 %v702
        %v2027 = vunpack.c.h.b16 %v702
        %v2028 = vunpack.c.l.b16 %v703
        %v2029 = vunpack.c.l.b16 %v704
        %v2030 = vunpack.c.h.b16 %v704
        %v2031 = vunpack.c.l.b16 %v705
        %v2032 = vunpack.c.l.b16 %v706
        %v2033 = vunpack.c.h.b16 %v706
        %v2034 = vunpack.c.l.b16 %v707
        %v2035 = vunpack.c.l.b16 %v708
        %v2036 = vunpack.c.h.b16 %v708
        %v2037 = vunpack.c.l.b16 %v709
        %v2038 = vunpack.c.l.b16 %v710
        %v2039 = vunpack.c.h.b16 %v710
        %v2040 = vunpack.c.l.b16 %v711
        %v2041 = vunpack.c.l.b16 %v712
        %v2042 = vunpack.c.h.b16 %v712
        %v2043 = vunpack.c.l.b16 %v713
        %v2044 = vunpack.c.l.b16 %v714
        %v2045 = vunpack.c.h.b16 %v714
        %v2046 = vunpack.c.l.b16 %v715
        %v2047 = vunpack.c.l.b16 %v716
        %v2048 = vunpack.c.h.b16 %v716
        %v2049 = vunpack.c.l.b16 %v717
        %v2050 = vunpack.c.l.b16 %v718
        %v2051 = vunpack.c.h.b16 %v718
        %v2052 = vunpack.c.l.b16 %v719
        %v2053 = vunpack.c.l.b16 %v720
        %v2054 = vunpack.c.h.b16 %v720
        %v2055 = vunpack.c.l.b16 %v721
        %v2056 = vunpack.c.l.b16 %v722
        %v2057 = vunpack.c.h.b16 %v722
        %v2058 = vunpack.c.l.b16 %v723
        %v2059 = vunpack.c.l.b16 %v724
        %v2060 = vunpack.c.h.b16 %v724
        %v2061 = vunpack.c.l.b16 %v725
        %v2062 = vunpack.c.l.b16 %v726
        %v2063 = vunpack.c.h.b16 %v726
        %v2064 = vunpack.c.l.b16 %v727
        %v2065 = vunpack.c.l.b16 %v728
        %v2066 = vunpack.c.h.b16 %v728
        %v2067 = vunpack.c.l.b16 %v729
        %v2068 = vunpack.c.l.b16 %v730
        %v2069 = vunpack.c.h.b16 %v730
        %v2070 = vunpack.c.l.b16 %v731
        %v2071 = vunpack.c.l.b16 %v732
        %v2072 = vunpack.c.h.b16 %v732
        %v2073 = vunpack.c.l.b16 %v733
        %v2074 = vunpack.c.l.b16 %v734
        %v2075 = vunpack.c.h.b16 %v734
        %v2076 = vunpack.c.l.b16 %v735
        %v2077 = vunpack.c.l.b16 %v736
        %v2078 = vunpack.c.h.b16 %v736
        %v2079 = vunpack.c.l.b16 %v737
        %v2080 = vunpack.c.l.b16 %v738
        %v2081 = vunpack.c.h.b16 %v738
        %v2082 = vunpack.c.l.b16 %v739
        %v2083 = vunpack.c.l.b16 %v740
        %v2084 = vunpack.c.h.b16 %v740
        %v2085 = vunpack.c.l.b16 %v741
        %v2086 = vunpack.c.l.b16 %v742
        %v2087 = vunpack.c.h.b16 %v742
        %v2088 = vunpack.c.l.b16 %v743
        %v2089 = vunpack.c.l.b16 %v744
        %v2090 = vunpack.c.h.b16 %v744
        %v2091 = vunpack.c.l.b16 %v745
        %v2092 = vunpack.c.l.b16 %v746
        %v2093 = vunpack.c.h.b16 %v746
        %v2094 = vunpack.c.l.b16 %v747
        %v2095 = vunpack.c.l.b16 %v748
        %v2096 = vunpack.c.h.b16 %v748
        %v2097 = vunpack.c.l.b16 %v749
        %v2098 = vunpack.c.l.b16 %v750
        %v2099 = vunpack.c.h.b16 %v750
        %v2100 = vunpack.c.l.b16 %v751
        %v2101 = vunpack.c.l.b16 %v752
        %v2102 = vunpack.c.h.b16 %v752
        %v2103 = vunpack.c.l.b16 %v753
        %v2104 = vunpack.c.l.b16 %v754
        %v2105 = vunpack.c.h.b16 %v754
        %v2106 = vunpack.c.l.b16 %v755
        %v2107 = vunpack.c.l.b16 %v756
        %v2108 = vunpack.c.h.b16 %v756
        %v2109 = vunpack.c.l.b16 %v757
        %v2110 = vunpack.c.l.b16 %v758
        %v2111 = vunpack.c.h.b16 %v758
        %v2112 = vunpack.c.l.b16 %v759
        %v2113 = vunpack.c.l.b16 %v760
        %v2114 = vunpack.c.h.b16 %v760
        %v2115 = vunpack.c.l.b16 %v761
        %v2116 = vunpack.c.l.b16 %v762
        %v2117 = vunpack.c.h.b16 %v762
        %v2118 = vunpack.c.l.b16 %v763
        %v2119 = vunpack.c.l.b16 %v764
        %v2120 = vunpack.c.h.b16 %v764
        %v2121 = vunpack.c.l.b16 %v765
        %v2122 = vunpack.c.l.b16 %v766
        %v2123 = vunpack.c.h.b16 %v766
        %v2124 = vunpack.c.l.b16 %v767
        %v2125 = vunpack.c.l.b16 %v768
        %v2126 = vunpack.c.h.b16 %v768
        %v2127 = vunpack.c.l.b16 %v769
        %v2128 = vunpack.c.l.b16 %v770
        %v2129 = vunpack.c.h.b16 %v770
        %v2130 = vunpack.c.l.b16 %v771
        %v2131 = vunpack.c.l.b16 %v772
        %v2132 = vunpack.c.h.b16 %v772
        %v2133 = vunpack.c.l.b16 %v773
        %v2134 = vunpack.c.l.b16 %v774
        %v2135 = vunpack.c.h.b16 %v774
        %v2136 = vunpack.c.l.b16 %v775
        %v2137 = vunpack.c.l.b16 %v776
        %v2138 = vunpack.c.h.b16 %v776
        %v2139 = vunpack.c.l.b16 %v777
        %v2140 = vunpack.c.l.b16 %v778
        %v2141 = vunpack.c.h.b16 %v778
        %v2142 = vunpack.c.l.b16 %v779
        %v2143 = vunpack.c.l.b16 %v780
        %v2144 = vunpack.c.h.b16 %v780
        %v2145 = vunpack.c.l.b16 %v781
        %v2146 = vunpack.c.l.b16 %v782
        %v2147 = vunpack.c.h.b16 %v782
        %v2148 = vunpack.c.l.b16 %v783
        %v2149 = vunpack.c.l.b16 %v784
        %v2150 = vunpack.c.h.b16 %v784
        %v2151 = vunpack.c.l.b16 %v785
        %v2152 = vunpack.c.l.b16 %v786
        %v2153 = vunpack.c.h.b16 %v786
        %v2154 = vunpack.c.l.b16 %v787
        %v2155 = vunpack.c.l.b16 %v788
        %v2156 = vunpack.c.h.b16 %v788
        %v2157 = vunpack.c.l.b16 %v789
        %v2158 = vunpack.c.l.b16 %v790
        %v2159 = vunpack.c.h.b16 %v790
        %v2160 = vunpack.c.l.b16 %v791
        %v2161 = vunpack.c.l.b16 %v792
        %v2162 = vunpack.c.h.b16 %v792
        %v2163 = vunpack.c.l.b16 %v793
        %v2164 = vunpack.c.l.b16 %v794
        %v2165 = vunpack.c.h.b16 %v794
        %v2166 = vunpack.c.l.b16 %v795
        %v2167 = vunpack.c.l.b16 %v796
        %v2168 = vunpack.c.h.b16 %v796
        %v2169 = vunpack.c.l.b16 %v797
        %v2170 = vunpack.c.l.b16 %v798
        %v2171 = vunpack.c.h.b16 %v798
        %v2172 = vunpack.c.l.b16 %v799
        %v2173 = vunpack.c.l.b16 %v800
        %v2174 = vunpack.c.h.b16 %v800
        %v2175 = vunpack.c.l.b16 %v801
        %v2176 = vunpack.c.l.b16 %v802
        %v2177 = vunpack.c.h.b16 %v802
        %v2178 = vunpack.c.l.b16 %v803
        %v2179 = vunpack.c.l.b16 %v804
        %v2180 = vunpack.c.h.b16 %v804
        %v2181 = vunpack.c.l.b16 %v805
        %v2182 = vunpack.c.l.b16 %v806
        %v2183 = vunpack.c.h.b16 %v806
        %v2184 = vunpack.c.l.b16 %v807
        %v2185 = vunpack.c.l.b16 %v808
        %v2186 = vunpack.c.h.b16 %v808
        %v2187 = vunpack.c.l.b16 %v809
        %v2188 = vunpack.c.l.b16 %v810
        %v2189 = vunpack.c.h.b16 %v810
        %v2190 = vunpack.c.l.b16 %v811
        %v2191 = vunpack.c.l.b16 %v812
        %v2192 = vunpack.c.h.b16 %v812
        %v2193 = vunpack.c.l.b16 %v813
        %v2194 = vunpack.c.l.b16 %v814
        %v2195 = vunpack.c.h.b16 %v814
        %v2196 = vunpack.c.l.b16 %v815
        %v2197 = vunpack.c.l.b16 %v816
        %v2198 = vunpack.c.h.b16 %v816
        %v2199 = vunpack.c.l.b16 %v817
        %v2200 = vunpack.c.l.b16 %v818
        %v2201 = vunpack.c.h.b16 %v818
        %v2202 = vunpack.c.l.b16 %v819
        %v2203 = vunpack.c.l.b16 %v820
        %v2204 = vunpack.c.h.b16 %v820
        %v2205 = vunpack.c.l.b16 %v821
        %v2206 = vunpack.c.l.b16 %v822
        %v2207 = vunpack.c.h.b16 %v822
        %v2208 = vunpack.c.l.b16 %v823
        %v2209 = vunpack.c.l.b16 %v824
        %v2210 = vunpack.c.h.b16 %v824
        %v2211 = vunpack.c.l.b16 %v825
        %v2212 = vunpack.c.l.b16 %v826
        %v2213 = vunpack.c.h.b16 %v826
        %v2214 = vunpack.c.l.b16 %v827
        %v2215 = vunpack.c.l.b16 %v828
        %v2216 = vunpack.c.h.b16 %v828
        %v2217 = vunpack.c.l.b16 %v829
        %v2218 = vunpack.c.l.b16 %v830
        %v2219 = vunpack.c.h.b16 %v830
        %v2220 = vunpack.c.l.b16 %v831
        %v2221 = vunpack.c.l.b16 %v832
        %v2222 = vunpack.c.h.b16 %v832
        %v2223 = vunpack.c.l.b16 %v833
        %v2224 = vunpack.c.l.b16 %v834
        %v2225 = vunpack.c.h.b16 %v834
        %v2226 = vunpack.c.l.b16 %v835
        %v2227 = vunpack.c.l.b16 %v836
        %v2228 = vunpack.c.h.b16 %v836
        %v2229 = vunpack.c.l.b16 %v837
        %v2230 = vunpack.c.l.b16 %v838
        %v2231 = vunpack.c.h.b16 %v838
        %v2232 = vunpack.c.l.b16 %v839
        %v2233 = vunpack.c.l.b16 %v840
        %v2234 = vunpack.c.h.b16 %v840
        %v2235 = vunpack.c.l.b16 %v841
        %v2236 = vunpack.c.l.b16 %v842
        %v2237 = vunpack.c.h.b16 %v842
        %v2238 = vunpack.c.l.b16 %v843
        %v2239 = vunpack.c.l.b16 %v844
        %v2240 = vunpack.c.h.b16 %v844
        %v2241 = vunpack.c.l.b16 %v845
        %v2242 = vunpack.c.l.b16 %v846
        %v2243 = vunpack.c.h.b16 %v846
        %v2244 = vunpack.c.l.b16 %v847
        %v2245 = vunpack.c.l.b16 %v848
        %v2246 = vunpack.c.h.b16 %v848
        %v2247 = vunpack.c.l.b16 %v849
        %v2248 = vunpack.c.l.b16 %v850
        %v2249 = vunpack.c.h.b16 %v850
        %v2250 = vunpack.c.l.b16 %v851
        %v2251 = vunpack.c.l.b16 %v852
        %v2252 = vunpack.c.h.b16 %v852
        %v2253 = vunpack.c.l.b16 %v853
        %v2254 = vunpack.c.l.b16 %v854
        %v2255 = vunpack.c.h.b16 %v854
        %v2256 = vunpack.c.l.b16 %v855
        %v2257 = vunpack.c.l.b16 %v856
        %v2258 = vunpack.c.h.b16 %v856
        %v2259 = vunpack.c.l.b16 %v857
        %v2260 = vunpack.c.l.b16 %v858
        %v2261 = vunpack.c.h.b16 %v858
        %v2262 = vunpack.c.l.b16 %v859
        %v2263 = vunpack.c.l.b16 %v860
        %v2264 = vunpack.c.h.b16 %v860
        %v2265 = vunpack.c.l.b16 %v861
        %v2266 = vunpack.c.l.b16 %v862
        %v2267 = vunpack.c.h.b16 %v862
        %v2268 = vunpack.c.l.b16 %v863
        %v2269 = vunpack.c.l.b16 %v864
        %v2270 = vunpack.c.h.b16 %v864
        %v2271 = vunpack.c.l.b16 %v865
        %v2272 = vunpack.c.l.b16 %v866
        %v2273 = vunpack.c.h.b16 %v866
        %v2274 = vunpack.c.l.b16 %v867
        %v2275 = vunpack.c.l.b16 %v868
        %v2276 = vunpack.c.h.b16 %v868
        %v2277 = vunpack.c.l.b16 %v869
        %v2278 = vunpack.c.l.b16 %v870
        %v2279 = vunpack.c.h.b16 %v870
        %v2280 = vunpack.c.l.b16 %v871
        %v2281 = vunpack.c.l.b16 %v872
        %v2282 = vunpack.c.h.b16 %v872
        %v2283 = vunpack.c.l.b16 %v873
        %v2284 = vunpack.c.l.b16 %v874
        %v2285 = vunpack.c.h.b16 %v874
        %v2286 = vunpack.c.l.b16 %v875
        %v2287 = vunpack.c.l.b16 %v876
        %v2288 = vunpack.c.h.b16 %v876
        %v2289 = vunpack.c.l.b16 %v877
        %v2290 = vunpack.c.l.b16 %v878
        %v2291 = vunpack.c.h.b16 %v878
        %v2292 = vunpack.c.l.b16 %v879
        %v2293 = vunpack.c.l.b16 %v880
        %v2294 = vunpack.c.h.b16 %v880
        %v2295 = vunpack.c.l.b16 %v881
        %v2296 = vunpack.c.l.b16 %v882
        %v2297 = vunpack.c.h.b16 %v882
        %v2298 = vunpack.c.l.b16 %v883
        %v2299 = vunpack.c.l.b16 %v884
        %v2300 = vunpack.c.h.b16 %v884
        %v2301 = vunpack.c.l.b16 %v885
        %v2302 = vunpack.c.l.b16 %v886
        %v2303 = vunpack.c.h.b16 %v886
        %v2304 = vunpack.c.l.b16 %v887
        %v2305 = vunpack.c.l.b16 %v888
        %v2306 = vunpack.c.h.b16 %v888
        %v2307 = vunpack.c.l.b16 %v889
        %v2308 = vunpack.c.l.b16 %v890
        %v2309 = vunpack.c.h.b16 %v890
        %v2310 = vunpack.c.l.b16 %v891
        %v2311 = vunpack.c.l.b16 %v892
        %v2312 = vunpack.c.h.b16 %v892
        %v2313 = vunpack.c.l.b16 %v893
        %v2314 = vunpack.c.l.b16 %v894
        %v2315 = vunpack.c.h.b16 %v894
        %v2316 = vunpack.c.l.b16 %v895
        %v2317 = vunpack.c.l.b16 %v896
        %v2318 = vunpack.c.h.b16 %v896
        %v2319 = vunpack.c.l.b16 %v897
        %v2320 = vunpack.c.l.b16 %v898
        %v2321 = vunpack.c.h.b16 %v898
        %v2322 = vunpack.c.l.b16 %v899
        %v2323 = vunpack.c.l.b16 %v900
        %v2324 = vunpack.c.h.b16 %v900
        %v2325 = vunpack.c.l.b16 %v901
        %v2326 = vunpack.c.l.b16 %v902
        %v2327 = vunpack.c.h.b16 %v902
        %v2328 = vunpack.c.l.b16 %v903
        %v2329 = vunpack.c.l.b16 %v904
        %v2330 = vunpack.c.h.b16 %v904
        %v2331 = vunpack.c.l.b16 %v905
        %v2332 = vunpack.c.l.b16 %v906
        %v2333 = vunpack.c.h.b16 %v906
        %v2334 = vunpack.c.l.b16 %v907
        %v2335 = vunpack.c.l.b16 %v908
        %v2336 = vunpack.c.h.b16 %v908
        %v2337 = vunpack.c.l.b16 %v909
        %v2338 = vunpack.c.l.b16 %v910
        %v2339 = vunpack.c.h.b16 %v910
        %v2340 = vunpack.c.l.b16 %v911
        %v2341 = vunpack.c.l.b16 %v912
        %v2342 = vunpack.c.h.b16 %v912
        %v2343 = vunpack.c.l.b16 %v913
        %v2344 = vunpack.c.l.b16 %v914
        %v2345 = vunpack.c.h.b16 %v914
        %v2346 = vunpack.c.l.b16 %v915
        %v2347 = vunpack.c.l.b16 %v916
        %v2348 = vunpack.c.h.b16 %v916
        %v2349 = vunpack.c.l.b16 %v917
        %v2350 = vunpack.c.l.b16 %v918
        %v2351 = vunpack.c.h.b16 %v918
        %v2352 = vunpack.c.l.b16 %v919
        %v2353 = vunpack.c.l.b16 %v920
        %v2354 = vunpack.c.h.b16 %v920
        %v2355 = vunpack.c.l.b16 %v921
        %v2356 = vunpack.c.l.b16 %v922
        %v2357 = vunpack.c.h.b16 %v922
        %v2358 = vunpack.c.l.b16 %v923
        %v2359 = vunpack.c.l.b16 %v924
        %v2360 = vunpack.c.h.b16 %v924
        %v2361 = vunpack.c.l.b16 %v925
        %v2362 = vunpack.c.l.b16 %v926
        %v2363 = vunpack.c.h.b16 %v926
        %v2364 = vunpack.c.l.b16 %v927
        %v2365 = vunpack.c.l.b16 %v928
        %v2366 = vunpack.c.h.b16 %v928
        %v2367 = vunpack.c.l.b16 %v929
        %v2368 = vunpack.c.l.b16 %v930
        %v2369 = vunpack.c.h.b16 %v930
        %v2370 = vunpack.c.l.b16 %v931
        %v2371 = vunpack.c.l.b16 %v932
        %v2372 = vunpack.c.h.b16 %v932
        %v2373 = vunpack.c.l.b16 %v933
        %v2374 = vunpack.c.l.b16 %v934
        %v2375 = vunpack.c.h.b16 %v934
        %v2376 = vunpack.c.l.b16 %v935
        %v2377 = vunpack.c.l.b16 %v936
        %v2378 = vunpack.c.h.b16 %v936
        %v2379 = vunpack.c.l.b16 %v937
        %v2380 = vunpack.c.l.b16 %v938
        %v2381 = vunpack.c.h.b16 %v938
        %v2382 = vunpack.c.l.b16 %v939
        %v2383 = vunpack.c.l.b16 %v940
        %v2384 = vunpack.c.h.b16 %v940
        %v2385 = vunpack.c.l.b16 %v941
        %v2386 = vunpack.c.l.b16 %v942
        %v2387 = vunpack.c.h.b16 %v942
        %v2388 = vunpack.c.l.b16 %v943
        %v2389 = vunpack.c.l.b16 %v944
        %v2390 = vunpack.c.h.b16 %v944
        %v2391 = vunpack.c.l.b16 %v945
        %v2392 = vunpack.c.l.b16 %v946
        %v2393 = vunpack.c.h.b16 %v946
        %v2394 = vunpack.c.l.b16 %v947
        %v2395 = vunpack.c.l.b16 %v948
        %v2396 = vunpack.c.h.b16 %v948
        %v2397 = vunpack.c.l.b16 %v949
        %v2398 = vunpack.c.l.b16 %v950
        %v2399 = vunpack.c.h.b16 %v950
        %v2400 = vunpack.c.l.b16 %v951
        %v2401 = vunpack.c.l.b16 %v952
        %v2402 = vunpack.c.h.b16 %v952
        %v2403 = vunpack.c.l.b16 %v953
        %v2404 = vunpack.c.l.b16 %v954
        %v2405 = vunpack.c.h.b16 %v954
        %v2406 = vunpack.c.l.b16 %v955
        %v2407 = vunpack.c.l.b16 %v956
        %v2408 = vunpack.c.h.b16 %v956
        %v2409 = vunpack.c.l.b16 %v957
        %v2410 = vunpack.c.l.b16 %v958
        %v2411 = vunpack.c.h.b16 %v958
        %v2412 = vunpack.c.l.b16 %v959
        %v2413 = vunpack.c.l.b16 %v960
        %v2414 = vunpack.c.h.b16 %v960
        %v2415 = vunpack.c.l.b16 %v961
        %v2416 = vunpack.c.l.b16 %v962
        %v2417 = vunpack.c.h.b16 %v962
        %v2418 = vunpack.c.l.b16 %v963
        %v2419 = vunpack.c.l.b16 %v964
        %v2420 = vunpack.c.h.b16 %v964
        %v2421 = vunpack.c.l.b16 %v965
        %v2422 = vunpack.c.l.b16 %v966
        %v2423 = vunpack.c.h.b16 %v966
        %v2424 = vunpack.c.l.b16 %v967
        %v2425 = vpack.c.b16 %v1564, %v1561
        %v2426 = vpack.c.b16 %v1565, %v1562
        %v2427 = vpack.c.b16 %v1566, %v1563
        %v2428 = vpack.c.b16 %v1570, %v1567
        %v2429 = vpack.c.b16 %v1571, %v1568
        %v2430 = vpack.c.b16 %v1572, %v1569
        %v2431 = vpack.c.b16 %v1576, %v1573
        %v2432 = vpack.c.b16 %v1577, %v1574
        %v2433 = vpack.c.b16 %v1578, %v1575
        %v2434 = vpack.c.b16 %v1582, %v1579
        %v2435 = vpack.c.b16 %v1583, %v1580
        %v2436 = vpack.c.b16 %v1584, %v1581
        %v2437 = vpack.c.b16 %v1588, %v1585
        %v2438 = vpack.c.b16 %v1589, %v1586
        %v2439 = vpack.c.b16 %v1590, %v1587
        %v2440 = vpack.c.b16 %v1594, %v1591
        %v2441 = vpack.c.b16 %v1595, %v1592
        %v2442 = vpack.c.b16 %v1596, %v1593
        %v2443 = vpack.c.b16 %v1600, %v1597
        %v2444 = vpack.c.b16 %v1601, %v1598
        %v2445 = vpack.c.b16 %v1602, %v1599
        %v2446 = vpack.c.b16 %v1606, %v1603
        %v2447 = vpack.c.b16 %v1607, %v1604
        %v2448 = vpack.c.b16 %v1608, %v1605
        %v2449 = vpack.c.b16 %v1612, %v1609
        %v2450 = vpack.c.b16 %v1613, %v1610
        %v2451 = vpack.c.b16 %v1614, %v1611
        %v2452 = vpack.c.b16 %v1618, %v1615
        %v2453 = vpack.c.b16 %v1619, %v1616
        %v2454 = vpack.c.b16 %v1620, %v1617
        %v2455 = vpack.c.b16 %v1624, %v1621
        %v2456 = vpack.c.b16 %v1625, %v1622
        %v2457 = vpack.c.b16 %v1626, %v1623
        %v2458 = vpack.c.b16 %v1630, %v1627
        %v2459 = vpack.c.b16 %v1631, %v1628
        %v2460 = vpack.c.b16 %v1632, %v1629
        %v2461 = vpack.c.b16 %v1636, %v1633
        %v2462 = vpack.c.b16 %v1637, %v1634
        %v2463 = vpack.c.b16 %v1638, %v1635
        %v2464 = vpack.c.b16 %v1642, %v1639
        %v2465 = vpack.c.b16 %v1643, %v1640
        %v2466 = vpack.c.b16 %v1644, %v1641
        %v2467 = vpack.c.b16 %v1648, %v1645
        %v2468 = vpack.c.b16 %v1649, %v1646
        %v2469 = vpack.c.b16 %v1650, %v1647
        %v2470 = vpack.c.b16 %v1654, %v1651
        %v2471 = vpack.c.b16 %v1655, %v1652
        %v2472 = vpack.c.b16 %v1656, %v1653
        %v2473 = vpack.c.b16 %v1660, %v1657
        %v2474 = vpack.c.b16 %v1661, %v1658
        %v2475 = vpack.c.b16 %v1662, %v1659
        %v2476 = vpack.c.b16 %v1666, %v1663
        %v2477 = vpack.c.b16 %v1667, %v1664
        %v2478 = vpack.c.b16 %v1668, %v1665
        %v2479 = vpack.c.b16 %v1672, %v1669
        %v2480 = vpack.c.b16 %v1673, %v1670
        %v2481 = vpack.c.b16 %v1674, %v1671
        %v2482 = vpack.c.b16 %v1678, %v1675
        %v2483 = vpack.c.b16 %v1679, %v1676
        %v2484 = vpack.c.b16 %v1680, %v1677
        %v2485 = vpack.c.b16 %v1684, %v1681
        %v2486 = vpack.c.b16 %v1685, %v1682
        %v2487 = vpack.c.b16 %v1686, %v1683
        %v2488 = vpack.c.b16 %v1690, %v1687
        %v2489 = vpack.c.b16 %v1691, %v1688
        %v2490 = vpack.c.b16 %v1692, %v1689
        %v2491 = vpack.c.b16 %v1696, %v1693
        %v2492 = vpack.c.b16 %v1697, %v1694
        %v2493 = vpack.c.b16 %v1698, %v1695
        %v2494 = vpack.c.b16 %v1702, %v1699
        %v2495 = vpack.c.b16 %v1703, %v1700
        %v2496 = vpack.c.b16 %v1704, %v1701
        %v2497 = vpack.c.b16 %v1708, %v1705
        %v2498 = vpack.c.b16 %v1709, %v1706
        %v2499 = vpack.c.b16 %v1710, %v1707
        %v2500 = vpack.c.b16 %v1714, %v1711
        %v2501 = vpack.c.b16 %v1715, %v1712
        %v2502 = vpack.c.b16 %v1716, %v1713
        %v2503 = vpack.c.b16 %v1720, %v1717
        %v2504 = vpack.c.b16 %v1721, %v1718
        %v2505 = vpack.c.b16 %v1722, %v1719
        %v2506 = vpack.c.b16 %v1726, %v1723
        %v2507 = vpack.c.b16 %v1727, %v1724
        %v2508 = vpack.c.b16 %v1728, %v1725
        %v2509 = vpack.c.b16 %v1732, %v1729
        %v2510 = vpack.c.b16 %v1733, %v1730
        %v2511 = vpack.c.b16 %v1734, %v1731
        %v2512 = vpack.c.b16 %v1738, %v1735
        %v2513 = vpack.c.b16 %v1739, %v1736
        %v2514 = vpack.c.b16 %v1740, %v1737
        %v2515 = vpack.c.b16 %v1744, %v1741
        %v2516 = vpack.c.b16 %v1745, %v1742
        %v2517 = vpack.c.b16 %v1746, %v1743
        %v2518 = vpack.c.b16 %v1750, %v1747
        %v2519 = vpack.c.b16 %v1751, %v1748
        %v2520 = vpack.c.b16 %v1752, %v1749
        %v2521 = vpack.c.b16 %v1756, %v1753
        %v2522 = vpack.c.b16 %v1757, %v1754
        %v2523 = vpack.c.b16 %v1758, %v1755
        %v2524 = vpack.c.b16 %v1762, %v1759
        %v2525 = vpack.c.b16 %v1763, %v1760
        %v2526 = vpack.c.b16 %v1764, %v1761
        %v2527 = vpack.c.b16 %v1768, %v1765
        %v2528 = vpack.c.b16 %v1769, %v1766
        %v2529 = vpack.c.b16 %v1770, %v1767
        %v2530 = vpack.c.b16 %v1774, %v1771
        %v2531 = vpack.c.b16 %v1775, %v1772
        %v2532 = vpack.c.b16 %v1776, %v1773
        %v2533 = vpack.c.b16 %v1780, %v1777
        %v2534 = vpack.c.b16 %v1781, %v1778
        %v2535 = vpack.c.b16 %v1782, %v1779
        %v2536 = vpack.c.b16 %v1786, %v1783
        %v2537 = vpack.c.b16 %v1787, %v1784
        %v2538 = vpack.c.b16 %v1788, %v1785
        %v2539 = vpack.c.b16 %v1792, %v1789
        %v2540 = vpack.c.b16 %v1793, %v1790
        %v2541 = vpack.c.b16 %v1794, %v1791
        %v2542 = vpack.c.b16 %v1798, %v1795
        %v2543 = vpack.c.b16 %v1799, %v1796
        %v2544 = vpack.c.b16 %v1800, %v1797
        %v2545 = vpack.c.b16 %v1804, %v1801
        %v2546 = vpack.c.b16 %v1805, %v1802
        %v2547 = vpack.c.b16 %v1806, %v1803
        %v2548 = vpack.c.b16 %v1810, %v1807
        %v2549 = vpack.c.b16 %v1811, %v1808
        %v2550 = vpack.c.b16 %v1812, %v1809
        %v2551 = vpack.c.b16 %v1816, %v1813
        %v2552 = vpack.c.b16 %v1817, %v1814
        %v2553 = vpack.c.b16 %v1818, %v1815
        %v2554 = vpack.c.b16 %v1822, %v1819
        %v2555 = vpack.c.b16 %v1823, %v1820
        %v2556 = vpack.c.b16 %v1824, %v1821
        %v2557 = vpack.c.b16 %v1828, %v1825
        %v2558 = vpack.c.b16 %v1829, %v1826
        %v2559 = vpack.c.b16 %v1830, %v1827
        %v2560 = vpack.c.b16 %v1834, %v1831
        %v2561 = vpack.c.b16 %v1835, %v1832
        %v2562 = vpack.c.b16 %v1836, %v1833
        %v2563 = vpack.c.b16 %v1840, %v1837
        %v2564 = vpack.c.b16 %v1841, %v1838
        %v2565 = vpack.c.b16 %v1842, %v1839
        %v2566 = vpack.c.b16 %v1846, %v1843
        %v2567 = vpack.c.b16 %v1847, %v1844
        %v2568 = vpack.c.b16 %v1848, %v1845
        %v2569 = vpack.c.b16 %v1852, %v1849
        %v2570 = vpack.c.b16 %v1853, %v1850
        %v2571 = vpack.c.b16 %v1854, %v1851
        %v2572 = vpack.c.b16 %v1858, %v1855
        %v2573 = vpack.c.b16 %v1859, %v1856
        %v2574 = vpack.c.b16 %v1860, %v1857
        %v2575 = vpack.c.b16 %v1864, %v1861
        %v2576 = vpack.c.b16 %v1865, %v1862
        %v2577 = vpack.c.b16 %v1866, %v1863
        %v2578 = vpack.c.b16 %v1870, %v1867
        %v2579 = vpack.c.b16 %v1871, %v1868
        %v2580 = vpack.c.b16 %v1872, %v1869
        %v2581 = vpack.c.b16 %v1876, %v1873
        %v2582 = vpack.c.b16 %v1877, %v1874
        %v2583 = vpack.c.b16 %v1878, %v1875
        %v2584 = vpack.c.b16 %v1882, %v1879
        %v2585 = vpack.c.b16 %v1883, %v1880
        %v2586 = vpack.c.b16 %v1884, %v1881
        %v2587 = vpack.c.b16 %v1888, %v1885
        %v2588 = vpack.c.b16 %v1889, %v1886
        %v2589 = vpack.c.b16 %v1890, %v1887
        %v2590 = vpack.c.b16 %v1894, %v1891
        %v2591 = vpack.c.b16 %v1895, %v1892
        %v2592 = vpack.c.b16 %v1896, %v1893
        %v2593 = vpack.c.b16 %v1900, %v1897
        %v2594 = vpack.c.b16 %v1901, %v1898
        %v2595 = vpack.c.b16 %v1902, %v1899
        %v2596 = vpack.c.b16 %v1906, %v1903
        %v2597 = vpack.c.b16 %v1907, %v1904
        %v2598 = vpack.c.b16 %v1908, %v1905
        %v2599 = vpack.c.b16 %v1912, %v1909
        %v2600 = vpack.c.b16 %v1913, %v1910
        %v2601 = vpack.c.b16 %v1914, %v1911
        %v2602 = vpack.c.b16 %v1918, %v1915
        %v2603 = vpack.c.b16 %v1919, %v1916
        %v2604 = vpack.c.b16 %v1920, %v1917
        %v2605 = vpack.c.b16 %v1924, %v1921
        %v2606 = vpack.c.b16 %v1925, %v1922
        %v2607 = vpack.c.b16 %v1926, %v1923
        %v2608 = vpack.c.b16 %v1930, %v1927
        %v2609 = vpack.c.b16 %v1931, %v1928
        %v2610 = vpack.c.b16 %v1932, %v1929
        %v2611 = vpack.c.b16 %v1936, %v1933
        %v2612 = vpack.c.b16 %v1937, %v1934
        %v2613 = vpack.c.b16 %v1938, %v1935
        %v2614 = vpack.c.b16 %v1942, %v1939
        %v2615 = vpack.c.b16 %v1943, %v1940
        %v2616 = vpack.c.b16 %v1944, %v1941
        %v2617 = vpack.c.b16 %v1948, %v1945
        %v2618 = vpack.c.b16 %v1949, %v1946
        %v2619 = vpack.c.b16 %v1950, %v1947
        %v2620 = vpack.c.b16 %v1954, %v1951
        %v2621 = vpack.c.b16 %v1955, %v1952
        %v2622 = vpack.c.b16 %v1956, %v1953
        %v2623 = vpack.c.b16 %v1960, %v1957
        %v2624 = vpack.c.b16 %v1961, %v1958
        %v2625 = vpack.c.b16 %v1962, %v1959
        %v2626 = vpack.c.b16 %v1966, %v1963
        %v2627 = vpack.c.b16 %v1967, %v1964
        %v2628 = vpack.c.b16 %v1968, %v1965
        %v2629 = vpack.c.b16 %v1972, %v1969
        %v2630 = vpack.c.b16 %v1973, %v1970
        %v2631 = vpack.c.b16 %v1974, %v1971
        %v2632 = vpack.c.b16 %v1978, %v1975
        %v2633 = vpack.c.b16 %v1979, %v1976
        %v2634 = vpack.c.b16 %v1980, %v1977
        %v2635 = vpack.c.b16 %v1984, %v1981
        %v2636 = vpack.c.b16 %v1985, %v1982
        %v2637 = vpack.c.b16 %v1986, %v1983
        %v2638 = vpack.c.b16 %v1990, %v1987
        %v2639 = vpack.c.b16 %v1991, %v1988
        %v2640 = vpack.c.b16 %v1992, %v1989
        %v2641 = vpack.c.b16 %v1996, %v1993
        %v2642 = vpack.c.b16 %v1997, %v1994
        %v2643 = vpack.c.b16 %v1998, %v1995
        %v2644 = vpack.c.b16 %v2002, %v1999
        %v2645 = vpack.c.b16 %v2003, %v2000
        %v2646 = vpack.c.b16 %v2004, %v2001
        %v2647 = vpack.c.b16 %v2008, %v2005
        %v2648 = vpack.c.b16 %v2009, %v2006
        %v2649 = vpack.c.b16 %v2010, %v2007
        %v2650 = vpack.c.b16 %v2014, %v2011
        %v2651 = vpack.c.b16 %v2015, %v2012
        %v2652 = vpack.c.b16 %v2016, %v2013
        %v2653 = vpack.c.b16 %v2020, %v2017
        %v2654 = vpack.c.b16 %v2021, %v2018
        %v2655 = vpack.c.b16 %v2022, %v2019
        %v2656 = vpack.c.b16 %v2026, %v2023
        %v2657 = vpack.c.b16 %v2027, %v2024
        %v2658 = vpack.c.b16 %v2028, %v2025
        %v2659 = vpack.c.b16 %v2032, %v2029
        %v2660 = vpack.c.b16 %v2033, %v2030
        %v2661 = vpack.c.b16 %v2034, %v2031
        %v2662 = vpack.c.b16 %v2038, %v2035
        %v2663 = vpack.c.b16 %v2039, %v2036
        %v2664 = vpack.c.b16 %v2040, %v2037
        %v2665 = vpack.c.b16 %v2044, %v2041
        %v2666 = vpack.c.b16 %v2045, %v2042
        %v2667 = vpack.c.b16 %v2046, %v2043
        %v2668 = vpack.c.b16 %v2050, %v2047
        %v2669 = vpack.c.b16 %v2051, %v2048
        %v2670 = vpack.c.b16 %v2052, %v2049
        %v2671 = vpack.c.b16 %v2056, %v2053
        %v2672 = vpack.c.b16 %v2057, %v2054
        %v2673 = vpack.c.b16 %v2058, %v2055
        %v2674 = vpack.c.b16 %v2062, %v2059
        %v2675 = vpack.c.b16 %v2063, %v2060
        %v2676 = vpack.c.b16 %v2064, %v2061
        %v2677 = vpack.c.b16 %v2068, %v2065
        %v2678 = vpack.c.b16 %v2069, %v2066
        %v2679 = vpack.c.b16 %v2070, %v2067
        %v2680 = vpack.c.b16 %v2074, %v2071
        %v2681 = vpack.c.b16 %v2075, %v2072
        %v2682 = vpack.c.b16 %v2076, %v2073
        %v2683 = vpack.c.b16 %v2080, %v2077
        %v2684 = vpack.c.b16 %v2081, %v2078
        %v2685 = vpack.c.b16 %v2082, %v2079
        %v2686 = vpack.c.b16 %v2086, %v2083
        %v2687 = vpack.c.b16 %v2087, %v2084
        %v2688 = vpack.c.b16 %v2088, %v2085
        %v2689 = vpack.c.b16 %v2092, %v2089
        %v2690 = vpack.c.b16 %v2093, %v2090
        %v2691 = vpack.c.b16 %v2094, %v2091
        %v2692 = vpack.c.b16 %v2098, %v2095
        %v2693 = vpack.c.b16 %v2099, %v2096
        %v2694 = vpack.c.b16 %v2100, %v2097
        %v2695 = vpack.c.b16 %v2104, %v2101
        %v2696 = vpack.c.b16 %v2105, %v2102
        %v2697 = vpack.c.b16 %v2106, %v2103
        %v2698 = vpack.c.b16 %v2110, %v2107
        %v2699 = vpack.c.b16 %v2111, %v2108
        %v2700 = vpack.c.b16 %v2112, %v2109
        %v2701 = vpack.c.b16 %v2116, %v2113
        %v2702 = vpack.c.b16 %v2117, %v2114
        %v2703 = vpack.c.b16 %v2118, %v2115
        %v2704 = vpack.c.b16 %v2122, %v2119
        %v2705 = vpack.c.b16 %v2123, %v2120
        %v2706 = vpack.c.b16 %v2124, %v2121
        %v2707 = vpack.c.b16 %v2128, %v2125
        %v2708 = vpack.c.b16 %v2129, %v2126
        %v2709 = vpack.c.b16 %v2130, %v2127
        %v2710 = vpack.c.b16 %v2134, %v2131
        %v2711 = vpack.c.b16 %v2135, %v2132
        %v2712 = vpack.c.b16 %v2136, %v2133
        %v2713 = vpack.c.b16 %v2140, %v2137
        %v2714 = vpack.c.b16 %v2141, %v2138
        %v2715 = vpack.c.b16 %v2142, %v2139
        %v2716 = vpack.c.b16 %v2146, %v2143
        %v2717 = vpack.c.b16 %v2147, %v2144
        %v2718 = vpack.c.b16 %v2148, %v2145
        %v2719 = vpack.c.b16 %v2152, %v2149
        %v2720 = vpack.c.b16 %v2153, %v2150
        %v2721 = vpack.c.b16 %v2154, %v2151
        %v2722 = vpack.c.b16 %v2158, %v2155
        %v2723 = vpack.c.b16 %v2159, %v2156
        %v2724 = vpack.c.b16 %v2160, %v2157
        %v2725 = vpack.c.b16 %v2164, %v2161
        %v2726 = vpack.c.b16 %v2165, %v2162
        %v2727 = vpack.c.b16 %v2166, %v2163
        %v2728 = vpack.c.b16 %v2170, %v2167
        %v2729 = vpack.c.b16 %v2171, %v2168
        %v2730 = vpack.c.b16 %v2172, %v2169
        %v2731 = vpack.c.b16 %v2176, %v2173
        %v2732 = vpack.c.b16 %v2177, %v2174
        %v2733 = vpack.c.b16 %v2178, %v2175
        %v2734 = vpack.c.b16 %v2182, %v2179
        %v2735 = vpack.c.b16 %v2183, %v2180
        %v2736 = vpack.c.b16 %v2184, %v2181
        %v2737 = vpack.c.b16 %v2188, %v2185
        %v2738 = vpack.c.b16 %v2189, %v2186
        %v2739 = vpack.c.b16 %v2190, %v2187
        %v2740 = vpack.c.b16 %v2194, %v2191
        %v2741 = vpack.c.b16 %v2195, %v2192
        %v2742 = vpack.c.b16 %v2196, %v2193
        %v2743 = vpack.c.b16 %v2200, %v2197
        %v2744 = vpack.c.b16 %v2201, %v2198
        %v2745 = vpack.c.b16 %v2202, %v2199
        %v2746 = vpack.c.b16 %v2206, %v2203
        %v2747 = vpack.c.b16 %v2207, %v2204
        %v2748 = vpack.c.b16 %v2208, %v2205
        %v2749 = vpack.c.b16 %v2212, %v2209
        %v2750 = vpack.c.b16 %v2213, %v2210
        %v2751 = vpack.c.b16 %v2214, %v2211
        %v2752 = vpack.c.b16 %v2218, %v2215
        %v2753 = vpack.c.b16 %v2219, %v2216
        %v2754 = vpack.c.b16 %v2220, %v2217
        %v2755 = vpack.c.b16 %v2224, %v2221
        %v2756 = vpack.c.b16 %v2225, %v2222
        %v2757 = vpack.c.b16 %v2226, %v2223
        %v2758 = vpack.c.b16 %v2230, %v2227
        %v2759 = vpack.c.b16 %v2231, %v2228
        %v2760 = vpack.c.b16 %v2232, %v2229
        %v2761 = vpack.c.b16 %v2236, %v2233
        %v2762 = vpack.c.b16 %v2237, %v2234
        %v2763 = vpack.c.b16 %v2238, %v2235
        %v2764 = vpack.c.b16 %v2242, %v2239
        %v2765 = vpack.c.b16 %v2243, %v2240
        %v2766 = vpack.c.b16 %v2244, %v2241
        %v2767 = vpack.c.b16 %v2248, %v2245
        %v2768 = vpack.c.b16 %v2249, %v2246
        %v2769 = vpack.c.b16 %v2250, %v2247
        %v2770 = vpack.c.b16 %v2254, %v2251
        %v2771 = vpack.c.b16 %v2255, %v2252
        %v2772 = vpack.c.b16 %v2256, %v2253
        %v2773 = vpack.c.b16 %v2260, %v2257
        %v2774 = vpack.c.b16 %v2261, %v2258
        %v2775 = vpack.c.b16 %v2262, %v2259
        %v2776 = vpack.c.b16 %v2266, %v2263
        %v2777 = vpack.c.b16 %v2267, %v2264
        %v2778 = vpack.c.b16 %v2268, %v2265
        %v2779 = vpack.c.b16 %v2272, %v2269
        %v2780 = vpack.c.b16 %v2273, %v2270
        %v2781 = vpack.c.b16 %v2274, %v2271
        %v2782 = vpack.c.b16 %v2278, %v2275
        %v2783 = vpack.c.b16 %v2279, %v2276
        %v2784 = vpack.c.b16 %v2280, %v2277
        %v2785 = vpack.c.b16 %v2284, %v2281
        %v2786 = vpack.c.b16 %v2285, %v2282
        %v2787 = vpack.c.b16 %v2286, %v2283
        %v2788 = vpack.c.b16 %v2290, %v2287
        %v2789 = vpack.c.b16 %v2291, %v2288
        %v2790 = vpack.c.b16 %v2292, %v2289
        %v2791 = vpack.c.b16 %v2296, %v2293
        %v2792 = vpack.c.b16 %v2297, %v2294
        %v2793 = vpack.c.b16 %v2298, %v2295
        %v2794 = vpack.c.b16 %v2302, %v2299
        %v2795 = vpack.c.b16 %v2303, %v2300
        %v2796 = vpack.c.b16 %v2304, %v2301
        %v2797 = vpack.c.b16 %v2308, %v2305
        %v2798 = vpack.c.b16 %v2309, %v2306
        %v2799 = vpack.c.b16 %v2310, %v2307
        %v2800 = vpack.c.b16 %v2314, %v2311
        %v2801 = vpack.c.b16 %v2315, %v2312
        %v2802 = vpack.c.b16 %v2316, %v2313
        %v2803 = vpack.c.b16 %v2320, %v2317
        %v2804 = vpack.c.b16 %v2321, %v2318
        %v2805 = vpack.c.b16 %v2322, %v2319
        %v2806 = vpack.c.b16 %v2326, %v2323
        %v2807 = vpack.c.b16 %v2327, %v2324
        %v2808 = vpack.c.b16 %v2328, %v2325
        %v2809 = vpack.c.b16 %v2332, %v2329
        %v2810 = vpack.c.b16 %v2333, %v2330
        %v2811 = vpack.c.b16 %v2334, %v2331
        %v2812 = vpack.c.b16 %v2338, %v2335
        %v2813 = vpack.c.b16 %v2339, %v2336
        %v2814 = vpack.c.b16 %v2340, %v2337
        %v2815 = vpack.c.b16 %v2344, %v2341
        %v2816 = vpack.c.b16 %v2345, %v2342
        %v2817 = vpack.c.b16 %v2346, %v2343
        %v2818 = vpack.c.b16 %v2350, %v2347
        %v2819 = vpack.c.b16 %v2351, %v2348
        %v2820 = vpack.c.b16 %v2352, %v2349
        %v2821 = vpack.c.b16 %v2356, %v2353
        %v2822 = vpack.c.b16 %v2357, %v2354
        %v2823 = vpack.c.b16 %v2358, %v2355
        %v2824 = vpack.c.b16 %v2362, %v2359
        %v2825 = vpack.c.b16 %v2363, %v2360
        %v2826 = vpack.c.b16 %v2364, %v2361
        %v2827 = vpack.c.b16 %v2368, %v2365
        %v2828 = vpack.c.b16 %v2369, %v2366
        %v2829 = vpack.c.b16 %v2370, %v2367
        %v2830 = vpack.c.b16 %v2374, %v2371
        %v2831 = vpack.c.b16 %v2375, %v2372
        %v2832 = vpack.c.b16 %v2376, %v2373
        %v2833 = vpack.c.b16 %v2380, %v2377
        %v2834 = vpack.c.b16 %v2381, %v2378
        %v2835 = vpack.c.b16 %v2382, %v2379
        %v2836 = vpack.c.b16 %v2386, %v2383
        %v2837 = vpack.c.b16 %v2387, %v2384
        %v2838 = vpack.c.b16 %v2388, %v2385
        %v2839 = vpack.c.b16 %v2392, %v2389
        %v2840 = vpack.c.b16 %v2393, %v2390
        %v2841 = vpack.c.b16 %v2394, %v2391
        %v2842 = vpack.c.b16 %v2398, %v2395
        %v2843 = vpack.c.b16 %v2399, %v2396
        %v2844 = vpack.c.b16 %v2400, %v2397
        %v2845 = vpack.c.b16 %v2404, %v2401
        %v2846 = vpack.c.b16 %v2405, %v2402
        %v2847 = vpack.c.b16 %v2406, %v2403
        %v2848 = vpack.c.b16 %v2410, %v2407
        %v2849 = vpack.c.b16 %v2411, %v2408
        %v2850 = vpack.c.b16 %v2412, %v2409
        %v2851 = vpack.c.b16 %v2416, %v2413
        %v2852 = vpack.c.b16 %v2417, %v2414
        %v2853 = vpack.c.b16 %v2418, %v2415
        %v2854 = vpack.c.b16 %v2422, %v2419
        %v2855 = vpack.c.b16 %v2423, %v2420
        %v2856 = vpack.c.b16 %v2424, %v2421
        %3289 = vmatprep.subr.bf16.mxu0 %v2426
        %3290 = vmatpush1.bf16.msra.mxu0 %v2425
        %3291 = vmatprep.subr.bf16.mxu0 %v2429
        %3292 = vmatpush1.bf16.msra.mxu0 %v2428
        %3293 = vmatprep.subr.bf16.mxu0 %v2432
        %3294 = vmatpush1.bf16.msra.mxu0 %v2431
        %3295 = vmatprep.subr.bf16.mxu0 %v2435
        %3296 = vmatpush1.bf16.msra.mxu0 %v2434
        %3297 = vmatprep.subr.bf16.mxu0 %v2438
        %3298 = vmatpush1.bf16.msra.mxu0 %v2437
        %3299 = vmatprep.subr.bf16.mxu0 %v2441
        %3300 = vmatpush1.bf16.msra.mxu0 %v2440
        %3301 = vmatprep.subr.bf16.mxu0 %v2444
        %3302 = vmatpush1.bf16.msra.mxu0 %v2443
        %3303 = vmatprep.subr.bf16.mxu0 %v2447
        %3304 = vmatpush1.bf16.msra.mxu0 %v2446
        %3305 = vmatprep.subr.bf16.mxu0 %v2450
        %3306 = vmatpush1.bf16.msra.mxu0 %v2449
        %3307 = vmatprep.subr.bf16.mxu0 %v2453
        %3308 = vmatpush1.bf16.msra.mxu0 %v2452
        %3309 = vmatprep.subr.bf16.mxu0 %v2456
        %3310 = vmatpush1.bf16.msra.mxu0 %v2455
        %3311 = vmatprep.subr.bf16.mxu0 %v2459
        %3312 = vmatpush1.bf16.msra.mxu0 %v2458
        %3313 = vmatprep.subr.bf16.mxu0 %v2462
        %3314 = vmatpush1.bf16.msra.mxu0 %v2461
        %3315 = vmatprep.subr.bf16.mxu0 %v2465
        %3316 = vmatpush1.bf16.msra.mxu0 %v2464
        %3317 = vmatprep.subr.bf16.mxu0 %v2468
        %3318 = vmatpush1.bf16.msra.mxu0 %v2467
        %3319 = vmatprep.subr.bf16.mxu0 %v2471
        %3320 = vmatpush1.bf16.msra.mxu0 %v2470
        %3321 = vmatprep.mubr.bf16.mxu0 %v321
        %3322 = vmatmul.mubr.bf16.gmra.mrb[0].mxu0 %v320
        %v3323 = vpop.f32.mrb[0].mxu0
        %v3324 = vadd.f32 %v973, %v3323
        %v3325 = vpop.f32.mrb[0].mxu0
        %v3326 = vadd.f32 %v977, %v3325
        %v3327 = vpop.f32.mrb[0].mxu0
        %v3328 = vadd.f32 %v973, %v3327
        %v3329 = vpop.f32.mrb[0].mxu0
        %v3330 = vadd.f32 %v977, %v3329
        %3331 = vmatprep.mubr.bf16.mxu0 %v339
        %3332 = vmatmul.mubr.bf16.gmra.mrb[0].mxu0 %v338
        %v3333 = vpop.f32.mrb[0].mxu0
        %v3334 = vadd.f32 %v973, %v3333
        %v3335 = vpop.f32.mrb[0].mxu0
        %v3336 = vadd.f32 %v977, %v3335
        %v3337 = vpop.f32.mrb[0].mxu0
        %v3338 = vadd.f32 %v973, %v3337
        %v3339 = vpop.f32.mrb[0].mxu0
        %v3340 = vadd.f32 %v977, %v3339
        %3341 = vmatprep.mubr.bf16.mxu0 %v357
        %3342 = vmatmul.mubr.bf16.gmra.mrb[0].mxu0 %v356
        %v3343 = vpop.f32.mrb[0].mxu0
        %v3344 = vadd.f32 %v973, %v3343
        %v3345 = vpop.f32.mrb[0].mxu0
        %v3346 = vadd.f32 %v977, %v3345
        %v3347 = vpop.f32.mrb[0].mxu0
        %v3348 = vadd.f32 %v973, %v3347
        %v3349 = vpop.f32.mrb[0].mxu0
        %v3350 = vadd.f32 %v977, %v3349
        %3351 = vmatprep.mubr.bf16.mxu0 %v375
        %3352 = vmatmul.mubr.bf16.gmra.mrb[0].mxu0 %v374
        %v3353 = vpop.f32.mrb[0].mxu0
        %v3354 = vadd.f32 %v973, %v3353
        %v3355 = vpop.f32.mrb[0].mxu0
        %v3356 = vadd.f32 %v977, %v3355
        %v3357 = vpop.f32.mrb[0].mxu0
        %v3358 = vadd.f32 %v973, %v3357
        %v3359 = vpop.f32.mrb[0].mxu0
        %v3360 = vadd.f32 %v977, %v3359
        %3361 = vdwg.mxu0
        %3362 = vmatprep.subr.bf16.mxu0 %v2474
        %3363 = vmatpush1.bf16.msra.mxu0 %v2473
        %3364 = vmatprep.subr.bf16.mxu0 %v2477
        %3365 = vmatpush1.bf16.msra.mxu0 %v2476
        %3366 = vmatprep.subr.bf16.mxu0 %v2480
        %3367 = vmatpush1.bf16.msra.mxu0 %v2479
        %3368 = vmatprep.subr.bf16.mxu0 %v2483
        %3369 = vmatpush1.bf16.msra.mxu0 %v2482
        %3370 = vmatprep.subr.bf16.mxu0 %v2486
        %3371 = vmatpush1.bf16.msra.mxu0 %v2485
        %3372 = vmatprep.subr.bf16.mxu0 %v2489
        %3373 = vmatpush1.bf16.msra.mxu0 %v2488
        %3374 = vmatprep.subr.bf16.mxu0 %v2492
        %3375 = vmatpush1.bf16.msra.mxu0 %v2491
        %3376 = vmatprep.subr.bf16.mxu0 %v2495
        %3377 = vmatpush1.bf16.msra.mxu0 %v2494
        %3378 = vmatprep.subr.bf16.mxu0 %v2498
        %3379 = vmatpush1.bf16.msra.mxu0 %v2497
        %3380 = vmatprep.subr.bf16.mxu0 %v2501
        %3381 = vmatpush1.bf16.msra.mxu0 %v2500
        %3382 = vmatprep.subr.bf16.mxu0 %v2504
        %3383 = vmatpush1.bf16.msra.mxu0 %v2503
        %3384 = vmatprep.subr.bf16.mxu0 %v2507
        %3385 = vmatpush1.bf16.msra.mxu0 %v2506
        %3386 = vmatprep.subr.bf16.mxu0 %v2510
        %3387 = vmatpush1.bf16.msra.mxu0 %v2509
        %3388 = vmatprep.subr.bf16.mxu0 %v2513
        %3389 = vmatpush1.bf16.msra.mxu0 %v2512
        %3390 = vmatprep.subr.bf16.mxu0 %v2516
        %3391 = vmatpush1.bf16.msra.mxu0 %v2515
        %3392 = vmatprep.subr.bf16.mxu0 %v2519
        %3393 = vmatpush1.bf16.msra.mxu0 %v2518
        %3394 = vmatprep.mubr.bf16.mxu0 %v323
        %3395 = vmatmul.mubr.bf16.gmra.mrb[0].mxu0 %v322
        %v3396 = vpop.f32.mrb[0].mxu0
        %v3397 = vadd.f32 %v3324, %v3396
        %v3398 = vpop.f32.mrb[0].mxu0
        %v3399 = vadd.f32 %v3326, %v3398
        %v3400 = vpop.f32.mrb[0].mxu0
        %v3401 = vadd.f32 %v3328, %v3400
        %v3402 = vpop.f32.mrb[0].mxu0
        %v3403 = vadd.f32 %v3330, %v3402
        %3404 = vmatprep.mubr.bf16.mxu0 %v341
        %3405 = vmatmul.mubr.bf16.gmra.mrb[0].mxu0 %v340
        %v3406 = vpop.f32.mrb[0].mxu0
        %v3407 = vadd.f32 %v3334, %v3406
        %v3408 = vpop.f32.mrb[0].mxu0
        %v3409 = vadd.f32 %v3336, %v3408
        %v3410 = vpop.f32.mrb[0].mxu0
        %v3411 = vadd.f32 %v3338, %v3410
        %v3412 = vpop.f32.mrb[0].mxu0
        %v3413 = vadd.f32 %v3340, %v3412
        %3414 = vmatprep.mubr.bf16.mxu0 %v359
        %3415 = vmatmul.mubr.bf16.gmra.mrb[0].mxu0 %v358
        %v3416 = vpop.f32.mrb[0].mxu0
        %v3417 = vadd.f32 %v3344, %v3416
        %v3418 = vpop.f32.mrb[0].mxu0
        %v3419 = vadd.f32 %v3346, %v3418
        %v3420 = vpop.f32.mrb[0].mxu0
        %v3421 = vadd.f32 %v3348, %v3420
        %v3422 = vpop.f32.mrb[0].mxu0
        %v3423 = vadd.f32 %v3350, %v3422
        %3424 = vmatprep.mubr.bf16.mxu0 %v377
        %3425 = vmatmul.mubr.bf16.gmra.mrb[0].mxu0 %v376
        %v3426 = vpop.f32.mrb[0].mxu0
        %v3427 = vadd.f32 %v3354, %v3426
        %v3428 = vpop.f32.mrb[0].mxu0
        %v3429 = vadd.f32 %v3356, %v3428
        %v3430 = vpop.f32.mrb[0].mxu0
        %v3431 = vadd.f32 %v3358, %v3430
        %v3432 = vpop.f32.mrb[0].mxu0
        %v3433 = vadd.f32 %v3360, %v3432
        %3434 = vdwg.mxu0
        %3435 = vmatprep.subr.bf16.mxu0 %v2522
        %3436 = vmatpush1.bf16.msra.mxu0 %v2521
        %3437 = vmatprep.subr.bf16.mxu0 %v2525
        %3438 = vmatpush1.bf16.msra.mxu0 %v2524
        %3439 = vmatprep.subr.bf16.mxu0 %v2528
        %3440 = vmatpush1.bf16.msra.mxu0 %v2527
        %3441 = vmatprep.subr.bf16.mxu0 %v2531
        %3442 = vmatpush1.bf16.msra.mxu0 %v2530
        %3443 = vmatprep.subr.bf16.mxu0 %v2534
        %3444 = vmatpush1.bf16.msra.mxu0 %v2533
        %3445 = vmatprep.subr.bf16.mxu0 %v2537
        %3446 = vmatpush1.bf16.msra.mxu0 %v2536
        %3447 = vmatprep.subr.bf16.mxu0 %v2540
        %3448 = vmatpush1.bf16.msra.mxu0 %v2539
        %3449 = vmatprep.subr.bf16.mxu0 %v2543
        %3450 = vmatpush1.bf16.msra.mxu0 %v2542
        %3451 = vmatprep.subr.bf16.mxu0 %v2546
        %3452 = vmatpush1.bf16.msra.mxu0 %v2545
        %3453 = vmatprep.subr.bf16.mxu0 %v2549
        %3454 = vmatpush1.bf16.msra.mxu0 %v2548
        %3455 = vmatprep.subr.bf16.mxu0 %v2552
        %3456 = vmatpush1.bf16.msra.mxu0 %v2551
        %3457 = vmatprep.subr.bf16.mxu0 %v2555
        %3458 = vmatpush1.bf16.msra.mxu0 %v2554
        %3459 = vmatprep.subr.bf16.mxu0 %v2558
        %3460 = vmatpush1.bf16.msra.mxu0 %v2557
        %3461 = vmatprep.subr.bf16.mxu0 %v2561
        %3462 = vmatpush1.bf16.msra.mxu0 %v2560
        %3463 = vmatprep.subr.bf16.mxu0 %v2564
        %3464 = vmatpush1.bf16.msra.mxu0 %v2563
        %3465 = vmatprep.subr.bf16.mxu0 %v2567
        %3466 = vmatpush1.bf16.msra.mxu0 %v2566
        %3467 = vmatprep.mubr.bf16.mxu0 %v325
        %3468 = vmatmul.mubr.bf16.gmra.mrb[0].mxu0 %v324
        %v3469 = vpop.f32.mrb[0].mxu0
        %v3470 = vadd.f32 %v3397, %v3469
        %v3471 = vpop.f32.mrb[0].mxu0
        %v3472 = vadd.f32 %v3399, %v3471
        %v3473 = vpop.f32.mrb[0].mxu0
        %v3474 = vadd.f32 %v3401, %v3473
        %v3475 = vpop.f32.mrb[0].mxu0
        %v3476 = vadd.f32 %v3403, %v3475
        %3477 = vmatprep.mubr.bf16.mxu0 %v343
        %3478 = vmatmul.mubr.bf16.gmra.mrb[0].mxu0 %v342
        %v3479 = vpop.f32.mrb[0].mxu0
        %v3480 = vadd.f32 %v3407, %v3479
        %v3481 = vpop.f32.mrb[0].mxu0
        %v3482 = vadd.f32 %v3409, %v3481
        %v3483 = vpop.f32.mrb[0].mxu0
        %v3484 = vadd.f32 %v3411, %v3483
        %v3485 = vpop.f32.mrb[0].mxu0
        %v3486 = vadd.f32 %v3413, %v3485
        %3487 = vmatprep.mubr.bf16.mxu0 %v361
        %3488 = vmatmul.mubr.bf16.gmra.mrb[0].mxu0 %v360
        %v3489 = vpop.f32.mrb[0].mxu0
        %v3490 = vadd.f32 %v3417, %v3489
        %v3491 = vpop.f32.mrb[0].mxu0
        %v3492 = vadd.f32 %v3419, %v3491
        %v3493 = vpop.f32.mrb[0].mxu0
        %v3494 = vadd.f32 %v3421, %v3493
        %v3495 = vpop.f32.mrb[0].mxu0
        %v3496 = vadd.f32 %v3423, %v3495
        %3497 = vmatprep.mubr.bf16.mxu0 %v379
        %3498 = vmatmul.mubr.bf16.gmra.mrb[0].mxu0 %v378
        %v3499 = vpop.f32.mrb[0].mxu0
        %v3500 = vadd.f32 %v3427, %v3499
        %v3501 = vpop.f32.mrb[0].mxu0
        %v3502 = vadd.f32 %v3429, %v3501
        %v3503 = vpop.f32.mrb[0].mxu0
        %v3504 = vadd.f32 %v3431, %v3503
        %v3505 = vpop.f32.mrb[0].mxu0
        %v3506 = vadd.f32 %v3433, %v3505
        %3507 = vdwg.mxu0
        %3508 = vmatprep.subr.bf16.mxu0 %v2570
        %3509 = vmatpush1.bf16.msra.mxu0 %v2569
        %3510 = vmatprep.subr.bf16.mxu0 %v2573
        %3511 = vmatpush1.bf16.msra.mxu0 %v2572
        %3512 = vmatprep.subr.bf16.mxu0 %v2576
        %3513 = vmatpush1.bf16.msra.mxu0 %v2575
        %3514 = vmatprep.subr.bf16.mxu0 %v2579
        %3515 = vmatpush1.bf16.msra.mxu0 %v2578
        %3516 = vmatprep.subr.bf16.mxu0 %v2582
        %3517 = vmatpush1.bf16.msra.mxu0 %v2581
        %3518 = vmatprep.subr.bf16.mxu0 %v2585
        %3519 = vmatpush1.bf16.msra.mxu0 %v2584
        %3520 = vmatprep.subr.bf16.mxu0 %v2588
        %3521 = vmatpush1.bf16.msra.mxu0 %v2587
        %3522 = vmatprep.subr.bf16.mxu0 %v2591
        %3523 = vmatpush1.bf16.msra.mxu0 %v2590
        %3524 = vmatprep.subr.bf16.mxu0 %v2594
        %3525 = vmatpush1.bf16.msra.mxu0 %v2593
        %3526 = vmatprep.subr.bf16.mxu0 %v2597
        %3527 = vmatpush1.bf16.msra.mxu0 %v2596
        %3528 = vmatprep.subr.bf16.mxu0 %v2600
        %3529 = vmatpush1.bf16.msra.mxu0 %v2599
        %3530 = vmatprep.subr.bf16.mxu0 %v2603
        %3531 = vmatpush1.bf16.msra.mxu0 %v2602
        %3532 = vmatprep.subr.bf16.mxu0 %v2606
        %3533 = vmatpush1.bf16.msra.mxu0 %v2605
        %3534 = vmatprep.subr.bf16.mxu0 %v2609
        %3535 = vmatpush1.bf16.msra.mxu0 %v2608
        %3536 = vmatprep.subr.bf16.mxu0 %v2612
        %3537 = vmatpush1.bf16.msra.mxu0 %v2611
        %3538 = vmatprep.subr.bf16.mxu0 %v2615
        %3539 = vmatpush1.bf16.msra.mxu0 %v2614
        %3540 = vmatprep.mubr.bf16.mxu0 %v327
        %3541 = vmatmul.mubr.bf16.gmra.mrb[0].mxu0 %v326
        %v3542 = vpop.f32.mrb[0].mxu0
        %v3543 = vadd.f32 %v3470, %v3542
        %v3544 = vpop.f32.mrb[0].mxu0
        %v3545 = vadd.f32 %v3472, %v3544
        %v3546 = vpop.f32.mrb[0].mxu0
        %v3547 = vadd.f32 %v3474, %v3546
        %v3548 = vpop.f32.mrb[0].mxu0
        %v3549 = vadd.f32 %v3476, %v3548
        %3550 = vmatprep.mubr.bf16.mxu0 %v345
        %3551 = vmatmul.mubr.bf16.gmra.mrb[0].mxu0 %v344
        %v3552 = vpop.f32.mrb[0].mxu0
        %v3553 = vadd.f32 %v3480, %v3552
        %v3554 = vpop.f32.mrb[0].mxu0
        %v3555 = vadd.f32 %v3482, %v3554
        %v3556 = vpop.f32.mrb[0].mxu0
        %v3557 = vadd.f32 %v3484, %v3556
        %v3558 = vpop.f32.mrb[0].mxu0
        %v3559 = vadd.f32 %v3486, %v3558
        %3560 = vmatprep.mubr.bf16.mxu0 %v363
        %3561 = vmatmul.mubr.bf16.gmra.mrb[0].mxu0 %v362
        %v3562 = vpop.f32.mrb[0].mxu0
        %v3563 = vadd.f32 %v3490, %v3562
        %v3564 = vpop.f32.mrb[0].mxu0
        %v3565 = vadd.f32 %v3492, %v3564
        %v3566 = vpop.f32.mrb[0].mxu0
        %v3567 = vadd.f32 %v3494, %v3566
        %v3568 = vpop.f32.mrb[0].mxu0
        %v3569 = vadd.f32 %v3496, %v3568
        %3570 = vmatprep.mubr.bf16.mxu0 %v381
        %3571 = vmatmul.mubr.bf16.gmra.mrb[0].mxu0 %v380
        %v3572 = vpop.f32.mrb[0].mxu0
        %v3573 = vadd.f32 %v3500, %v3572
        %v3574 = vpop.f32.mrb[0].mxu0
        %v3575 = vadd.f32 %v3502, %v3574
        %v3576 = vpop.f32.mrb[0].mxu0
        %v3577 = vadd.f32 %v3504, %v3576
        %v3578 = vpop.f32.mrb[0].mxu0
        %v3579 = vadd.f32 %v3506, %v3578
        %3580 = vdwg.mxu0
        %3581 = vmatprep.subr.bf16.mxu0 %v2618
        %3582 = vmatpush1.bf16.msra.mxu0 %v2617
        %3583 = vmatprep.subr.bf16.mxu0 %v2621
        %3584 = vmatpush1.bf16.msra.mxu0 %v2620
        %3585 = vmatprep.subr.bf16.mxu0 %v2624
        %3586 = vmatpush1.bf16.msra.mxu0 %v2623
        %3587 = vmatprep.subr.bf16.mxu0 %v2627
        %3588 = vmatpush1.bf16.msra.mxu0 %v2626
        %3589 = vmatprep.subr.bf16.mxu0 %v2630
        %3590 = vmatpush1.bf16.msra.mxu0 %v2629
        %3591 = vmatprep.subr.bf16.mxu0 %v2633
        %3592 = vmatpush1.bf16.msra.mxu0 %v2632
        %3593 = vmatprep.subr.bf16.mxu0 %v2636
        %3594 = vmatpush1.bf16.msra.mxu0 %v2635
        %3595 = vmatprep.subr.bf16.mxu0 %v2639
        %3596 = vmatpush1.bf16.msra.mxu0 %v2638
        %3597 = vmatprep.subr.bf16.mxu0 %v2642
        %3598 = vmatpush1.bf16.msra.mxu0 %v2641
        %3599 = vmatprep.subr.bf16.mxu0 %v2645
        %3600 = vmatpush1.bf16.msra.mxu0 %v2644
        %3601 = vmatprep.subr.bf16.mxu0 %v2648
        %3602 = vmatpush1.bf16.msra.mxu0 %v2647
        %3603 = vmatprep.subr.bf16.mxu0 %v2651
        %3604 = vmatpush1.bf16.msra.mxu0 %v2650
        %3605 = vmatprep.subr.bf16.mxu0 %v2654
        %3606 = vmatpush1.bf16.msra.mxu0 %v2653
        %3607 = vmatprep.subr.bf16.mxu0 %v2657
        %3608 = vmatpush1.bf16.msra.mxu0 %v2656
        %3609 = vmatprep.subr.bf16.mxu0 %v2660
        %3610 = vmatpush1.bf16.msra.mxu0 %v2659
        %3611 = vmatprep.subr.bf16.mxu0 %v2663
        %3612 = vmatpush1.bf16.msra.mxu0 %v2662
        %3613 = vmatprep.mubr.bf16.mxu0 %v329
        %3614 = vmatmul.mubr.bf16.gmra.mrb[0].mxu0 %v328
        %v3615 = vpop.f32.mrb[0].mxu0
        %v3616 = vadd.f32 %v3543, %v3615
        %v3617 = vpop.f32.mrb[0].mxu0
        %v3618 = vadd.f32 %v3545, %v3617
        %v3619 = vpop.f32.mrb[0].mxu0
        %v3620 = vadd.f32 %v3547, %v3619
        %v3621 = vpop.f32.mrb[0].mxu0
        %v3622 = vadd.f32 %v3549, %v3621
        %3623 = vmatprep.mubr.bf16.mxu0 %v347
        %3624 = vmatmul.mubr.bf16.gmra.mrb[0].mxu0 %v346
        %v3625 = vpop.f32.mrb[0].mxu0
        %v3626 = vadd.f32 %v3553, %v3625
        %v3627 = vpop.f32.mrb[0].mxu0
        %v3628 = vadd.f32 %v3555, %v3627
        %v3629 = vpop.f32.mrb[0].mxu0
        %v3630 = vadd.f32 %v3557, %v3629
        %v3631 = vpop.f32.mrb[0].mxu0
        %v3632 = vadd.f32 %v3559, %v3631
        %3633 = vmatprep.mubr.bf16.mxu0 %v365
        %3634 = vmatmul.mubr.bf16.gmra.mrb[0].mxu0 %v364
        %v3635 = vpop.f32.mrb[0].mxu0
        %v3636 = vadd.f32 %v3563, %v3635
        %v3637 = vpop.f32.mrb[0].mxu0
        %v3638 = vadd.f32 %v3565, %v3637
        %v3639 = vpop.f32.mrb[0].mxu0
        %v3640 = vadd.f32 %v3567, %v3639
        %v3641 = vpop.f32.mrb[0].mxu0
        %v3642 = vadd.f32 %v3569, %v3641
        %3643 = vmatprep.mubr.bf16.mxu0 %v383
        %3644 = vmatmul.mubr.bf16.gmra.mrb[0].mxu0 %v382
        %v3645 = vpop.f32.mrb[0].mxu0
        %v3646 = vadd.f32 %v3573, %v3645
        %v3647 = vpop.f32.mrb[0].mxu0
        %v3648 = vadd.f32 %v3575, %v3647
        %v3649 = vpop.f32.mrb[0].mxu0
        %v3650 = vadd.f32 %v3577, %v3649
        %v3651 = vpop.f32.mrb[0].mxu0
        %v3652 = vadd.f32 %v3579, %v3651
        %3653 = vdwg.mxu0
        %3654 = vmatprep.subr.bf16.mxu0 %v2666
        %3655 = vmatpush1.bf16.msra.mxu0 %v2665
        %3656 = vmatprep.subr.bf16.mxu0 %v2669
        %3657 = vmatpush1.bf16.msra.mxu0 %v2668
        %3658 = vmatprep.subr.bf16.mxu0 %v2672
        %3659 = vmatpush1.bf16.msra.mxu0 %v2671
        %3660 = vmatprep.subr.bf16.mxu0 %v2675
        %3661 = vmatpush1.bf16.msra.mxu0 %v2674
        %3662 = vmatprep.subr.bf16.mxu0 %v2678
        %3663 = vmatpush1.bf16.msra.mxu0 %v2677
        %3664 = vmatprep.subr.bf16.mxu0 %v2681
        %3665 = vmatpush1.bf16.msra.mxu0 %v2680
        %3666 = vmatprep.subr.bf16.mxu0 %v2684
        %3667 = vmatpush1.bf16.msra.mxu0 %v2683
        %3668 = vmatprep.subr.bf16.mxu0 %v2687
        %3669 = vmatpush1.bf16.msra.mxu0 %v2686
        %3670 = vmatprep.subr.bf16.mxu0 %v2690
        %3671 = vmatpush1.bf16.msra.mxu0 %v2689
        %3672 = vmatprep.subr.bf16.mxu0 %v2693
        %3673 = vmatpush1.bf16.msra.mxu0 %v2692
        %3674 = vmatprep.subr.bf16.mxu0 %v2696
        %3675 = vmatpush1.bf16.msra.mxu0 %v2695
        %3676 = vmatprep.subr.bf16.mxu0 %v2699
        %3677 = vmatpush1.bf16.msra.mxu0 %v2698
        %3678 = vmatprep.subr.bf16.mxu0 %v2702
        %3679 = vmatpush1.bf16.msra.mxu0 %v2701
        %3680 = vmatprep.subr.bf16.mxu0 %v2705
        %3681 = vmatpush1.bf16.msra.mxu0 %v2704
        %3682 = vmatprep.subr.bf16.mxu0 %v2708
        %3683 = vmatpush1.bf16.msra.mxu0 %v2707
        %3684 = vmatprep.subr.bf16.mxu0 %v2711
        %3685 = vmatpush1.bf16.msra.mxu0 %v2710
        %3686 = vmatprep.mubr.bf16.mxu0 %v331
        %3687 = vmatmul.mubr.bf16.gmra.mrb[0].mxu0 %v330
        %v3688 = vpop.f32.mrb[0].mxu0
        %v3689 = vadd.f32 %v3616, %v3688
        %v3690 = vpop.f32.mrb[0].mxu0
        %v3691 = vadd.f32 %v3618, %v3690
        %v3692 = vpop.f32.mrb[0].mxu0
        %v3693 = vadd.f32 %v3620, %v3692
        %v3694 = vpop.f32.mrb[0].mxu0
        %v3695 = vadd.f32 %v3622, %v3694
        %3696 = vmatprep.mubr.bf16.mxu0 %v349
        %3697 = vmatmul.mubr.bf16.gmra.mrb[0].mxu0 %v348
        %v3698 = vpop.f32.mrb[0].mxu0
        %v3699 = vadd.f32 %v3626, %v3698
        %v3700 = vpop.f32.mrb[0].mxu0
        %v3701 = vadd.f32 %v3628, %v3700
        %v3702 = vpop.f32.mrb[0].mxu0
        %v3703 = vadd.f32 %v3630, %v3702
        %v3704 = vpop.f32.mrb[0].mxu0
        %v3705 = vadd.f32 %v3632, %v3704
        %3706 = vmatprep.mubr.bf16.mxu0 %v367
        %3707 = vmatmul.mubr.bf16.gmra.mrb[0].mxu0 %v366
        %v3708 = vpop.f32.mrb[0].mxu0
        %v3709 = vadd.f32 %v3636, %v3708
        %v3710 = vpop.f32.mrb[0].mxu0
        %v3711 = vadd.f32 %v3638, %v3710
        %v3712 = vpop.f32.mrb[0].mxu0
        %v3713 = vadd.f32 %v3640, %v3712
        %v3714 = vpop.f32.mrb[0].mxu0
        %v3715 = vadd.f32 %v3642, %v3714
        %3716 = vmatprep.mubr.bf16.mxu0 %v385
        %3717 = vmatmul.mubr.bf16.gmra.mrb[0].mxu0 %v384
        %v3718 = vpop.f32.mrb[0].mxu0
        %v3719 = vadd.f32 %v3646, %v3718
        %v3720 = vpop.f32.mrb[0].mxu0
        %v3721 = vadd.f32 %v3648, %v3720
        %v3722 = vpop.f32.mrb[0].mxu0
        %v3723 = vadd.f32 %v3650, %v3722
        %v3724 = vpop.f32.mrb[0].mxu0
        %v3725 = vadd.f32 %v3652, %v3724
        %3726 = vdwg.mxu0
        %3727 = vmatprep.subr.bf16.mxu0 %v2714
        %3728 = vmatpush1.bf16.msra.mxu0 %v2713
        %3729 = vmatprep.subr.bf16.mxu0 %v2717
        %3730 = vmatpush1.bf16.msra.mxu0 %v2716
        %3731 = vmatprep.subr.bf16.mxu0 %v2720
        %3732 = vmatpush1.bf16.msra.mxu0 %v2719
        %3733 = vmatprep.subr.bf16.mxu0 %v2723
        %3734 = vmatpush1.bf16.msra.mxu0 %v2722
        %3735 = vmatprep.subr.bf16.mxu0 %v2726
        %3736 = vmatpush1.bf16.msra.mxu0 %v2725
        %3737 = vmatprep.subr.bf16.mxu0 %v2729
        %3738 = vmatpush1.bf16.msra.mxu0 %v2728
        %3739 = vmatprep.subr.bf16.mxu0 %v2732
        %3740 = vmatpush1.bf16.msra.mxu0 %v2731
        %3741 = vmatprep.subr.bf16.mxu0 %v2735
        %3742 = vmatpush1.bf16.msra.mxu0 %v2734
        %3743 = vmatprep.subr.bf16.mxu0 %v2738
        %3744 = vmatpush1.bf16.msra.mxu0 %v2737
        %3745 = vmatprep.subr.bf16.mxu0 %v2741
        %3746 = vmatpush1.bf16.msra.mxu0 %v2740
        %3747 = vmatprep.subr.bf16.mxu0 %v2744
        %3748 = vmatpush1.bf16.msra.mxu0 %v2743
        %3749 = vmatprep.subr.bf16.mxu0 %v2747
        %3750 = vmatpush1.bf16.msra.mxu0 %v2746
        %3751 = vmatprep.subr.bf16.mxu0 %v2750
        %3752 = vmatpush1.bf16.msra.mxu0 %v2749
        %3753 = vmatprep.subr.bf16.mxu0 %v2753
        %3754 = vmatpush1.bf16.msra.mxu0 %v2752
        %3755 = vmatprep.subr.bf16.mxu0 %v2756
        %3756 = vmatpush1.bf16.msra.mxu0 %v2755
        %3757 = vmatprep.subr.bf16.mxu0 %v2759
        %3758 = vmatpush1.bf16.msra.mxu0 %v2758
        %3759 = vmatprep.mubr.bf16.mxu0 %v333
        %3760 = vmatmul.mubr.bf16.gmra.mrb[0].mxu0 %v332
        %v3761 = vpop.f32.mrb[0].mxu0
        %v3762 = vadd.f32 %v3689, %v3761
        %v3763 = vpop.f32.mrb[0].mxu0
        %v3764 = vadd.f32 %v3691, %v3763
        %v3765 = vpop.f32.mrb[0].mxu0
        %v3766 = vadd.f32 %v3693, %v3765
        %v3767 = vpop.f32.mrb[0].mxu0
        %v3768 = vadd.f32 %v3695, %v3767
        %3769 = vmatprep.mubr.bf16.mxu0 %v351
        %3770 = vmatmul.mubr.bf16.gmra.mrb[0].mxu0 %v350
        %v3771 = vpop.f32.mrb[0].mxu0
        %v3772 = vadd.f32 %v3699, %v3771
        %v3773 = vpop.f32.mrb[0].mxu0
        %v3774 = vadd.f32 %v3701, %v3773
        %v3775 = vpop.f32.mrb[0].mxu0
        %v3776 = vadd.f32 %v3703, %v3775
        %v3777 = vpop.f32.mrb[0].mxu0
        %v3778 = vadd.f32 %v3705, %v3777
        %3779 = vmatprep.mubr.bf16.mxu0 %v369
        %3780 = vmatmul.mubr.bf16.gmra.mrb[0].mxu0 %v368
        %v3781 = vpop.f32.mrb[0].mxu0
        %v3782 = vadd.f32 %v3709, %v3781
        %v3783 = vpop.f32.mrb[0].mxu0
        %v3784 = vadd.f32 %v3711, %v3783
        %v3785 = vpop.f32.mrb[0].mxu0
        %v3786 = vadd.f32 %v3713, %v3785
        %v3787 = vpop.f32.mrb[0].mxu0
        %v3788 = vadd.f32 %v3715, %v3787
        %3789 = vmatprep.mubr.bf16.mxu0 %v387
        %3790 = vmatmul.mubr.bf16.gmra.mrb[0].mxu0 %v386
        %v3791 = vpop.f32.mrb[0].mxu0
        %v3792 = vadd.f32 %v3719, %v3791
        %v3793 = vpop.f32.mrb[0].mxu0
        %v3794 = vadd.f32 %v3721, %v3793
        %v3795 = vpop.f32.mrb[0].mxu0
        %v3796 = vadd.f32 %v3723, %v3795
        %v3797 = vpop.f32.mrb[0].mxu0
        %v3798 = vadd.f32 %v3725, %v3797
        %3799 = vdwg.mxu0
        %3800 = vmatprep.subr.bf16.mxu0 %v2762
        %3801 = vmatpush1.bf16.msra.mxu0 %v2761
        %3802 = vmatprep.subr.bf16.mxu0 %v2765
        %3803 = vmatpush1.bf16.msra.mxu0 %v2764
        %3804 = vmatprep.subr.bf16.mxu0 %v2768
        %3805 = vmatpush1.bf16.msra.mxu0 %v2767
        %3806 = vmatprep.subr.bf16.mxu0 %v2771
        %3807 = vmatpush1.bf16.msra.mxu0 %v2770
        %3808 = vmatprep.subr.bf16.mxu0 %v2774
        %3809 = vmatpush1.bf16.msra.mxu0 %v2773
        %3810 = vmatprep.subr.bf16.mxu0 %v2777
        %3811 = vmatpush1.bf16.msra.mxu0 %v2776
        %3812 = vmatprep.subr.bf16.mxu0 %v2780
        %3813 = vmatpush1.bf16.msra.mxu0 %v2779
        %3814 = vmatprep.subr.bf16.mxu0 %v2783
        %3815 = vmatpush1.bf16.msra.mxu0 %v2782
        %3816 = vmatprep.subr.bf16.mxu0 %v2786
        %3817 = vmatpush1.bf16.msra.mxu0 %v2785
        %3818 = vmatprep.subr.bf16.mxu0 %v2789
        %3819 = vmatpush1.bf16.msra.mxu0 %v2788
        %3820 = vmatprep.subr.bf16.mxu0 %v2792
        %3821 = vmatpush1.bf16.msra.mxu0 %v2791
        %3822 = vmatprep.subr.bf16.mxu0 %v2795
        %3823 = vmatpush1.bf16.msra.mxu0 %v2794
        %3824 = vmatprep.subr.bf16.mxu0 %v2798
        %3825 = vmatpush1.bf16.msra.mxu0 %v2797
        %3826 = vmatprep.subr.bf16.mxu0 %v2801
        %3827 = vmatpush1.bf16.msra.mxu0 %v2800
        %3828 = vmatprep.subr.bf16.mxu0 %v2804
        %3829 = vmatpush1.bf16.msra.mxu0 %v2803
        %3830 = vmatprep.subr.bf16.mxu0 %v2807
        %3831 = vmatpush1.bf16.msra.mxu0 %v2806
        %3832 = vmatprep.mubr.bf16.mxu0 %v335
        %3833 = vmatmul.mubr.bf16.gmra.mrb[0].mxu0 %v334
        %v3834 = vpop.f32.mrb[0].mxu0
        %v3835 = vadd.f32 %v3762, %v3834
        %v3836 = vpop.f32.mrb[0].mxu0
        %v3837 = vadd.f32 %v3764, %v3836
        %v3838 = vpop.f32.mrb[0].mxu0
        %v3839 = vadd.f32 %v3766, %v3838
        %v3840 = vpop.f32.mrb[0].mxu0
        %v3841 = vadd.f32 %v3768, %v3840
        %3842 = vmatprep.mubr.bf16.mxu0 %v353
        %3843 = vmatmul.mubr.bf16.gmra.mrb[0].mxu0 %v352
        %v3844 = vpop.f32.mrb[0].mxu0
        %v3845 = vadd.f32 %v3772, %v3844
        %v3846 = vpop.f32.mrb[0].mxu0
        %v3847 = vadd.f32 %v3774, %v3846
        %v3848 = vpop.f32.mrb[0].mxu0
        %v3849 = vadd.f32 %v3776, %v3848
        %v3850 = vpop.f32.mrb[0].mxu0
        %v3851 = vadd.f32 %v3778, %v3850
        %3852 = vmatprep.mubr.bf16.mxu0 %v371
        %3853 = vmatmul.mubr.bf16.gmra.mrb[0].mxu0 %v370
        %v3854 = vpop.f32.mrb[0].mxu0
        %v3855 = vadd.f32 %v3782, %v3854
        %v3856 = vpop.f32.mrb[0].mxu0
        %v3857 = vadd.f32 %v3784, %v3856
        %v3858 = vpop.f32.mrb[0].mxu0
        %v3859 = vadd.f32 %v3786, %v3858
        %v3860 = vpop.f32.mrb[0].mxu0
        %v3861 = vadd.f32 %v3788, %v3860
        %3862 = vmatprep.mubr.bf16.mxu0 %v389
        %3863 = vmatmul.mubr.bf16.gmra.mrb[0].mxu0 %v388
        %v3864 = vpop.f32.mrb[0].mxu0
        %v3865 = vadd.f32 %v3792, %v3864
        %v3866 = vpop.f32.mrb[0].mxu0
        %v3867 = vadd.f32 %v3794, %v3866
        %v3868 = vpop.f32.mrb[0].mxu0
        %v3869 = vadd.f32 %v3796, %v3868
        %v3870 = vpop.f32.mrb[0].mxu0
        %v3871 = vadd.f32 %v3798, %v3870
        %3872 = vdwg.mxu0
        %3873 = vmatprep.subr.bf16.mxu0 %v2810
        %3874 = vmatpush1.bf16.msra.mxu0 %v2809
        %3875 = vmatprep.subr.bf16.mxu0 %v2813
        %3876 = vmatpush1.bf16.msra.mxu0 %v2812
        %3877 = vmatprep.subr.bf16.mxu0 %v2816
        %3878 = vmatpush1.bf16.msra.mxu0 %v2815
        %3879 = vmatprep.subr.bf16.mxu0 %v2819
        %3880 = vmatpush1.bf16.msra.mxu0 %v2818
        %3881 = vmatprep.subr.bf16.mxu0 %v2822
        %3882 = vmatpush1.bf16.msra.mxu0 %v2821
        %3883 = vmatprep.subr.bf16.mxu0 %v2825
        %3884 = vmatpush1.bf16.msra.mxu0 %v2824
        %3885 = vmatprep.subr.bf16.mxu0 %v2828
        %3886 = vmatpush1.bf16.msra.mxu0 %v2827
        %3887 = vmatprep.subr.bf16.mxu0 %v2831
        %3888 = vmatpush1.bf16.msra.mxu0 %v2830
        %3889 = vmatprep.subr.bf16.mxu0 %v2834
        %3890 = vmatpush1.bf16.msra.mxu0 %v2833
        %3891 = vmatprep.subr.bf16.mxu0 %v2837
        %3892 = vmatpush1.bf16.msra.mxu0 %v2836
        %3893 = vmatprep.subr.bf16.mxu0 %v2840
        %3894 = vmatpush1.bf16.msra.mxu0 %v2839
        %3895 = vmatprep.subr.bf16.mxu0 %v2843
        %3896 = vmatpush1.bf16.msra.mxu0 %v2842
        %3897 = vmatprep.subr.bf16.mxu0 %v2846
        %3898 = vmatpush1.bf16.msra.mxu0 %v2845
        %3899 = vmatprep.subr.bf16.mxu0 %v2849
        %3900 = vmatpush1.bf16.msra.mxu0 %v2848
        %3901 = vmatprep.subr.bf16.mxu0 %v2852
        %3902 = vmatpush1.bf16.msra.mxu0 %v2851
        %3903 = vmatprep.subr.bf16.mxu0 %v2855
        %3904 = vmatpush1.bf16.msra.mxu0 %v2854
        %3905 = vmatprep.mubr.bf16.mxu0 %v337
        %3906 = vmatmul.mubr.bf16.gmra.mrb[0].mxu0 %v336
        %v3907 = vpop.f32.mrb[0].mxu0
        %v3908 = vadd.f32 %v3835, %v3907
        %v3909 = vpop.f32.mrb[0].mxu0
        %v3910 = vadd.f32 %v3837, %v3909
        %v3911 = vpop.f32.mrb[0].mxu0
        %v3912 = vadd.f32 %v3839, %v3911
        %v3913 = vpop.f32.mrb[0].mxu0
        %v3914 = vadd.f32 %v3841, %v3913
        %3915 = vmatprep.mubr.bf16.mxu0 %v355
        %3916 = vmatmul.mubr.bf16.gmra.mrb[0].mxu0 %v354
        %v3917 = vpop.f32.mrb[0].mxu0
        %v3918 = vadd.f32 %v3845, %v3917
        %v3919 = vpop.f32.mrb[0].mxu0
        %v3920 = vadd.f32 %v3847, %v3919
        %v3921 = vpop.f32.mrb[0].mxu0
        %v3922 = vadd.f32 %v3849, %v3921
        %v3923 = vpop.f32.mrb[0].mxu0
        %v3924 = vadd.f32 %v3851, %v3923
        %3925 = vmatprep.mubr.bf16.mxu0 %v373
        %3926 = vmatmul.mubr.bf16.gmra.mrb[0].mxu0 %v372
        %v3927 = vpop.f32.mrb[0].mxu0
        %v3928 = vadd.f32 %v3855, %v3927
        %v3929 = vpop.f32.mrb[0].mxu0
        %v3930 = vadd.f32 %v3857, %v3929
        %v3931 = vpop.f32.mrb[0].mxu0
        %v3932 = vadd.f32 %v3859, %v3931
        %v3933 = vpop.f32.mrb[0].mxu0
        %v3934 = vadd.f32 %v3861, %v3933
        %3935 = vmatprep.mubr.bf16.mxu0 %v391
        %3936 = vmatmul.mubr.bf16.gmra.mrb[0].mxu0 %v390
        %v3937 = vpop.f32.mrb[0].mxu0
        %v3938 = vadd.f32 %v3865, %v3937
        %v3939 = vpop.f32.mrb[0].mxu0
        %v3940 = vadd.f32 %v3867, %v3939
        %v3941 = vpop.f32.mrb[0].mxu0
        %v3942 = vadd.f32 %v3869, %v3941
        %v3943 = vpop.f32.mrb[0].mxu0
        %v3944 = vadd.f32 %v3871, %v3943
        %3945 = vdwg.mxu0
        %3946 = vmatprep.subr.bf16.mxu0 0
        %3947 = vmatpush1.bf16.msra.mxu0 %v2427
        %3948 = vmatprep.subr.bf16.mxu0 0
        %3949 = vmatpush1.bf16.msra.mxu0 %v2430
        %3950 = vmatprep.subr.bf16.mxu0 0
        %3951 = vmatpush1.bf16.msra.mxu0 %v2433
        %3952 = vmatprep.subr.bf16.mxu0 0
        %3953 = vmatpush1.bf16.msra.mxu0 %v2436
        %3954 = vmatprep.subr.bf16.mxu0 0
        %3955 = vmatpush1.bf16.msra.mxu0 %v2439
        %3956 = vmatprep.subr.bf16.mxu0 0
        %3957 = vmatpush1.bf16.msra.mxu0 %v2442
        %3958 = vmatprep.subr.bf16.mxu0 0
        %3959 = vmatpush1.bf16.msra.mxu0 %v2445
        %3960 = vmatprep.subr.bf16.mxu0 0
        %3961 = vmatpush1.bf16.msra.mxu0 %v2448
        %3962 = vmatprep.subr.bf16.mxu0 0
        %3963 = vmatpush1.bf16.msra.mxu0 %v2451
        %3964 = vmatprep.subr.bf16.mxu0 0
        %3965 = vmatpush1.bf16.msra.mxu0 %v2454
        %3966 = vmatprep.subr.bf16.mxu0 0
        %3967 = vmatpush1.bf16.msra.mxu0 %v2457
        %3968 = vmatprep.subr.bf16.mxu0 0
        %3969 = vmatpush1.bf16.msra.mxu0 %v2460
        %3970 = vmatprep.subr.bf16.mxu0 0
        %3971 = vmatpush1.bf16.msra.mxu0 %v2463
        %3972 = vmatprep.subr.bf16.mxu0 0
        %3973 = vmatpush1.bf16.msra.mxu0 %v2466
        %3974 = vmatprep.subr.bf16.mxu0 0
        %3975 = vmatpush1.bf16.msra.mxu0 %v2469
        %3976 = vmatprep.subr.bf16.mxu0 0
        %3977 = vmatpush1.bf16.msra.mxu0 %v2472
        %3978 = vmatprep.mubr.bf16.mxu0 %v321
        %3979 = vmatmul.mubr.bf16.gmra.mrb[0].mxu0 %v320
        %v3980 = vpop.f32.mrb[0].mxu0
        %v3981 = vadd.f32 %v981, %v3980
        %v3982 = vpop.f32.mrb[0].mxu0
        %v3983 = vpop.f32.mrb[0].mxu0
        %v3984 = vadd.f32 %v981, %v3983
        %v3985 = vpop.f32.mrb[0].mxu0
        %3986 = vmatprep.mubr.bf16.mxu0 %v339
        %3987 = vmatmul.mubr.bf16.gmra.mrb[0].mxu0 %v338
        %v3988 = vpop.f32.mrb[0].mxu0
        %v3989 = vadd.f32 %v981, %v3988
        %v3990 = vpop.f32.mrb[0].mxu0
        %v3991 = vpop.f32.mrb[0].mxu0
        %v3992 = vadd.f32 %v981, %v3991
        %v3993 = vpop.f32.mrb[0].mxu0
        %3994 = vmatprep.mubr.bf16.mxu0 %v357
        %3995 = vmatmul.mubr.bf16.gmra.mrb[0].mxu0 %v356
        %v3996 = vpop.f32.mrb[0].mxu0
        %v3997 = vadd.f32 %v981, %v3996
        %v3998 = vpop.f32.mrb[0].mxu0
        %v3999 = vpop.f32.mrb[0].mxu0
        %v4000 = vadd.f32 %v981, %v3999
        %v4001 = vpop.f32.mrb[0].mxu0
        %4002 = vmatprep.mubr.bf16.mxu0 %v375
        %4003 = vmatmul.mubr.bf16.gmra.mrb[0].mxu0 %v374
        %v4004 = vpop.f32.mrb[0].mxu0
        %v4005 = vadd.f32 %v981, %v4004
        %v4006 = vpop.f32.mrb[0].mxu0
        %v4007 = vpop.f32.mrb[0].mxu0
        %v4008 = vadd.f32 %v981, %v4007
        %v4009 = vpop.f32.mrb[0].mxu0
        %4010 = vdwg.mxu0
        %4011 = vmatprep.subr.bf16.mxu0 0
        %4012 = vmatpush1.bf16.msra.mxu0 %v2475
        %4013 = vmatprep.subr.bf16.mxu0 0
        %4014 = vmatpush1.bf16.msra.mxu0 %v2478
        %4015 = vmatprep.subr.bf16.mxu0 0
        %4016 = vmatpush1.bf16.msra.mxu0 %v2481
        %4017 = vmatprep.subr.bf16.mxu0 0
        %4018 = vmatpush1.bf16.msra.mxu0 %v2484
        %4019 = vmatprep.subr.bf16.mxu0 0
        %4020 = vmatpush1.bf16.msra.mxu0 %v2487
        %4021 = vmatprep.subr.bf16.mxu0 0
        %4022 = vmatpush1.bf16.msra.mxu0 %v2490
        %4023 = vmatprep.subr.bf16.mxu0 0
        %4024 = vmatpush1.bf16.msra.mxu0 %v2493
        %4025 = vmatprep.subr.bf16.mxu0 0
        %4026 = vmatpush1.bf16.msra.mxu0 %v2496
        %4027 = vmatprep.subr.bf16.mxu0 0
        %4028 = vmatpush1.bf16.msra.mxu0 %v2499
        %4029 = vmatprep.subr.bf16.mxu0 0
        %4030 = vmatpush1.bf16.msra.mxu0 %v2502
        %4031 = vmatprep.subr.bf16.mxu0 0
        %4032 = vmatpush1.bf16.msra.mxu0 %v2505
        %4033 = vmatprep.subr.bf16.mxu0 0
        %4034 = vmatpush1.bf16.msra.mxu0 %v2508
        %4035 = vmatprep.subr.bf16.mxu0 0
        %4036 = vmatpush1.bf16.msra.mxu0 %v2511
        %4037 = vmatprep.subr.bf16.mxu0 0
        %4038 = vmatpush1.bf16.msra.mxu0 %v2514
        %4039 = vmatprep.subr.bf16.mxu0 0
        %4040 = vmatpush1.bf16.msra.mxu0 %v2517
        %4041 = vmatprep.subr.bf16.mxu0 0
        %4042 = vmatpush1.bf16.msra.mxu0 %v2520
        %4043 = vmatprep.mubr.bf16.mxu0 %v323
        %4044 = vmatmul.mubr.bf16.gmra.mrb[0].mxu0 %v322
        %v4045 = vpop.f32.mrb[0].mxu0
        %v4046 = vadd.f32 %v3981, %v4045
        %v4047 = vpop.f32.mrb[0].mxu0
        %v4048 = vpop.f32.mrb[0].mxu0
        %v4049 = vadd.f32 %v3984, %v4048
        %v4050 = vpop.f32.mrb[0].mxu0
        %4051 = vmatprep.mubr.bf16.mxu0 %v341
        %4052 = vmatmul.mubr.bf16.gmra.mrb[0].mxu0 %v340
        %v4053 = vpop.f32.mrb[0].mxu0
        %v4054 = vadd.f32 %v3989, %v4053
        %v4055 = vpop.f32.mrb[0].mxu0
        %v4056 = vpop.f32.mrb[0].mxu0
        %v4057 = vadd.f32 %v3992, %v4056
        %v4058 = vpop.f32.mrb[0].mxu0
        %4059 = vmatprep.mubr.bf16.mxu0 %v359
        %4060 = vmatmul.mubr.bf16.gmra.mrb[0].mxu0 %v358
        %v4061 = vpop.f32.mrb[0].mxu0
        %v4062 = vadd.f32 %v3997, %v4061
        %v4063 = vpop.f32.mrb[0].mxu0
        %v4064 = vpop.f32.mrb[0].mxu0
        %v4065 = vadd.f32 %v4000, %v4064
        %v4066 = vpop.f32.mrb[0].mxu0
        %4067 = vmatprep.mubr.bf16.mxu0 %v377
        %4068 = vmatmul.mubr.bf16.gmra.mrb[0].mxu0 %v376
        %v4069 = vpop.f32.mrb[0].mxu0
        %v4070 = vadd.f32 %v4005, %v4069
        %v4071 = vpop.f32.mrb[0].mxu0
        %v4072 = vpop.f32.mrb[0].mxu0
        %v4073 = vadd.f32 %v4008, %v4072
        %v4074 = vpop.f32.mrb[0].mxu0
        %4075 = vdwg.mxu0
        %4076 = vmatprep.subr.bf16.mxu0 0
        %4077 = vmatpush1.bf16.msra.mxu0 %v2523
        %4078 = vmatprep.subr.bf16.mxu0 0
        %4079 = vmatpush1.bf16.msra.mxu0 %v2526
        %4080 = vmatprep.subr.bf16.mxu0 0
        %4081 = vmatpush1.bf16.msra.mxu0 %v2529
        %4082 = vmatprep.subr.bf16.mxu0 0
        %4083 = vmatpush1.bf16.msra.mxu0 %v2532
        %4084 = vmatprep.subr.bf16.mxu0 0
        %4085 = vmatpush1.bf16.msra.mxu0 %v2535
        %4086 = vmatprep.subr.bf16.mxu0 0
        %4087 = vmatpush1.bf16.msra.mxu0 %v2538
        %4088 = vmatprep.subr.bf16.mxu0 0
        %4089 = vmatpush1.bf16.msra.mxu0 %v2541
        %4090 = vmatprep.subr.bf16.mxu0 0
        %4091 = vmatpush1.bf16.msra.mxu0 %v2544
        %4092 = vmatprep.subr.bf16.mxu0 0
        %4093 = vmatpush1.bf16.msra.mxu0 %v2547
        %4094 = vmatprep.subr.bf16.mxu0 0
        %4095 = vmatpush1.bf16.msra.mxu0 %v2550
        %4096 = vmatprep.subr.bf16.mxu0 0
        %4097 = vmatpush1.bf16.msra.mxu0 %v2553
        %4098 = vmatprep.subr.bf16.mxu0 0
        %4099 = vmatpush1.bf16.msra.mxu0 %v2556
        %4100 = vmatprep.subr.bf16.mxu0 0
        %4101 = vmatpush1.bf16.msra.mxu0 %v2559
        %4102 = vmatprep.subr.bf16.mxu0 0
        %4103 = vmatpush1.bf16.msra.mxu0 %v2562
        %4104 = vmatprep.subr.bf16.mxu0 0
        %4105 = vmatpush1.bf16.msra.mxu0 %v2565
        %4106 = vmatprep.subr.bf16.mxu0 0
        %4107 = vmatpush1.bf16.msra.mxu0 %v2568
        %4108 = vmatprep.mubr.bf16.mxu0 %v325
        %4109 = vmatmul.mubr.bf16.gmra.mrb[0].mxu0 %v324
        %v4110 = vpop.f32.mrb[0].mxu0
        %v4111 = vadd.f32 %v4046, %v4110
        %v4112 = vpop.f32.mrb[0].mxu0
        %v4113 = vpop.f32.mrb[0].mxu0
        %v4114 = vadd.f32 %v4049, %v4113
        %v4115 = vpop.f32.mrb[0].mxu0
        %4116 = vmatprep.mubr.bf16.mxu0 %v343
        %4117 = vmatmul.mubr.bf16.gmra.mrb[0].mxu0 %v342
        %v4118 = vpop.f32.mrb[0].mxu0
        %v4119 = vadd.f32 %v4054, %v4118
        %v4120 = vpop.f32.mrb[0].mxu0
        %v4121 = vpop.f32.mrb[0].mxu0
        %v4122 = vadd.f32 %v4057, %v4121
        %v4123 = vpop.f32.mrb[0].mxu0
        %4124 = vmatprep.mubr.bf16.mxu0 %v361
        %4125 = vmatmul.mubr.bf16.gmra.mrb[0].mxu0 %v360
        %v4126 = vpop.f32.mrb[0].mxu0
        %v4127 = vadd.f32 %v4062, %v4126
        %v4128 = vpop.f32.mrb[0].mxu0
        %v4129 = vpop.f32.mrb[0].mxu0
        %v4130 = vadd.f32 %v4065, %v4129
        %v4131 = vpop.f32.mrb[0].mxu0
        %4132 = vmatprep.mubr.bf16.mxu0 %v379
        %4133 = vmatmul.mubr.bf16.gmra.mrb[0].mxu0 %v378
        %v4134 = vpop.f32.mrb[0].mxu0
        %v4135 = vadd.f32 %v4070, %v4134
        %v4136 = vpop.f32.mrb[0].mxu0
        %v4137 = vpop.f32.mrb[0].mxu0
        %v4138 = vadd.f32 %v4073, %v4137
        %v4139 = vpop.f32.mrb[0].mxu0
        %4140 = vdwg.mxu0
        %4141 = vmatprep.subr.bf16.mxu0 0
        %4142 = vmatpush1.bf16.msra.mxu0 %v2571
        %4143 = vmatprep.subr.bf16.mxu0 0
        %4144 = vmatpush1.bf16.msra.mxu0 %v2574
        %4145 = vmatprep.subr.bf16.mxu0 0
        %4146 = vmatpush1.bf16.msra.mxu0 %v2577
        %4147 = vmatprep.subr.bf16.mxu0 0
        %4148 = vmatpush1.bf16.msra.mxu0 %v2580
        %4149 = vmatprep.subr.bf16.mxu0 0
        %4150 = vmatpush1.bf16.msra.mxu0 %v2583
        %4151 = vmatprep.subr.bf16.mxu0 0
        %4152 = vmatpush1.bf16.msra.mxu0 %v2586
        %4153 = vmatprep.subr.bf16.mxu0 0
        %4154 = vmatpush1.bf16.msra.mxu0 %v2589
        %4155 = vmatprep.subr.bf16.mxu0 0
        %4156 = vmatpush1.bf16.msra.mxu0 %v2592
        %4157 = vmatprep.subr.bf16.mxu0 0
        %4158 = vmatpush1.bf16.msra.mxu0 %v2595
        %4159 = vmatprep.subr.bf16.mxu0 0
        %4160 = vmatpush1.bf16.msra.mxu0 %v2598
        %4161 = vmatprep.subr.bf16.mxu0 0
        %4162 = vmatpush1.bf16.msra.mxu0 %v2601
        %4163 = vmatprep.subr.bf16.mxu0 0
        %4164 = vmatpush1.bf16.msra.mxu0 %v2604
        %4165 = vmatprep.subr.bf16.mxu0 0
        %4166 = vmatpush1.bf16.msra.mxu0 %v2607
        %4167 = vmatprep.subr.bf16.mxu0 0
        %4168 = vmatpush1.bf16.msra.mxu0 %v2610
        %4169 = vmatprep.subr.bf16.mxu0 0
        %4170 = vmatpush1.bf16.msra.mxu0 %v2613
        %4171 = vmatprep.subr.bf16.mxu0 0
        %4172 = vmatpush1.bf16.msra.mxu0 %v2616
        %4173 = vmatprep.mubr.bf16.mxu0 %v327
        %4174 = vmatmul.mubr.bf16.gmra.mrb[0].mxu0 %v326
        %v4175 = vpop.f32.mrb[0].mxu0
        %v4176 = vadd.f32 %v4111, %v4175
        %v4177 = vpop.f32.mrb[0].mxu0
        %v4178 = vpop.f32.mrb[0].mxu0
        %v4179 = vadd.f32 %v4114, %v4178
        %v4180 = vpop.f32.mrb[0].mxu0
        %4181 = vmatprep.mubr.bf16.mxu0 %v345
        %4182 = vmatmul.mubr.bf16.gmra.mrb[0].mxu0 %v344
        %v4183 = vpop.f32.mrb[0].mxu0
        %v4184 = vadd.f32 %v4119, %v4183
        %v4185 = vpop.f32.mrb[0].mxu0
        %v4186 = vpop.f32.mrb[0].mxu0
        %v4187 = vadd.f32 %v4122, %v4186
        %v4188 = vpop.f32.mrb[0].mxu0
        %4189 = vmatprep.mubr.bf16.mxu0 %v363
        %4190 = vmatmul.mubr.bf16.gmra.mrb[0].mxu0 %v362
        %v4191 = vpop.f32.mrb[0].mxu0
        %v4192 = vadd.f32 %v4127, %v4191
        %v4193 = vpop.f32.mrb[0].mxu0
        %v4194 = vpop.f32.mrb[0].mxu0
        %v4195 = vadd.f32 %v4130, %v4194
        %v4196 = vpop.f32.mrb[0].mxu0
        %4197 = vmatprep.mubr.bf16.mxu0 %v381
        %4198 = vmatmul.mubr.bf16.gmra.mrb[0].mxu0 %v380
        %v4199 = vpop.f32.mrb[0].mxu0
        %v4200 = vadd.f32 %v4135, %v4199
        %v4201 = vpop.f32.mrb[0].mxu0
        %v4202 = vpop.f32.mrb[0].mxu0
        %v4203 = vadd.f32 %v4138, %v4202
        %v4204 = vpop.f32.mrb[0].mxu0
        %4205 = vdwg.mxu0
        %4206 = vmatprep.subr.bf16.mxu0 0
        %4207 = vmatpush1.bf16.msra.mxu0 %v2619
        %4208 = vmatprep.subr.bf16.mxu0 0
        %4209 = vmatpush1.bf16.msra.mxu0 %v2622
        %4210 = vmatprep.subr.bf16.mxu0 0
        %4211 = vmatpush1.bf16.msra.mxu0 %v2625
        %4212 = vmatprep.subr.bf16.mxu0 0
        %4213 = vmatpush1.bf16.msra.mxu0 %v2628
        %4214 = vmatprep.subr.bf16.mxu0 0
        %4215 = vmatpush1.bf16.msra.mxu0 %v2631
        %4216 = vmatprep.subr.bf16.mxu0 0
        %4217 = vmatpush1.bf16.msra.mxu0 %v2634
        %4218 = vmatprep.subr.bf16.mxu0 0
        %4219 = vmatpush1.bf16.msra.mxu0 %v2637
        %4220 = vmatprep.subr.bf16.mxu0 0
        %4221 = vmatpush1.bf16.msra.mxu0 %v2640
        %4222 = vmatprep.subr.bf16.mxu0 0
        %4223 = vmatpush1.bf16.msra.mxu0 %v2643
        %4224 = vmatprep.subr.bf16.mxu0 0
        %4225 = vmatpush1.bf16.msra.mxu0 %v2646
        %4226 = vmatprep.subr.bf16.mxu0 0
        %4227 = vmatpush1.bf16.msra.mxu0 %v2649
        %4228 = vmatprep.subr.bf16.mxu0 0
        %4229 = vmatpush1.bf16.msra.mxu0 %v2652
        %4230 = vmatprep.subr.bf16.mxu0 0
        %4231 = vmatpush1.bf16.msra.mxu0 %v2655
        %4232 = vmatprep.subr.bf16.mxu0 0
        %4233 = vmatpush1.bf16.msra.mxu0 %v2658
        %4234 = vmatprep.subr.bf16.mxu0 0
        %4235 = vmatpush1.bf16.msra.mxu0 %v2661
        %4236 = vmatprep.subr.bf16.mxu0 0
        %4237 = vmatpush1.bf16.msra.mxu0 %v2664
        %4238 = vmatprep.mubr.bf16.mxu0 %v329
        %4239 = vmatmul.mubr.bf16.gmra.mrb[0].mxu0 %v328
        %v4240 = vpop.f32.mrb[0].mxu0
        %v4241 = vadd.f32 %v4176, %v4240
        %v4242 = vpop.f32.mrb[0].mxu0
        %v4243 = vpop.f32.mrb[0].mxu0
        %v4244 = vadd.f32 %v4179, %v4243
        %v4245 = vpop.f32.mrb[0].mxu0
        %4246 = vmatprep.mubr.bf16.mxu0 %v347
        %4247 = vmatmul.mubr.bf16.gmra.mrb[0].mxu0 %v346
        %v4248 = vpop.f32.mrb[0].mxu0
        %v4249 = vadd.f32 %v4184, %v4248
        %v4250 = vpop.f32.mrb[0].mxu0
        %v4251 = vpop.f32.mrb[0].mxu0
        %v4252 = vadd.f32 %v4187, %v4251
        %v4253 = vpop.f32.mrb[0].mxu0
        %4254 = vmatprep.mubr.bf16.mxu0 %v365
        %4255 = vmatmul.mubr.bf16.gmra.mrb[0].mxu0 %v364
        %v4256 = vpop.f32.mrb[0].mxu0
        %v4257 = vadd.f32 %v4192, %v4256
        %v4258 = vpop.f32.mrb[0].mxu0
        %v4259 = vpop.f32.mrb[0].mxu0
        %v4260 = vadd.f32 %v4195, %v4259
        %v4261 = vpop.f32.mrb[0].mxu0
        %4262 = vmatprep.mubr.bf16.mxu0 %v383
        %4263 = vmatmul.mubr.bf16.gmra.mrb[0].mxu0 %v382
        %v4264 = vpop.f32.mrb[0].mxu0
        %v4265 = vadd.f32 %v4200, %v4264
        %v4266 = vpop.f32.mrb[0].mxu0
        %v4267 = vpop.f32.mrb[0].mxu0
        %v4268 = vadd.f32 %v4203, %v4267
        %v4269 = vpop.f32.mrb[0].mxu0
        %4270 = vdwg.mxu0
        %4271 = vmatprep.subr.bf16.mxu0 0
        %4272 = vmatpush1.bf16.msra.mxu0 %v2667
        %4273 = vmatprep.subr.bf16.mxu0 0
        %4274 = vmatpush1.bf16.msra.mxu0 %v2670
        %4275 = vmatprep.subr.bf16.mxu0 0
        %4276 = vmatpush1.bf16.msra.mxu0 %v2673
        %4277 = vmatprep.subr.bf16.mxu0 0
        %4278 = vmatpush1.bf16.msra.mxu0 %v2676
        %4279 = vmatprep.subr.bf16.mxu0 0
        %4280 = vmatpush1.bf16.msra.mxu0 %v2679
        %4281 = vmatprep.subr.bf16.mxu0 0
        %4282 = vmatpush1.bf16.msra.mxu0 %v2682
        %4283 = vmatprep.subr.bf16.mxu0 0
        %4284 = vmatpush1.bf16.msra.mxu0 %v2685
        %4285 = vmatprep.subr.bf16.mxu0 0
        %4286 = vmatpush1.bf16.msra.mxu0 %v2688
        %4287 = vmatprep.subr.bf16.mxu0 0
        %4288 = vmatpush1.bf16.msra.mxu0 %v2691
        %4289 = vmatprep.subr.bf16.mxu0 0
        %4290 = vmatpush1.bf16.msra.mxu0 %v2694
        %4291 = vmatprep.subr.bf16.mxu0 0
        %4292 = vmatpush1.bf16.msra.mxu0 %v2697
        %4293 = vmatprep.subr.bf16.mxu0 0
        %4294 = vmatpush1.bf16.msra.mxu0 %v2700
        %4295 = vmatprep.subr.bf16.mxu0 0
        %4296 = vmatpush1.bf16.msra.mxu0 %v2703
        %4297 = vmatprep.subr.bf16.mxu0 0
        %4298 = vmatpush1.bf16.msra.mxu0 %v2706
        %4299 = vmatprep.subr.bf16.mxu0 0
        %4300 = vmatpush1.bf16.msra.mxu0 %v2709
        %4301 = vmatprep.subr.bf16.mxu0 0
        %4302 = vmatpush1.bf16.msra.mxu0 %v2712
        %4303 = vmatprep.mubr.bf16.mxu0 %v331
        %4304 = vmatmul.mubr.bf16.gmra.mrb[0].mxu0 %v330
        %v4305 = vpop.f32.mrb[0].mxu0
        %v4306 = vadd.f32 %v4241, %v4305
        %v4307 = vpop.f32.mrb[0].mxu0
        %v4308 = vpop.f32.mrb[0].mxu0
        %v4309 = vadd.f32 %v4244, %v4308
        %v4310 = vpop.f32.mrb[0].mxu0
        %4311 = vmatprep.mubr.bf16.mxu0 %v349
        %4312 = vmatmul.mubr.bf16.gmra.mrb[0].mxu0 %v348
        %v4313 = vpop.f32.mrb[0].mxu0
        %v4314 = vadd.f32 %v4249, %v4313
        %v4315 = vpop.f32.mrb[0].mxu0
        %v4316 = vpop.f32.mrb[0].mxu0
        %v4317 = vadd.f32 %v4252, %v4316
        %v4318 = vpop.f32.mrb[0].mxu0
        %4319 = vmatprep.mubr.bf16.mxu0 %v367
        %4320 = vmatmul.mubr.bf16.gmra.mrb[0].mxu0 %v366
        %v4321 = vpop.f32.mrb[0].mxu0
        %v4322 = vadd.f32 %v4257, %v4321
        %v4323 = vpop.f32.mrb[0].mxu0
        %v4324 = vpop.f32.mrb[0].mxu0
        %v4325 = vadd.f32 %v4260, %v4324
        %v4326 = vpop.f32.mrb[0].mxu0
        %4327 = vmatprep.mubr.bf16.mxu0 %v385
        %4328 = vmatmul.mubr.bf16.gmra.mrb[0].mxu0 %v384
        %v4329 = vpop.f32.mrb[0].mxu0
        %v4330 = vadd.f32 %v4265, %v4329
        %v4331 = vpop.f32.mrb[0].mxu0
        %v4332 = vpop.f32.mrb[0].mxu0
        %v4333 = vadd.f32 %v4268, %v4332
        %v4334 = vpop.f32.mrb[0].mxu0
        %4335 = vdwg.mxu0
        %4336 = vmatprep.subr.bf16.mxu0 0
        %4337 = vmatpush1.bf16.msra.mxu0 %v2715
        %4338 = vmatprep.subr.bf16.mxu0 0
        %4339 = vmatpush1.bf16.msra.mxu0 %v2718
        %4340 = vmatprep.subr.bf16.mxu0 0
        %4341 = vmatpush1.bf16.msra.mxu0 %v2721
        %4342 = vmatprep.subr.bf16.mxu0 0
        %4343 = vmatpush1.bf16.msra.mxu0 %v2724
        %4344 = vmatprep.subr.bf16.mxu0 0
        %4345 = vmatpush1.bf16.msra.mxu0 %v2727
        %4346 = vmatprep.subr.bf16.mxu0 0
        %4347 = vmatpush1.bf16.msra.mxu0 %v2730
        %4348 = vmatprep.subr.bf16.mxu0 0
        %4349 = vmatpush1.bf16.msra.mxu0 %v2733
        %4350 = vmatprep.subr.bf16.mxu0 0
        %4351 = vmatpush1.bf16.msra.mxu0 %v2736
        %4352 = vmatprep.subr.bf16.mxu0 0
        %4353 = vmatpush1.bf16.msra.mxu0 %v2739
        %4354 = vmatprep.subr.bf16.mxu0 0
        %4355 = vmatpush1.bf16.msra.mxu0 %v2742
        %4356 = vmatprep.subr.bf16.mxu0 0
        %4357 = vmatpush1.bf16.msra.mxu0 %v2745
        %4358 = vmatprep.subr.bf16.mxu0 0
        %4359 = vmatpush1.bf16.msra.mxu0 %v2748
        %4360 = vmatprep.subr.bf16.mxu0 0
        %4361 = vmatpush1.bf16.msra.mxu0 %v2751
        %4362 = vmatprep.subr.bf16.mxu0 0
        %4363 = vmatpush1.bf16.msra.mxu0 %v2754
        %4364 = vmatprep.subr.bf16.mxu0 0
        %4365 = vmatpush1.bf16.msra.mxu0 %v2757
        %4366 = vmatprep.subr.bf16.mxu0 0
        %4367 = vmatpush1.bf16.msra.mxu0 %v2760
        %4368 = vmatprep.mubr.bf16.mxu0 %v333
        %4369 = vmatmul.mubr.bf16.gmra.mrb[0].mxu0 %v332
        %v4370 = vpop.f32.mrb[0].mxu0
        %v4371 = vadd.f32 %v4306, %v4370
        %v4372 = vpop.f32.mrb[0].mxu0
        %v4373 = vpop.f32.mrb[0].mxu0
        %v4374 = vadd.f32 %v4309, %v4373
        %v4375 = vpop.f32.mrb[0].mxu0
        %4376 = vmatprep.mubr.bf16.mxu0 %v351
        %4377 = vmatmul.mubr.bf16.gmra.mrb[0].mxu0 %v350
        %v4378 = vpop.f32.mrb[0].mxu0
        %v4379 = vadd.f32 %v4314, %v4378
        %v4380 = vpop.f32.mrb[0].mxu0
        %v4381 = vpop.f32.mrb[0].mxu0
        %v4382 = vadd.f32 %v4317, %v4381
        %v4383 = vpop.f32.mrb[0].mxu0
        %4384 = vmatprep.mubr.bf16.mxu0 %v369
        %4385 = vmatmul.mubr.bf16.gmra.mrb[0].mxu0 %v368
        %v4386 = vpop.f32.mrb[0].mxu0
        %v4387 = vadd.f32 %v4322, %v4386
        %v4388 = vpop.f32.mrb[0].mxu0
        %v4389 = vpop.f32.mrb[0].mxu0
        %v4390 = vadd.f32 %v4325, %v4389
        %v4391 = vpop.f32.mrb[0].mxu0
        %4392 = vmatprep.mubr.bf16.mxu0 %v387
        %4393 = vmatmul.mubr.bf16.gmra.mrb[0].mxu0 %v386
        %v4394 = vpop.f32.mrb[0].mxu0
        %v4395 = vadd.f32 %v4330, %v4394
        %v4396 = vpop.f32.mrb[0].mxu0
        %v4397 = vpop.f32.mrb[0].mxu0
        %v4398 = vadd.f32 %v4333, %v4397
        %v4399 = vpop.f32.mrb[0].mxu0
        %4400 = vdwg.mxu0
        %4401 = vmatprep.subr.bf16.mxu0 0
        %4402 = vmatpush1.bf16.msra.mxu0 %v2763
        %4403 = vmatprep.subr.bf16.mxu0 0
        %4404 = vmatpush1.bf16.msra.mxu0 %v2766
        %4405 = vmatprep.subr.bf16.mxu0 0
        %4406 = vmatpush1.bf16.msra.mxu0 %v2769
        %4407 = vmatprep.subr.bf16.mxu0 0
        %4408 = vmatpush1.bf16.msra.mxu0 %v2772
        %4409 = vmatprep.subr.bf16.mxu0 0
        %4410 = vmatpush1.bf16.msra.mxu0 %v2775
        %4411 = vmatprep.subr.bf16.mxu0 0
        %4412 = vmatpush1.bf16.msra.mxu0 %v2778
        %4413 = vmatprep.subr.bf16.mxu0 0
        %4414 = vmatpush1.bf16.msra.mxu0 %v2781
        %4415 = vmatprep.subr.bf16.mxu0 0
        %4416 = vmatpush1.bf16.msra.mxu0 %v2784
        %4417 = vmatprep.subr.bf16.mxu0 0
        %4418 = vmatpush1.bf16.msra.mxu0 %v2787
        %4419 = vmatprep.subr.bf16.mxu0 0
        %4420 = vmatpush1.bf16.msra.mxu0 %v2790
        %4421 = vmatprep.subr.bf16.mxu0 0
        %4422 = vmatpush1.bf16.msra.mxu0 %v2793
        %4423 = vmatprep.subr.bf16.mxu0 0
        %4424 = vmatpush1.bf16.msra.mxu0 %v2796
        %4425 = vmatprep.subr.bf16.mxu0 0
        %4426 = vmatpush1.bf16.msra.mxu0 %v2799
        %4427 = vmatprep.subr.bf16.mxu0 0
        %4428 = vmatpush1.bf16.msra.mxu0 %v2802
        %4429 = vmatprep.subr.bf16.mxu0 0
        %4430 = vmatpush1.bf16.msra.mxu0 %v2805
        %4431 = vmatprep.subr.bf16.mxu0 0
        %4432 = vmatpush1.bf16.msra.mxu0 %v2808
        %4433 = vmatprep.mubr.bf16.mxu0 %v335
        %4434 = vmatmul.mubr.bf16.gmra.mrb[0].mxu0 %v334
        %v4435 = vpop.f32.mrb[0].mxu0
        %v4436 = vadd.f32 %v4371, %v4435
        %v4437 = vpop.f32.mrb[0].mxu0
        %v4438 = vpop.f32.mrb[0].mxu0
        %v4439 = vadd.f32 %v4374, %v4438
        %v4440 = vpop.f32.mrb[0].mxu0
        %4441 = vmatprep.mubr.bf16.mxu0 %v353
        %4442 = vmatmul.mubr.bf16.gmra.mrb[0].mxu0 %v352
        %v4443 = vpop.f32.mrb[0].mxu0
        %v4444 = vadd.f32 %v4379, %v4443
        %v4445 = vpop.f32.mrb[0].mxu0
        %v4446 = vpop.f32.mrb[0].mxu0
        %v4447 = vadd.f32 %v4382, %v4446
        %v4448 = vpop.f32.mrb[0].mxu0
        %4449 = vmatprep.mubr.bf16.mxu0 %v371
        %4450 = vmatmul.mubr.bf16.gmra.mrb[0].mxu0 %v370
        %v4451 = vpop.f32.mrb[0].mxu0
        %v4452 = vadd.f32 %v4387, %v4451
        %v4453 = vpop.f32.mrb[0].mxu0
        %v4454 = vpop.f32.mrb[0].mxu0
        %v4455 = vadd.f32 %v4390, %v4454
        %v4456 = vpop.f32.mrb[0].mxu0
        %4457 = vmatprep.mubr.bf16.mxu0 %v389
        %4458 = vmatmul.mubr.bf16.gmra.mrb[0].mxu0 %v388
        %v4459 = vpop.f32.mrb[0].mxu0
        %v4460 = vadd.f32 %v4395, %v4459
        %v4461 = vpop.f32.mrb[0].mxu0
        %v4462 = vpop.f32.mrb[0].mxu0
        %v4463 = vadd.f32 %v4398, %v4462
        %v4464 = vpop.f32.mrb[0].mxu0
        %4465 = vdwg.mxu0
        %4466 = vmatprep.subr.bf16.mxu0 0
        %4467 = vmatpush1.bf16.msra.mxu0 %v2811
        %4468 = vmatprep.subr.bf16.mxu0 0
        %4469 = vmatpush1.bf16.msra.mxu0 %v2814
        %4470 = vmatprep.subr.bf16.mxu0 0
        %4471 = vmatpush1.bf16.msra.mxu0 %v2817
        %4472 = vmatprep.subr.bf16.mxu0 0
        %4473 = vmatpush1.bf16.msra.mxu0 %v2820
        %4474 = vmatprep.subr.bf16.mxu0 0
        %4475 = vmatpush1.bf16.msra.mxu0 %v2823
        %4476 = vmatprep.subr.bf16.mxu0 0
        %4477 = vmatpush1.bf16.msra.mxu0 %v2826
        %4478 = vmatprep.subr.bf16.mxu0 0
        %4479 = vmatpush1.bf16.msra.mxu0 %v2829
        %4480 = vmatprep.subr.bf16.mxu0 0
        %4481 = vmatpush1.bf16.msra.mxu0 %v2832
        %4482 = vmatprep.subr.bf16.mxu0 0
        %4483 = vmatpush1.bf16.msra.mxu0 %v2835
        %4484 = vmatprep.subr.bf16.mxu0 0
        %4485 = vmatpush1.bf16.msra.mxu0 %v2838
        %4486 = vmatprep.subr.bf16.mxu0 0
        %4487 = vmatpush1.bf16.msra.mxu0 %v2841
        %4488 = vmatprep.subr.bf16.mxu0 0
        %4489 = vmatpush1.bf16.msra.mxu0 %v2844
        %4490 = vmatprep.subr.bf16.mxu0 0
        %4491 = vmatpush1.bf16.msra.mxu0 %v2847
        %4492 = vmatprep.subr.bf16.mxu0 0
        %4493 = vmatpush1.bf16.msra.mxu0 %v2850
        %4494 = vmatprep.subr.bf16.mxu0 0
        %4495 = vmatpush1.bf16.msra.mxu0 %v2853
        %4496 = vmatprep.subr.bf16.mxu0 0
        %4497 = vmatpush1.bf16.msra.mxu0 %v2856
        %4498 = vmatprep.mubr.bf16.mxu0 %v337
        %4499 = vmatmul.mubr.bf16.gmra.mrb[0].mxu0 %v336
        %v4500 = vpop.f32.mrb[0].mxu0
        %v4501 = vadd.f32 %v4436, %v4500
        %v4502 = vpop.f32.mrb[0].mxu0
        %v4503 = vpop.f32.mrb[0].mxu0
        %v4504 = vadd.f32 %v4439, %v4503
        %v4505 = vpop.f32.mrb[0].mxu0
        %4506 = vmatprep.mubr.bf16.mxu0 %v355
        %4507 = vmatmul.mubr.bf16.gmra.mrb[0].mxu0 %v354
        %v4508 = vpop.f32.mrb[0].mxu0
        %v4509 = vadd.f32 %v4444, %v4508
        %v4510 = vpop.f32.mrb[0].mxu0
        %v4511 = vpop.f32.mrb[0].mxu0
        %v4512 = vadd.f32 %v4447, %v4511
        %v4513 = vpop.f32.mrb[0].mxu0
        %4514 = vmatprep.mubr.bf16.mxu0 %v373
        %4515 = vmatmul.mubr.bf16.gmra.mrb[0].mxu0 %v372
        %v4516 = vpop.f32.mrb[0].mxu0
        %v4517 = vadd.f32 %v4452, %v4516
        %v4518 = vpop.f32.mrb[0].mxu0
        %v4519 = vpop.f32.mrb[0].mxu0
        %v4520 = vadd.f32 %v4455, %v4519
        %v4521 = vpop.f32.mrb[0].mxu0
        %4522 = vmatprep.mubr.bf16.mxu0 %v391
        %4523 = vmatmul.mubr.bf16.gmra.mrb[0].mxu0 %v390
        %v4524 = vpop.f32.mrb[0].mxu0
        %v4525 = vadd.f32 %v4460, %v4524
        %v4526 = vpop.f32.mrb[0].mxu0
        %v4527 = vpop.f32.mrb[0].mxu0
        %v4528 = vadd.f32 %v4463, %v4527
        %v4529 = vpop.f32.mrb[0].mxu0
        %4530 = vdwg.mxu0
        %v4531 = vmax.f32 %v3908, 0.0
        %v4532 = vmax.f32 %v3910, 0.0
        %v4533 = vmax.f32 %v4501, 0.0
        %v4534 = vmax.f32 %v3912, 0.0
        %v4535 = vmax.f32 %v3914, 0.0
        %v4536 = vmax.f32 %v4504, 0.0
        %v4537 = vmax.f32 %v3918, 0.0
        %v4538 = vmax.f32 %v3920, 0.0
        %v4539 = vmax.f32 %v4509, 0.0
        %v4540 = vmax.f32 %v3922, 0.0
        %v4541 = vmax.f32 %v3924, 0.0
        %v4542 = vmax.f32 %v4512, 0.0
        %v4543 = vmax.f32 %v3928, 0.0
        %v4544 = vmax.f32 %v3930, 0.0
        %v4545 = vmax.f32 %v4517, 0.0
        %v4546 = vmax.f32 %v3932, 0.0
        %v4547 = vmax.f32 %v3934, 0.0
        %v4548 = vmax.f32 %v4520, 0.0
        %v4549 = vmax.f32 %v3938, 0.0
        %v4550 = vmax.f32 %v3940, 0.0
        %v4551 = vmax.f32 %v4525, 0.0
        %v4552 = vmax.f32 %v3942, 0.0
        %v4553 = vmax.f32 %v3944, 0.0
        %v4554 = vmax.f32 %v4528, 0.0
        %v4555 = vmax.f32 %v176, %v178
        %v4556 = vmax.f32 %v177, %v179
        %v4557 = vmax.f32 %v194, %v196
        %v4558 = vmax.f32 %v195, %v197
        %v4559 = vmax.f32 %v212, %v214
        %v4560 = vmax.f32 %v213, %v215
        %v4561 = vmax.f32 %v230, %v232
        %v4562 = vmax.f32 %v231, %v233
        %v4563 = vmax.f32 %v248, %v250
        %v4564 = vmax.f32 %v249, %v251
        %v4565 = vmax.f32 %v266, %v268
        %v4566 = vmax.f32 %v267, %v269
        %v4567 = vmax.f32 %v284, %v286
        %v4568 = vmax.f32 %v285, %v287
        %v4569 = vmax.f32 %v302, %v304
        %v4570 = vmax.f32 %v303, %v305
        %v4571 = vmax.f32 %v4555, %v180
        %v4572 = vmax.f32 %v4556, %v181
        %v4573 = vmax.f32 %v4557, %v198
        %v4574 = vmax.f32 %v4558, %v199
        %v4575 = vmax.f32 %v4559, %v216
        %v4576 = vmax.f32 %v4560, %v217
        %v4577 = vmax.f32 %v4561, %v234
        %v4578 = vmax.f32 %v4562, %v235
        %v4579 = vmax.f32 %v4563, %v252
        %v4580 = vmax.f32 %v4564, %v253
        %v4581 = vmax.f32 %v4565, %v270
        %v4582 = vmax.f32 %v4566, %v271
        %v4583 = vmax.f32 %v4567, %v288
        %v4584 = vmax.f32 %v4568, %v289
        %v4585 = vmax.f32 %v4569, %v306
        %v4586 = vmax.f32 %v4570, %v307
        %v4587 = vmax.f32 %v4571, %v182
        %v4588 = vmax.f32 %v4572, %v183
        %v4589 = vmax.f32 %v4573, %v200
        %v4590 = vmax.f32 %v4574, %v201
        %v4591 = vmax.f32 %v4575, %v218
        %v4592 = vmax.f32 %v4576, %v219
        %v4593 = vmax.f32 %v4577, %v236
        %v4594 = vmax.f32 %v4578, %v237
        %v4595 = vmax.f32 %v4579, %v254
        %v4596 = vmax.f32 %v4580, %v255
        %v4597 = vmax.f32 %v4581, %v272
        %v4598 = vmax.f32 %v4582, %v273
        %v4599 = vmax.f32 %v4583, %v290
        %v4600 = vmax.f32 %v4584, %v291
        %v4601 = vmax.f32 %v4585, %v308
        %v4602 = vmax.f32 %v4586, %v309
        %v4603 = vmax.f32 %v4587, %v184
        %v4604 = vmax.f32 %v4588, %v185
        %v4605 = vmax.f32 %v4589, %v202
        %v4606 = vmax.f32 %v4590, %v203
        %v4607 = vmax.f32 %v4591, %v220
        %v4608 = vmax.f32 %v4592, %v221
        %v4609 = vmax.f32 %v4593, %v238
        %v4610 = vmax.f32 %v4594, %v239
        %v4611 = vmax.f32 %v4595, %v256
        %v4612 = vmax.f32 %v4596, %v257
        %v4613 = vmax.f32 %v4597, %v274
        %v4614 = vmax.f32 %v4598, %v275
        %v4615 = vmax.f32 %v4599, %v292
        %v4616 = vmax.f32 %v4600, %v293
        %v4617 = vmax.f32 %v4601, %v310
        %v4618 = vmax.f32 %v4602, %v311
        %v4619 = vmax.f32 %v4603, %v186
        %v4620 = vmax.f32 %v4604, %v187
        %v4621 = vmax.f32 %v4605, %v204
        %v4622 = vmax.f32 %v4606, %v205
        %v4623 = vmax.f32 %v4607, %v222
        %v4624 = vmax.f32 %v4608, %v223
        %v4625 = vmax.f32 %v4609, %v240
        %v4626 = vmax.f32 %v4610, %v241
        %v4627 = vmax.f32 %v4611, %v258
        %v4628 = vmax.f32 %v4612, %v259
        %v4629 = vmax.f32 %v4613, %v276
        %v4630 = vmax.f32 %v4614, %v277
        %v4631 = vmax.f32 %v4615, %v294
        %v4632 = vmax.f32 %v4616, %v295
        %v4633 = vmax.f32 %v4617, %v312
        %v4634 = vmax.f32 %v4618, %v313
        %v4635 = vmax.f32 %v4619, %v188
        %v4636 = vmax.f32 %v4620, %v189
        %v4637 = vmax.f32 %v4621, %v206
        %v4638 = vmax.f32 %v4622, %v207
        %v4639 = vmax.f32 %v4623, %v224
        %v4640 = vmax.f32 %v4624, %v225
        %v4641 = vmax.f32 %v4625, %v242
        %v4642 = vmax.f32 %v4626, %v243
        %v4643 = vmax.f32 %v4627, %v260
        %v4644 = vmax.f32 %v4628, %v261
        %v4645 = vmax.f32 %v4629, %v278
        %v4646 = vmax.f32 %v4630, %v279
        %v4647 = vmax.f32 %v4631, %v296
        %v4648 = vmax.f32 %v4632, %v297
        %v4649 = vmax.f32 %v4633, %v314
        %v4650 = vmax.f32 %v4634, %v315
        %v4651 = vmax.f32 %v4635, %v190
        %v4652 = vmax.f32 %v4636, %v191
        %v4653 = vmax.f32 %v4637, %v208
        %v4654 = vmax.f32 %v4638, %v209
        %v4655 = vmax.f32 %v4639, %v226
        %v4656 = vmax.f32 %v4640, %v227
        %v4657 = vmax.f32 %v4641, %v244
        %v4658 = vmax.f32 %v4642, %v245
        %v4659 = vmax.f32 %v4643, %v262
        %v4660 = vmax.f32 %v4644, %v263
        %v4661 = vmax.f32 %v4645, %v280
        %v4662 = vmax.f32 %v4646, %v281
        %v4663 = vmax.f32 %v4647, %v298
        %v4664 = vmax.f32 %v4648, %v299
        %v4665 = vmax.f32 %v4649, %v316
        %v4666 = vmax.f32 %v4650, %v317
        %v4667 = vmax.f32 %v4651, %v192
        %v4668 = vmax.f32 %v4652, %v193
        %v4669 = vmax.f32 %v4653, %v210
        %v4670 = vmax.f32 %v4654, %v211
        %v4671 = vmax.f32 %v4655, %v228
        %v4672 = vmax.f32 %v4656, %v229
        %v4673 = vmax.f32 %v4657, %v246
        %v4674 = vmax.f32 %v4658, %v247
        %v4675 = vmax.f32 %v4659, %v264
        %v4676 = vmax.f32 %v4660, %v265
        %v4677 = vmax.f32 %v4661, %v282
        %v4678 = vmax.f32 %v4662, %v283
        %v4679 = vmax.f32 %v4663, %v300
        %v4680 = vmax.f32 %v4664, %v301
        %v4681 = vmax.f32 %v4665, %v318
        %v4682 = vmax.f32 %v4666, %v319
        %v4683 = vadd.f32 %v4531, %v4667
        %v4684 = vadd.f32 %v4532, %v4668
        %v4685 = vadd.f32 %v4534, %v4669
        %v4686 = vadd.f32 %v4535, %v4670
        %v4687 = vadd.f32 %v4537, %v4671
        %v4688 = vadd.f32 %v4538, %v4672
        %v4689 = vadd.f32 %v4540, %v4673
        %v4690 = vadd.f32 %v4541, %v4674
        %v4691 = vadd.f32 %v4543, %v4675
        %v4692 = vadd.f32 %v4544, %v4676
        %v4693 = vadd.f32 %v4546, %v4677
        %v4694 = vadd.f32 %v4547, %v4678
        %v4695 = vadd.f32 %v4549, %v4679
        %v4696 = vadd.f32 %v4550, %v4680
        %v4697 = vadd.f32 %v4552, %v4681
        %v4698 = vadd.f32 %v4553, %v4682
        %4699 = vst [vmem:[%s166] sm:$0xff] %v4683
        %4700 = vst [vmem:[%s166 + $0x8] sm:$0xff] %v4684
        %4701 = vst [vmem:[%s166 + $0x18] sm:$0xff] %v4685
        %4702 = vst [vmem:[%s166 + $0x20] sm:$0xff] %v4686
        %4703 = vst [vmem:[%s166 + $0x30] sm:$0xff] %v4687
        %4704 = vst [vmem:[%s166 + $0x38] sm:$0xff] %v4688
        %4705 = vst [vmem:[%s166 + $0x48] sm:$0xff] %v4689
        %4706 = vst [vmem:[%s166 + $0x50] sm:$0xff] %v4690
        %4707 = vst [vmem:[%s166 + $0x60] sm:$0xff] %v4691
        %4708 = vst [vmem:[%s166 + $0x68] sm:$0xff] %v4692
        %4709 = vst [vmem:[%s166 + $0x78] sm:$0xff] %v4693
        %4710 = vst [vmem:[%s166 + $0x80] sm:$0xff] %v4694
        %4711 = vst [vmem:[%s166 + $0x90] sm:$0xff] %v4695
        %4712 = vst [vmem:[%s166 + $0x98] sm:$0xff] %v4696
        %4713 = vst [vmem:[%s166 + $0xa8] sm:$0xff] %v4697
        %4714 = vst [vmem:[%s166 + $0xb0] sm:$0xff] %v4698
        %4715 = vst [vmem:[%s166 + $0x10] sm:$0xff] %v4533
        %4716 = vst [vmem:[%s166 + $0x28] sm:$0xff] %v4536
        %4717 = vst [vmem:[%s166 + $0x40] sm:$0xff] %v4539
        %4718 = vst [vmem:[%s166 + $0x58] sm:$0xff] %v4542
        %4719 = vst [vmem:[%s166 + $0x70] sm:$0xff] %v4545
        %4720 = vst [vmem:[%s166 + $0x88] sm:$0xff] %v4548
        %4721 = vst [vmem:[%s166 + $0xa0] sm:$0xff] %v4551
        %4722 = vst [vmem:[%s166 + $0xb8] sm:$0xff] %v4554
        %s4723 = sand.u32 %s93, 1
        %s4724 = scalar_lea.sflag [#allocation3], %s4723
        %s4725 = sand.u32 %s93, 1
        %s4726 = smul.addr %s4725, 192
        %s4727 = scalar_lea.vmem [#allocation2], %s4726
        // Predicated region
        $region33: #{_lambda_.1} parent=31 // pred_check
          %p4728 = pneg %p103
        $region34: #{_lambda_.1} parent=31 // pred_check_branch
          %4730 = sbr.rel (%p4728) target = $region36
        $region35: #{_lambda_.1} parent=31 // pred_region
          %s4731 = smul.u32 8, %s17
          %s4733 = ssub.s32 3072, 3072
          %4734 = vsyncadd %s4724, %s4733
          %s4735 = smul.addr %s4731, 3
          %s4736 = smul.addr %s4735, 128
          %s4737 = scalar_lea.hbm %s3, %s4736
          %s4738 = sshll.u32 %s4727, 4
          %s4739 = int_to_ptr.vmem [resolvable:$true] %s4738
          %4744 = dma.vmem_to_hbm [thread:$0]  %s4739, 3072, %s4737, %s4724, 384, 384, 24
        $region36: #{_lambda_.1} parent=31 // pred_fallthru
          _
      $region32: #{_lambda_.1} parent=5 // pred_fallthru
        _
      %p4745 = scmp.le.s32.totalorder 2, %s12
      // Predicated region
      $region37: #{_lambda_.1} parent=5 // pred_check
        %p4746 = pneg %p4745
      $region38: #{_lambda_.1} parent=5 // pred_check_branch
        %4748 = sbr.rel (%p4746) target = $region40
      $region39: #{_lambda_.1} parent=5 // pred_region
        %s4749 = ssub.s32 %s12, 2
        // Predicated region
        $region41: #{_lambda_.1} parent=39 // pred_check
          %p4750 = pneg %p109
        $region42: #{_lambda_.1} parent=39 // pred_check_branch
          %4752 = sbr.rel (%p4750) target = $region44
        $region43: #{_lambda_.1} parent=39 // pred_region
          %s4753 = sand.u32 %s94, 1
          %s4754 = scalar_lea.sflag [#allocation3], %s4753
          %s4755 = sand.u32 %s94, 1
          %s4756 = smul.addr %s4755, 192
          %s4757 = scalar_lea.vmem [#allocation2], %s4756
          %4758 = dma.done %s4754, 3072
        $region44: #{_lambda_.1} parent=39 // pred_fallthru
          _
      $region40: #{_lambda_.1} parent=5 // pred_fallthru
        _
    $region6: #{_lambda_.1} parent=1 // loop_footer
      %s16 = sadd.s32 1, %s12
    $region7: #{_lambda_.1} parent=1 // loop_footer_branch
      %11 = sbr.rel target = $region3
    $region8: #{_lambda_.1} parent=1 // loop_exit
      _
    %4759 = vsyncpa [#allocation3], 1
    %s4760 = scalar_lea.sflag [#allocation3], 1
    %4761 = vsyncpa %s4760, 1

</llo_original>
